<compile_context>
chip_gen: v5e
topology: v5e:2x2
jax: 0.10.0
libtpu: 0.0.40
codegen_flags: <defaults>
</compile_context>

<pallas_src>
import functools

import jax
import jax.numpy as jnp
from jax.experimental import pallas as pl
from jax.experimental.pallas import tpu as pltpu  # noqa: F401  (TPU backend)

# ---- hyperparameters (small, consistent with the module's forward) ----------
N_LAYERS = 2
HIDDEN_DIM = 32
NUM_HEAD = 4
INNER_DIM = 64
VOCAB_SIZE = 256          # reference uses 10000; kept small (and lane-dense) for the demo
PAD_IDX = 0
MAX_LEN = 100


# ======================= fused whole-forward kernel ==========================

def _make_fused_kernel(bs, es, ds, H, nh, L, V):
    Dh = H // nh

    def _ln(x, g, b):
        """LayerNorm over last dim (f32).  g, b are (1, H)."""
        mean = jnp.mean(x, axis=-1, keepdims=True)
        var = jnp.mean(jnp.square(x - mean), axis=-1, keepdims=True)
        return (x - mean) * jax.lax.rsqrt(var + 1e-5) * g + b

    def _mm(x, w):
        """bf16 MXU matmul with f32 accumulation (w is already bf16)."""
        return jnp.dot(x.astype(jnp.bfloat16), w,
                       preferred_element_type=jnp.float32)

    def _mha(q2, k2, v2, mask3, Sq, Sk):
        """Multi-head attention, batched over bs via 3-D dot_general.

        q2: (bs*Sq, H); k2, v2: (bs*Sk, H); mask3: (bs, Sq, Sk) float.
        No sqrt(Dh) scaling (matches reference).  Returns (bs*Sq, H) f32."""
        q3 = q2.reshape(bs, Sq, H).astype(jnp.bfloat16)
        k3 = k2.reshape(bs, Sk, H).astype(jnp.bfloat16)
        v3 = v2.reshape(bs, Sk, H).astype(jnp.bfloat16)
        heads = []
        for h in range(nh):
            sl = slice(h * Dh, (h + 1) * Dh)
            s = jnp.einsum('bqd,bkd->bqk', q3[:, :, sl], k3[:, :, sl],
                           preferred_element_type=jnp.float32)
            s = jnp.where(mask3 == 0.0, jnp.float32(-10000.0), s)
            s = s - jnp.max(s, axis=-1, keepdims=True)
            e = jnp.exp(s)
            p = e * pl.reciprocal(jnp.sum(e, axis=-1, keepdims=True), approx=True)
            heads.append(jnp.einsum('bqk,bkd->bqd', p.astype(jnp.bfloat16),
                                    v3[:, :, sl],
                                    preferred_element_type=jnp.float32))
        return jnp.concatenate(heads, axis=-1).reshape(bs * Sq, H)

    def kernel(x_ref, y_ref, epad_ref, dpad_ref, tril_ref,
               e_wqkv, e_bqkv, e_wo, e_bo, e_ln1g, e_ln1b,
               e_w1, e_b1, e_w2, e_b2, e_ln2g, e_ln2b,
               d_wqkv1, d_bqkv1, d_wo1, d_bo1, d_ln1g, d_ln1b,
               d_wq2, d_bq2, d_wkv2, d_bkv2, d_wo2, d_bo2, d_ln2g, d_ln2b,
               d_w1, d_b1, d_w2, d_b2, d_ln3g, d_ln3b,
               fw, fb,
               logits_ref, tok_ref):
        epad = epad_ref[...]                      # (bs, es)
        dpad = dpad_ref[...]                      # (bs, ds)
        tril = tril_ref[...]                      # (ds, ds)

        # ------------------ Encoder stack (all L layers) ------------------
        x = x_ref[...]                            # (bs*es, H) f32
        enc_mask = jnp.broadcast_to(epad[:, None, :], (bs, es, es))
        for l in range(L):                        # static unroll, L = 2
            qkv = _mm(x, e_wqkv[l]) + e_bqkv[l]   # fused Q/K/V projection
            a = _mha(qkv[:, 0:H], qkv[:, H:2 * H], qkv[:, 2 * H:3 * H],
                     enc_mask, es, es)
            a = _mm(a, e_wo[l]) + e_bo[l]
            x = _ln(a + x, e_ln1g[l], e_ln1b[l])
            f = jnp.maximum(_mm(x, e_w1[l]) + e_b1[l], 0.0)
            f = _mm(f, e_w2[l]) + e_b2[l]
            x = _ln(f + x, e_ln2g[l], e_ln2b[l])
        enc_out = x                               # (bs*es, H)

        # ---------- Decoder (reference early-returns after layer 0) ----------
        y = y_ref[...]                            # (bs*ds, H)
        self_mask = tril[None, :, :] * jnp.broadcast_to(dpad[:, None, :],
                                                        (bs, ds, ds))
        cross_mask = jnp.broadcast_to(epad[:, None, :], (bs, ds, es))

        # masked self attention (fused QKV weight)
        qkv = _mm(y, d_wqkv1[...]) + d_bqkv1[...]
        a = _mha(qkv[:, 0:H], qkv[:, H:2 * H], qkv[:, 2 * H:3 * H],
                 self_mask, ds, ds)
        a = _mm(a, d_wo1[...]) + d_bo1[...]
        h1 = _ln(a + y, d_ln1g[...], d_ln1b[...])

        # cross attention (K/V from encoder output, fused K/V weight)
        q2 = _mm(h1, d_wq2[...]) + d_bq2[...]
        kv = _mm(enc_out, d_wkv2[...]) + d_bkv2[...]
        a2 = _mha(q2, kv[:, 0:H], kv[:, H:2 * H], cross_mask, ds, es)
        a2 = _mm(a2, d_wo2[...]) + d_bo2[...]
        h2 = _ln(a2 + h1, d_ln2g[...], d_ln2b[...])

        # FFN
        f = jnp.maximum(_mm(h2, d_w1[...]) + d_b1[...], 0.0)
        f = _mm(f, d_w2[...]) + d_b2[...]
        h3 = _ln(h2 + f, d_ln3g[...], d_ln3b[...])

        # ------------- final projection + argmax over raw logits -------------
        logits = _mm(h3, fw[...]) + fb[...]       # (bs*ds, V), V lane-dense
        logits_ref[...] = logits
        # argmax over raw logits: softmax is monotone, so token ids equal
        # argmax(softmax(logits)) without the exp/sum/divide.
        logits3 = logits.reshape(bs, ds, V)
        col = jax.lax.broadcasted_iota(jnp.int32, (bs, ds, V), 2)
        is_max = logits3 == jnp.max(logits3, axis=-1, keepdims=True)
        tok_ref[...] = jnp.min(jnp.where(is_max, col, jnp.int32(V)), axis=-1)

    return kernel


# ============================ model forward ==================================

@functools.partial(jax.jit, static_argnums=(3,))
def transformer_forward(params, enc_src, dec_src, num_head):
    bs, es = enc_src.shape
    ds = dec_src.shape[1]
    H = params["enc_emb"].shape[1]
    V = params["final_w"].shape[1]
    L = params["e_wqkv"].shape[0]

    enc_pad = (enc_src != PAD_IDX).astype(jnp.float32)        # (bs, es)
    dec_pad = (dec_src != PAD_IDX).astype(jnp.float32)        # (bs, ds)
    tril = jnp.tril(jnp.ones((ds, ds), jnp.float32))          # lookahead template

    # embeddings (gather) + positional embeddings, in plain JAX outside the kernel
    x2 = (params["enc_emb"][enc_src]
          + params["enc_pos"][:es][None]).reshape(bs * es, H)
    y2 = (params["dec_emb"][dec_src]
          + params["dec_pos"][:ds][None]).reshape(bs * ds, H)

    logits2, tok = pl.pallas_call(
        _make_fused_kernel(bs, es, ds, H, num_head, L, V),
        out_shape=(jax.ShapeDtypeStruct((bs * ds, V), jnp.float32),
                   jax.ShapeDtypeStruct((bs, ds), jnp.int32)),
    )(x2, y2, enc_pad, dec_pad, tril,
      params["e_wqkv"], params["e_bqkv"], params["e_wo"], params["e_bo"],
      params["e_ln1g"], params["e_ln1b"],
      params["e_w1"], params["e_b1"], params["e_w2"], params["e_b2"],
      params["e_ln2g"], params["e_ln2b"],
      params["d_wqkv1"], params["d_bqkv1"], params["d_wo1"], params["d_bo1"],
      params["d_ln1g"], params["d_ln1b"],
      params["d_wq2"], params["d_bq2"], params["d_wkv2"], params["d_bkv2"],
      params["d_wo2"], params["d_bo2"], params["d_ln2g"], params["d_ln2b"],
      params["d_w1"], params["d_b1"], params["d_w2"], params["d_b2"],
      params["d_ln3g"], params["d_ln3b"],
      params["final_w"], params["final_b"])

    # TODO(synk): torch.argmax returns int64; we return int32 token ids.
    return logits2.reshape(bs, ds, V), tok


# ============================ parameter init =================================

def init_params(key, n_layers, H, num_head, inner_dim, vocab, max_len):
    keys = iter(jax.random.split(key, 64))
    L = n_layers

    def nrm(shape, dtype=jnp.bfloat16, scale=0.02):
        # matmul weights bf16 (MXU-native); embeddings/biases kept f32
        return (scale * jax.random.normal(next(keys), shape, jnp.float32)).astype(dtype)

    def ones(shape):
        return jnp.ones(shape, jnp.float32)

    def zeros(shape):
        return jnp.zeros(shape, jnp.float32)

    dec_emb = nrm((vocab, H), jnp.float32)
    dec_emb = dec_emb.at[PAD_IDX].set(0.0)   # padding_idx=0 in reference decoder

    return dict(
        enc_emb=nrm((vocab, H), jnp.float32),
        enc_pos=nrm((max_len, H), jnp.float32),
        dec_emb=dec_emb,
        dec_pos=nrm((max_len, H), jnp.float32),
        # --- encoder layers, stacked along a leading layer axis ---
        e_wqkv=nrm((L, H, 3 * H)), e_bqkv=nrm((L, 1, 3 * H), jnp.float32),
        e_wo=nrm((L, H, H)), e_bo=nrm((L, 1, H), jnp.float32),
        e_ln1g=ones((L, 1, H)), e_ln1b=zeros((L, 1, H)),
        e_w1=nrm((L, H, inner_dim)), e_b1=nrm((L, 1, inner_dim), jnp.float32),
        e_w2=nrm((L, inner_dim, H)), e_b2=nrm((L, 1, H), jnp.float32),
        e_ln2g=ones((L, 1, H)), e_ln2b=zeros((L, 1, H)),
        # --- decoder layer 0 only (reference returns inside its layer loop) ---
        d_wqkv1=nrm((H, 3 * H)), d_bqkv1=nrm((1, 3 * H), jnp.float32),
        d_wo1=nrm((H, H)), d_bo1=nrm((1, H), jnp.float32),
        d_ln1g=ones((1, H)), d_ln1b=zeros((1, H)),
        d_wq2=nrm((H, H)), d_bq2=nrm((1, H), jnp.float32),
        d_wkv2=nrm((H, 2 * H)), d_bkv2=nrm((1, 2 * H), jnp.float32),
        d_wo2=nrm((H, H)), d_bo2=nrm((1, H), jnp.float32),
        d_ln2g=ones((1, H)), d_ln2b=zeros((1, H)),
        d_w1=nrm((H, inner_dim)), d_b1=nrm((1, inner_dim), jnp.float32),
        d_w2=nrm((inner_dim, H)), d_b2=nrm((1, H), jnp.float32),
        d_ln3g=ones((1, H)), d_ln3b=zeros((1, H)),
        # --- final projection ---
        final_w=nrm((H, vocab)), final_b=nrm((1, vocab), jnp.float32),
    )


# ================================= main ======================================

if __name__ == "__main__":
    key = jax.random.PRNGKey(0)
    k_p, k_e, k_d = jax.random.split(key, 3)

    batch, enc_seq, dec_seq = 2, 8, 8
    enc_src = jax.random.randint(k_e, (batch, enc_seq), 1, VOCAB_SIZE, dtype=jnp.int32)
    dec_src = jax.random.randint(k_d, (batch, dec_seq), 1, VOCAB_SIZE, dtype=jnp.int32)
    # add some padding tokens so the masks are exercised
    enc_src = enc_src.at[:, -2:].set(PAD_IDX)
    dec_src = dec_src.at[:, -1:].set(PAD_IDX)

    params = init_params(k_p, N_LAYERS, HIDDEN_DIM, NUM_HEAD, INNER_DIM,
                         VOCAB_SIZE, MAX_LEN)

    logits, out_tokens = transformer_forward(params, enc_src, dec_src, NUM_HEAD)
    jax.block_until_ready((logits, out_tokens))

    assert logits.shape == (batch, dec_seq, VOCAB_SIZE)
    assert out_tokens.shape == (batch, dec_seq)
    assert bool(jnp.all(jnp.isfinite(logits)))
    print("KERNEL_OK")
</pallas_src>

<mosaic_0001>
module attributes {stable_mosaic.version = 11 : i64} {
  func.func @kernel(%arg0: memref<16x32xf32, #tpu.memory_space<vmem>>, %arg1: memref<16x32xf32, #tpu.memory_space<vmem>>, %arg2: memref<2x8xf32, #tpu.memory_space<vmem>>, %arg3: memref<2x8xf32, #tpu.memory_space<vmem>>, %arg4: memref<8x8xf32, #tpu.memory_space<vmem>>, %arg5: memref<2x32x96xbf16, #tpu.memory_space<vmem>>, %arg6: memref<2x1x96xf32, #tpu.memory_space<vmem>>, %arg7: memref<2x32x32xbf16, #tpu.memory_space<vmem>>, %arg8: memref<2x1x32xf32, #tpu.memory_space<vmem>>, %arg9: memref<2x1x32xf32, #tpu.memory_space<vmem>>, %arg10: memref<2x1x32xf32, #tpu.memory_space<vmem>>, %arg11: memref<2x32x64xbf16, #tpu.memory_space<vmem>>, %arg12: memref<2x1x64xf32, #tpu.memory_space<vmem>>, %arg13: memref<2x64x32xbf16, #tpu.memory_space<vmem>>, %arg14: memref<2x1x32xf32, #tpu.memory_space<vmem>>, %arg15: memref<2x1x32xf32, #tpu.memory_space<vmem>>, %arg16: memref<2x1x32xf32, #tpu.memory_space<vmem>>, %arg17: memref<32x96xbf16, #tpu.memory_space<vmem>>, %arg18: memref<1x96xf32, #tpu.memory_space<vmem>>, %arg19: memref<32x32xbf16, #tpu.memory_space<vmem>>, %arg20: memref<1x32xf32, #tpu.memory_space<vmem>>, %arg21: memref<1x32xf32, #tpu.memory_space<vmem>>, %arg22: memref<1x32xf32, #tpu.memory_space<vmem>>, %arg23: memref<32x32xbf16, #tpu.memory_space<vmem>>, %arg24: memref<1x32xf32, #tpu.memory_space<vmem>>, %arg25: memref<32x64xbf16, #tpu.memory_space<vmem>>, %arg26: memref<1x64xf32, #tpu.memory_space<vmem>>, %arg27: memref<32x32xbf16, #tpu.memory_space<vmem>>, %arg28: memref<1x32xf32, #tpu.memory_space<vmem>>, %arg29: memref<1x32xf32, #tpu.memory_space<vmem>>, %arg30: memref<1x32xf32, #tpu.memory_space<vmem>>, %arg31: memref<32x64xbf16, #tpu.memory_space<vmem>>, %arg32: memref<1x64xf32, #tpu.memory_space<vmem>>, %arg33: memref<64x32xbf16, #tpu.memory_space<vmem>>, %arg34: memref<1x32xf32, #tpu.memory_space<vmem>>, %arg35: memref<1x32xf32, #tpu.memory_space<vmem>>, %arg36: memref<1x32xf32, #tpu.memory_space<vmem>>, %arg37: memref<32x256xbf16, #tpu.memory_space<vmem>>, %arg38: memref<1x256xf32, #tpu.memory_space<vmem>>, %arg39: memref<16x256xf32, #tpu.memory_space<vmem>>, %arg40: memref<2x8xi32, #tpu.memory_space<vmem>>) attributes {dimension_semantics = [], scalar_prefetch = 0 : i64, scratch_operands = 0 : i64, tpu.core_type = #tpu.core_type<tc>} {
    %c0 = arith.constant 0 : index
    %c0_0 = arith.constant 0 : index
    %0 = vector.load %arg2[%c0, %c0_0] : memref<2x8xf32, #tpu.memory_space<vmem>>, vector<2x8xf32>
    %c0_1 = arith.constant 0 : index
    %c0_2 = arith.constant 0 : index
    %1 = vector.load %arg3[%c0_1, %c0_2] : memref<2x8xf32, #tpu.memory_space<vmem>>, vector<2x8xf32>
    %c0_3 = arith.constant 0 : index
    %c0_4 = arith.constant 0 : index
    %2 = vector.load %arg4[%c0_3, %c0_4] : memref<8x8xf32, #tpu.memory_space<vmem>>, vector<8x8xf32>
    %c0_5 = arith.constant 0 : index
    %c0_6 = arith.constant 0 : index
    %3 = vector.load %arg0[%c0_5, %c0_6] : memref<16x32xf32, #tpu.memory_space<vmem>>, vector<16x32xf32>
    %4 = vector.shape_cast %0 : vector<2x8xf32> to vector<2x1x8xf32>
    %5 = vector.shape_cast %4 : vector<2x1x8xf32> to vector<2x1x8xf32>
    %6 = vector.broadcast %5 : vector<2x1x8xf32> to vector<2x8x8xf32>
    %c0_7 = arith.constant 0 : index
    %c0_8 = arith.constant 0 : index
    %c0_9 = arith.constant 0 : index
    %7 = vector.load %arg5[%c0_7, %c0_8, %c0_9] : memref<2x32x96xbf16, #tpu.memory_space<vmem>>, vector<1x32x96xbf16>
    %8 = vector.shape_cast %7 : vector<1x32x96xbf16> to vector<32x96xbf16>
    %9 = arith.truncf %3 : vector<16x32xf32> to vector<16x32xbf16>
    %cst = arith.constant dense<0.000000e+00> : vector<16x96xf32>
    %10 = tpu.matmul %9, %8, %cst {dimension_numbers = #tpu.dot_dimension_numbers<[1], [0], [0], [1], [0, 0, 1, 1], [], []>} : vector<16x32xbf16>, vector<32x96xbf16>, vector<16x96xf32> -> vector<16x96xf32>
    %c0_10 = arith.constant 0 : index
    %c0_11 = arith.constant 0 : index
    %c0_12 = arith.constant 0 : index
    %11 = vector.load %arg6[%c0_10, %c0_11, %c0_12] : memref<2x1x96xf32, #tpu.memory_space<vmem>>, vector<1x1x96xf32>
    %12 = vector.shape_cast %11 : vector<1x1x96xf32> to vector<1x96xf32>
    %13 = vector.broadcast %12 : vector<1x96xf32> to vector<16x96xf32>
    %14 = arith.addf %10, %13 : vector<16x96xf32>
    %15 = vector.extract_strided_slice %14 {offsets = [0, 0], sizes = [16, 32], strides = [1, 1]} : vector<16x96xf32> to vector<16x32xf32>
    %16 = vector.extract_strided_slice %14 {offsets = [0, 32], sizes = [16, 32], strides = [1, 1]} : vector<16x96xf32> to vector<16x32xf32>
    %17 = vector.extract_strided_slice %14 {offsets = [0, 64], sizes = [16, 32], strides = [1, 1]} : vector<16x96xf32> to vector<16x32xf32>
    %18 = vector.shape_cast %15 : vector<16x32xf32> to vector<2x8x32xf32>
    %19 = arith.truncf %18 : vector<2x8x32xf32> to vector<2x8x32xbf16>
    %20 = vector.shape_cast %16 : vector<16x32xf32> to vector<2x8x32xf32>
    %21 = arith.truncf %20 : vector<2x8x32xf32> to vector<2x8x32xbf16>
    %22 = vector.shape_cast %17 : vector<16x32xf32> to vector<2x8x32xf32>
    %23 = arith.truncf %22 : vector<2x8x32xf32> to vector<2x8x32xbf16>
    %24 = vector.extract_strided_slice %19 {offsets = [0, 0, 0], sizes = [2, 8, 8], strides = [1, 1, 1]} : vector<2x8x32xbf16> to vector<2x8x8xbf16>
    %25 = vector.extract_strided_slice %21 {offsets = [0, 0, 0], sizes = [2, 8, 8], strides = [1, 1, 1]} : vector<2x8x32xbf16> to vector<2x8x8xbf16>
    "tpu.trace_start"() <{level = 10 : i32, message = "bqd,bkd->bqk"}> : () -> ()
    %cst_13 = arith.constant dense<0.000000e+00> : vector<2x8x8xf32>
    %26 = tpu.matmul %24, %25, %cst_13 {dimension_numbers = #tpu.dot_dimension_numbers<[2], [2], [1], [1], [0, 0, 0, 1, 1, 1], [0], [0]>} : vector<2x8x8xbf16>, vector<2x8x8xbf16>, vector<2x8x8xf32> -> vector<2x8x8xf32>
    %cst_14 = arith.constant 0.000000e+00 : f32
    "tpu.trace_stop"() : () -> ()
    %27 = vector.broadcast %cst_14 : f32 to vector<2x8x8xf32>
    %28 = arith.cmpf oeq, %6, %27 : vector<2x8x8xf32>
    %cst_15 = arith.constant -1.000000e+04 : f32
    %29 = vector.broadcast %cst_15 : f32 to vector<2x8x8xf32>
    %30 = arith.select %28, %29, %26 : vector<2x8x8xi1>, vector<2x8x8xf32>
    %cst_16 = arith.constant dense<0xFF800000> : vector<2x8xf32>
    %31 = vector.multi_reduction <maximumf>, %30, %cst_16 [2] : vector<2x8x8xf32> to vector<2x8xf32>
    %32 = vector.shape_cast %31 : vector<2x8xf32> to vector<2x8x1xf32>
    %33 = vector.broadcast %32 : vector<2x8x1xf32> to vector<2x8x8xf32>
    %34 = arith.subf %30, %33 : vector<2x8x8xf32>
    %35 = math.exp %34 : vector<2x8x8xf32>
    %cst_17 = arith.constant dense<0.000000e+00> : vector<2x8xf32>
    %36 = vector.multi_reduction <add>, %35, %cst_17 [2] : vector<2x8x8xf32> to vector<2x8xf32>
    %37 = vector.shape_cast %36 : vector<2x8xf32> to vector<2x8x1xf32>
    %38 = tpu.reciprocal %37 {approx = true} : vector<2x8x1xf32> -> vector<2x8x1xf32>
    %39 = vector.broadcast %38 : vector<2x8x1xf32> to vector<2x8x8xf32>
    %40 = arith.mulf %35, %39 : vector<2x8x8xf32>
    %41 = arith.truncf %40 : vector<2x8x8xf32> to vector<2x8x8xbf16>
    %42 = vector.extract_strided_slice %23 {offsets = [0, 0, 0], sizes = [2, 8, 8], strides = [1, 1, 1]} : vector<2x8x32xbf16> to vector<2x8x8xbf16>
    "tpu.trace_start"() <{level = 10 : i32, message = "bqk,bkd->bqd"}> : () -> ()
    %cst_18 = arith.constant dense<0.000000e+00> : vector<2x8x8xf32>
    %43 = tpu.matmul %41, %42, %cst_18 {dimension_numbers = #tpu.dot_dimension_numbers<[2], [1], [1], [2], [0, 0, 0, 1, 1, 2], [0], [0]>} : vector<2x8x8xbf16>, vector<2x8x8xbf16>, vector<2x8x8xf32> -> vector<2x8x8xf32>
    "tpu.trace_stop"() : () -> ()
    %44 = vector.extract_strided_slice %19 {offsets = [0, 0, 8], sizes = [2, 8, 8], strides = [1, 1, 1]} : vector<2x8x32xbf16> to vector<2x8x8xbf16>
    %45 = vector.extract_strided_slice %21 {offsets = [0, 0, 8], sizes = [2, 8, 8], strides = [1, 1, 1]} : vector<2x8x32xbf16> to vector<2x8x8xbf16>
    "tpu.trace_start"() <{level = 10 : i32, message = "bqd,bkd->bqk"}> : () -> ()
    %cst_19 = arith.constant dense<0.000000e+00> : vector<2x8x8xf32>
    %46 = tpu.matmul %44, %45, %cst_19 {dimension_numbers = #tpu.dot_dimension_numbers<[2], [2], [1], [1], [0, 0, 0, 1, 1, 1], [0], [0]>} : vector<2x8x8xbf16>, vector<2x8x8xbf16>, vector<2x8x8xf32> -> vector<2x8x8xf32>
    %cst_20 = arith.constant 0.000000e+00 : f32
    "tpu.trace_stop"() : () -> ()
    %47 = vector.broadcast %cst_20 : f32 to vector<2x8x8xf32>
    %48 = arith.cmpf oeq, %6, %47 : vector<2x8x8xf32>
    %cst_21 = arith.constant -1.000000e+04 : f32
    %49 = vector.broadcast %cst_21 : f32 to vector<2x8x8xf32>
    %50 = arith.select %48, %49, %46 : vector<2x8x8xi1>, vector<2x8x8xf32>
    %cst_22 = arith.constant dense<0xFF800000> : vector<2x8xf32>
    %51 = vector.multi_reduction <maximumf>, %50, %cst_22 [2] : vector<2x8x8xf32> to vector<2x8xf32>
    %52 = vector.shape_cast %51 : vector<2x8xf32> to vector<2x8x1xf32>
    %53 = vector.broadcast %52 : vector<2x8x1xf32> to vector<2x8x8xf32>
    %54 = arith.subf %50, %53 : vector<2x8x8xf32>
    %55 = math.exp %54 : vector<2x8x8xf32>
    %cst_23 = arith.constant dense<0.000000e+00> : vector<2x8xf32>
    %56 = vector.multi_reduction <add>, %55, %cst_23 [2] : vector<2x8x8xf32> to vector<2x8xf32>
    %57 = vector.shape_cast %56 : vector<2x8xf32> to vector<2x8x1xf32>
    %58 = tpu.reciprocal %57 {approx = true} : vector<2x8x1xf32> -> vector<2x8x1xf32>
    %59 = vector.broadcast %58 : vector<2x8x1xf32> to vector<2x8x8xf32>
    %60 = arith.mulf %55, %59 : vector<2x8x8xf32>
    %61 = arith.truncf %60 : vector<2x8x8xf32> to vector<2x8x8xbf16>
    %62 = vector.extract_strided_slice %23 {offsets = [0, 0, 8], sizes = [2, 8, 8], strides = [1, 1, 1]} : vector<2x8x32xbf16> to vector<2x8x8xbf16>
    "tpu.trace_start"() <{level = 10 : i32, message = "bqk,bkd->bqd"}> : () -> ()
    %cst_24 = arith.constant dense<0.000000e+00> : vector<2x8x8xf32>
    %63 = tpu.matmul %61, %62, %cst_24 {dimension_numbers = #tpu.dot_dimension_numbers<[2], [1], [1], [2], [0, 0, 0, 1, 1, 2], [0], [0]>} : vector<2x8x8xbf16>, vector<2x8x8xbf16>, vector<2x8x8xf32> -> vector<2x8x8xf32>
    "tpu.trace_stop"() : () -> ()
    %64 = vector.extract_strided_slice %19 {offsets = [0, 0, 16], sizes = [2, 8, 8], strides = [1, 1, 1]} : vector<2x8x32xbf16> to vector<2x8x8xbf16>
    %65 = vector.extract_strided_slice %21 {offsets = [0, 0, 16], sizes = [2, 8, 8], strides = [1, 1, 1]} : vector<2x8x32xbf16> to vector<2x8x8xbf16>
    "tpu.trace_start"() <{level = 10 : i32, message = "bqd,bkd->bqk"}> : () -> ()
    %cst_25 = arith.constant dense<0.000000e+00> : vector<2x8x8xf32>
    %66 = tpu.matmul %64, %65, %cst_25 {dimension_numbers = #tpu.dot_dimension_numbers<[2], [2], [1], [1], [0, 0, 0, 1, 1, 1], [0], [0]>} : vector<2x8x8xbf16>, vector<2x8x8xbf16>, vector<2x8x8xf32> -> vector<2x8x8xf32>
    %cst_26 = arith.constant 0.000000e+00 : f32
    "tpu.trace_stop"() : () -> ()
    %67 = vector.broadcast %cst_26 : f32 to vector<2x8x8xf32>
    %68 = arith.cmpf oeq, %6, %67 : vector<2x8x8xf32>
    %cst_27 = arith.constant -1.000000e+04 : f32
    %69 = vector.broadcast %cst_27 : f32 to vector<2x8x8xf32>
    %70 = arith.select %68, %69, %66 : vector<2x8x8xi1>, vector<2x8x8xf32>
    %cst_28 = arith.constant dense<0xFF800000> : vector<2x8xf32>
    %71 = vector.multi_reduction <maximumf>, %70, %cst_28 [2] : vector<2x8x8xf32> to vector<2x8xf32>
    %72 = vector.shape_cast %71 : vector<2x8xf32> to vector<2x8x1xf32>
    %73 = vector.broadcast %72 : vector<2x8x1xf32> to vector<2x8x8xf32>
    %74 = arith.subf %70, %73 : vector<2x8x8xf32>
    %75 = math.exp %74 : vector<2x8x8xf32>
    %cst_29 = arith.constant dense<0.000000e+00> : vector<2x8xf32>
    %76 = vector.multi_reduction <add>, %75, %cst_29 [2] : vector<2x8x8xf32> to vector<2x8xf32>
    %77 = vector.shape_cast %76 : vector<2x8xf32> to vector<2x8x1xf32>
    %78 = tpu.reciprocal %77 {approx = true} : vector<2x8x1xf32> -> vector<2x8x1xf32>
    %79 = vector.broadcast %78 : vector<2x8x1xf32> to vector<2x8x8xf32>
    %80 = arith.mulf %75, %79 : vector<2x8x8xf32>
    %81 = arith.truncf %80 : vector<2x8x8xf32> to vector<2x8x8xbf16>
    %82 = vector.extract_strided_slice %23 {offsets = [0, 0, 16], sizes = [2, 8, 8], strides = [1, 1, 1]} : vector<2x8x32xbf16> to vector<2x8x8xbf16>
    "tpu.trace_start"() <{level = 10 : i32, message = "bqk,bkd->bqd"}> : () -> ()
    %cst_30 = arith.constant dense<0.000000e+00> : vector<2x8x8xf32>
    %83 = tpu.matmul %81, %82, %cst_30 {dimension_numbers = #tpu.dot_dimension_numbers<[2], [1], [1], [2], [0, 0, 0, 1, 1, 2], [0], [0]>} : vector<2x8x8xbf16>, vector<2x8x8xbf16>, vector<2x8x8xf32> -> vector<2x8x8xf32>
    "tpu.trace_stop"() : () -> ()
    %84 = vector.extract_strided_slice %19 {offsets = [0, 0, 24], sizes = [2, 8, 8], strides = [1, 1, 1]} : vector<2x8x32xbf16> to vector<2x8x8xbf16>
    %85 = vector.extract_strided_slice %21 {offsets = [0, 0, 24], sizes = [2, 8, 8], strides = [1, 1, 1]} : vector<2x8x32xbf16> to vector<2x8x8xbf16>
    "tpu.trace_start"() <{level = 10 : i32, message = "bqd,bkd->bqk"}> : () -> ()
    %cst_31 = arith.constant dense<0.000000e+00> : vector<2x8x8xf32>
    %86 = tpu.matmul %84, %85, %cst_31 {dimension_numbers = #tpu.dot_dimension_numbers<[2], [2], [1], [1], [0, 0, 0, 1, 1, 1], [0], [0]>} : vector<2x8x8xbf16>, vector<2x8x8xbf16>, vector<2x8x8xf32> -> vector<2x8x8xf32>
    %cst_32 = arith.constant 0.000000e+00 : f32
    "tpu.trace_stop"() : () -> ()
    %87 = vector.broadcast %cst_32 : f32 to vector<2x8x8xf32>
    %88 = arith.cmpf oeq, %6, %87 : vector<2x8x8xf32>
    %cst_33 = arith.constant -1.000000e+04 : f32
    %89 = vector.broadcast %cst_33 : f32 to vector<2x8x8xf32>
    %90 = arith.select %88, %89, %86 : vector<2x8x8xi1>, vector<2x8x8xf32>
    %cst_34 = arith.constant dense<0xFF800000> : vector<2x8xf32>
    %91 = vector.multi_reduction <maximumf>, %90, %cst_34 [2] : vector<2x8x8xf32> to vector<2x8xf32>
    %92 = vector.shape_cast %91 : vector<2x8xf32> to vector<2x8x1xf32>
    %93 = vector.broadcast %92 : vector<2x8x1xf32> to vector<2x8x8xf32>
    %94 = arith.subf %90, %93 : vector<2x8x8xf32>
    %95 = math.exp %94 : vector<2x8x8xf32>
    %cst_35 = arith.constant dense<0.000000e+00> : vector<2x8xf32>
    %96 = vector.multi_reduction <add>, %95, %cst_35 [2] : vector<2x8x8xf32> to vector<2x8xf32>
    %97 = vector.shape_cast %96 : vector<2x8xf32> to vector<2x8x1xf32>
    %98 = tpu.reciprocal %97 {approx = true} : vector<2x8x1xf32> -> vector<2x8x1xf32>
    %99 = vector.broadcast %98 : vector<2x8x1xf32> to vector<2x8x8xf32>
    %100 = arith.mulf %95, %99 : vector<2x8x8xf32>
    %101 = arith.truncf %100 : vector<2x8x8xf32> to vector<2x8x8xbf16>
    %102 = vector.extract_strided_slice %23 {offsets = [0, 0, 24], sizes = [2, 8, 8], strides = [1, 1, 1]} : vector<2x8x32xbf16> to vector<2x8x8xbf16>
    "tpu.trace_start"() <{level = 10 : i32, message = "bqk,bkd->bqd"}> : () -> ()
    %cst_36 = arith.constant dense<0.000000e+00> : vector<2x8x8xf32>
    %103 = tpu.matmul %101, %102, %cst_36 {dimension_numbers = #tpu.dot_dimension_numbers<[2], [1], [1], [2], [0, 0, 0, 1, 1, 2], [0], [0]>} : vector<2x8x8xbf16>, vector<2x8x8xbf16>, vector<2x8x8xf32> -> vector<2x8x8xf32>
    "tpu.trace_stop"() : () -> ()
    %104 = tpu.concatenate %43, %63, %83, %103 in 2 : vector<2x8x8xf32>, vector<2x8x8xf32>, vector<2x8x8xf32>, vector<2x8x8xf32> -> vector<2x8x32xf32>
    %105 = vector.shape_cast %104 : vector<2x8x32xf32> to vector<16x32xf32>
    %c0_37 = arith.constant 0 : index
    %c0_38 = arith.constant 0 : index
    %c0_39 = arith.constant 0 : index
    %106 = vector.load %arg7[%c0_37, %c0_38, %c0_39] : memref<2x32x32xbf16, #tpu.memory_space<vmem>>, vector<1x32x32xbf16>
    %107 = vector.shape_cast %106 : vector<1x32x32xbf16> to vector<32x32xbf16>
    %108 = arith.truncf %105 : vector<16x32xf32> to vector<16x32xbf16>
    %cst_40 = arith.constant dense<0.000000e+00> : vector<16x32xf32>
    %109 = tpu.matmul %108, %107, %cst_40 {dimension_numbers = #tpu.dot_dimension_numbers<[1], [0], [0], [1], [0, 0, 1, 1], [], []>} : vector<16x32xbf16>, vector<32x32xbf16>, vector<16x32xf32> -> vector<16x32xf32>
    %c0_41 = arith.constant 0 : index
    %c0_42 = arith.constant 0 : index
    %c0_43 = arith.constant 0 : index
    %110 = vector.load %arg8[%c0_41, %c0_42, %c0_43] : memref<2x1x32xf32, #tpu.memory_space<vmem>>, vector<1x1x32xf32>
    %111 = vector.shape_cast %110 : vector<1x1x32xf32> to vector<1x32xf32>
    %112 = vector.broadcast %111 : vector<1x32xf32> to vector<16x32xf32>
    %113 = arith.addf %109, %112 : vector<16x32xf32>
    %114 = arith.addf %113, %3 : vector<16x32xf32>
    %c0_44 = arith.constant 0 : index
    %c0_45 = arith.constant 0 : index
    %c0_46 = arith.constant 0 : index
    %115 = vector.load %arg9[%c0_44, %c0_45, %c0_46] : memref<2x1x32xf32, #tpu.memory_space<vmem>>, vector<1x1x32xf32>
    %116 = vector.shape_cast %115 : vector<1x1x32xf32> to vector<1x32xf32>
    %c0_47 = arith.constant 0 : index
    %c0_48 = arith.constant 0 : index
    %c0_49 = arith.constant 0 : index
    %117 = vector.load %arg10[%c0_47, %c0_48, %c0_49] : memref<2x1x32xf32, #tpu.memory_space<vmem>>, vector<1x1x32xf32>
    %118 = vector.shape_cast %117 : vector<1x1x32xf32> to vector<1x32xf32>
    %cst_50 = arith.constant dense<0.000000e+00> : vector<16xf32>
    %119 = vector.multi_reduction <add>, %114, %cst_50 [1] : vector<16x32xf32> to vector<16xf32>
    %120 = vector.shape_cast %119 : vector<16xf32> to vector<16x1xf32>
    %cst_51 = arith.constant 3.200000e+01 : f32
    %121 = vector.broadcast %cst_51 : f32 to vector<16x1xf32>
    %122 = arith.divf %120, %121 : vector<16x1xf32>
    %123 = vector.broadcast %122 : vector<16x1xf32> to vector<16x32xf32>
    %124 = arith.subf %114, %123 : vector<16x32xf32>
    %125 = arith.mulf %124, %124 : vector<16x32xf32>
    %cst_52 = arith.constant dense<0.000000e+00> : vector<16xf32>
    %126 = vector.multi_reduction <add>, %125, %cst_52 [1] : vector<16x32xf32> to vector<16xf32>
    %127 = vector.shape_cast %126 : vector<16xf32> to vector<16x1xf32>
    %cst_53 = arith.constant 3.200000e+01 : f32
    %128 = vector.broadcast %cst_53 : f32 to vector<16x1xf32>
    %129 = arith.divf %127, %128 : vector<16x1xf32>
    %130 = vector.broadcast %122 : vector<16x1xf32> to vector<16x32xf32>
    %131 = arith.subf %114, %130 : vector<16x32xf32>
    %cst_54 = arith.constant 9.99999974E-6 : f32
    %132 = vector.broadcast %cst_54 : f32 to vector<16x1xf32>
    %133 = arith.addf %129, %132 : vector<16x1xf32>
    %134 = math.rsqrt %133 : vector<16x1xf32>
    %135 = vector.broadcast %134 : vector<16x1xf32> to vector<16x32xf32>
    %136 = arith.mulf %131, %135 : vector<16x32xf32>
    %137 = vector.broadcast %116 : vector<1x32xf32> to vector<16x32xf32>
    %138 = arith.mulf %136, %137 : vector<16x32xf32>
    %139 = vector.broadcast %118 : vector<1x32xf32> to vector<16x32xf32>
    %140 = arith.addf %138, %139 : vector<16x32xf32>
    %c0_55 = arith.constant 0 : index
    %c0_56 = arith.constant 0 : index
    %c0_57 = arith.constant 0 : index
    %141 = vector.load %arg11[%c0_55, %c0_56, %c0_57] : memref<2x32x64xbf16, #tpu.memory_space<vmem>>, vector<1x32x64xbf16>
    %142 = vector.shape_cast %141 : vector<1x32x64xbf16> to vector<32x64xbf16>
    %143 = arith.truncf %140 : vector<16x32xf32> to vector<16x32xbf16>
    %cst_58 = arith.constant dense<0.000000e+00> : vector<16x64xf32>
    %144 = tpu.matmul %143, %142, %cst_58 {dimension_numbers = #tpu.dot_dimension_numbers<[1], [0], [0], [1], [0, 0, 1, 1], [], []>} : vector<16x32xbf16>, vector<32x64xbf16>, vector<16x64xf32> -> vector<16x64xf32>
    %c0_59 = arith.constant 0 : index
    %c0_60 = arith.constant 0 : index
    %c0_61 = arith.constant 0 : index
    %145 = vector.load %arg12[%c0_59, %c0_60, %c0_61] : memref<2x1x64xf32, #tpu.memory_space<vmem>>, vector<1x1x64xf32>
    %146 = vector.shape_cast %145 : vector<1x1x64xf32> to vector<1x64xf32>
    %147 = vector.broadcast %146 : vector<1x64xf32> to vector<16x64xf32>
    %148 = arith.addf %144, %147 : vector<16x64xf32>
    %cst_62 = arith.constant 0.000000e+00 : f32
    %149 = vector.broadcast %cst_62 : f32 to vector<16x64xf32>
    %150 = arith.maximumf %148, %149 : vector<16x64xf32>
    %c0_63 = arith.constant 0 : index
    %c0_64 = arith.constant 0 : index
    %c0_65 = arith.constant 0 : index
    %151 = vector.load %arg13[%c0_63, %c0_64, %c0_65] : memref<2x64x32xbf16, #tpu.memory_space<vmem>>, vector<1x64x32xbf16>
    %152 = vector.shape_cast %151 : vector<1x64x32xbf16> to vector<64x32xbf16>
    %153 = arith.truncf %150 : vector<16x64xf32> to vector<16x64xbf16>
    %cst_66 = arith.constant dense<0.000000e+00> : vector<16x32xf32>
    %154 = tpu.matmul %153, %152, %cst_66 {dimension_numbers = #tpu.dot_dimension_numbers<[1], [0], [0], [1], [0, 0, 1, 1], [], []>} : vector<16x64xbf16>, vector<64x32xbf16>, vector<16x32xf32> -> vector<16x32xf32>
    %c0_67 = arith.constant 0 : index
    %c0_68 = arith.constant 0 : index
    %c0_69 = arith.constant 0 : index
    %155 = vector.load %arg14[%c0_67, %c0_68, %c0_69] : memref<2x1x32xf32, #tpu.memory_space<vmem>>, vector<1x1x32xf32>
    %156 = vector.shape_cast %155 : vector<1x1x32xf32> to vector<1x32xf32>
    %157 = vector.broadcast %156 : vector<1x32xf32> to vector<16x32xf32>
    %158 = arith.addf %154, %157 : vector<16x32xf32>
    %159 = arith.addf %158, %140 : vector<16x32xf32>
    %c0_70 = arith.constant 0 : index
    %c0_71 = arith.constant 0 : index
    %c0_72 = arith.constant 0 : index
    %160 = vector.load %arg15[%c0_70, %c0_71, %c0_72] : memref<2x1x32xf32, #tpu.memory_space<vmem>>, vector<1x1x32xf32>
    %161 = vector.shape_cast %160 : vector<1x1x32xf32> to vector<1x32xf32>
    %c0_73 = arith.constant 0 : index
    %c0_74 = arith.constant 0 : index
    %c0_75 = arith.constant 0 : index
    %162 = vector.load %arg16[%c0_73, %c0_74, %c0_75] : memref<2x1x32xf32, #tpu.memory_space<vmem>>, vector<1x1x32xf32>
    %163 = vector.shape_cast %162 : vector<1x1x32xf32> to vector<1x32xf32>
    %cst_76 = arith.constant dense<0.000000e+00> : vector<16xf32>
    %164 = vector.multi_reduction <add>, %159, %cst_76 [1] : vector<16x32xf32> to vector<16xf32>
    %165 = vector.shape_cast %164 : vector<16xf32> to vector<16x1xf32>
    %cst_77 = arith.constant 3.200000e+01 : f32
    %166 = vector.broadcast %cst_77 : f32 to vector<16x1xf32>
    %167 = arith.divf %165, %166 : vector<16x1xf32>
    %168 = vector.broadcast %167 : vector<16x1xf32> to vector<16x32xf32>
    %169 = arith.subf %159, %168 : vector<16x32xf32>
    %170 = arith.mulf %169, %169 : vector<16x32xf32>
    %cst_78 = arith.constant dense<0.000000e+00> : vector<16xf32>
    %171 = vector.multi_reduction <add>, %170, %cst_78 [1] : vector<16x32xf32> to vector<16xf32>
    %172 = vector.shape_cast %171 : vector<16xf32> to vector<16x1xf32>
    %cst_79 = arith.constant 3.200000e+01 : f32
    %173 = vector.broadcast %cst_79 : f32 to vector<16x1xf32>
    %174 = arith.divf %172, %173 : vector<16x1xf32>
    %175 = vector.broadcast %167 : vector<16x1xf32> to vector<16x32xf32>
    %176 = arith.subf %159, %175 : vector<16x32xf32>
    %cst_80 = arith.constant 9.99999974E-6 : f32
    %177 = vector.broadcast %cst_80 : f32 to vector<16x1xf32>
    %178 = arith.addf %174, %177 : vector<16x1xf32>
    %179 = math.rsqrt %178 : vector<16x1xf32>
    %180 = vector.broadcast %179 : vector<16x1xf32> to vector<16x32xf32>
    %181 = arith.mulf %176, %180 : vector<16x32xf32>
    %182 = vector.broadcast %161 : vector<1x32xf32> to vector<16x32xf32>
    %183 = arith.mulf %181, %182 : vector<16x32xf32>
    %184 = vector.broadcast %163 : vector<1x32xf32> to vector<16x32xf32>
    %185 = arith.addf %183, %184 : vector<16x32xf32>
    %c1 = arith.constant 1 : index
    %c0_81 = arith.constant 0 : index
    %c0_82 = arith.constant 0 : index
    %186 = vector.load %arg5[%c1, %c0_81, %c0_82] : memref<2x32x96xbf16, #tpu.memory_space<vmem>>, vector<1x32x96xbf16>
    %187 = vector.shape_cast %186 : vector<1x32x96xbf16> to vector<32x96xbf16>
    %188 = arith.truncf %185 : vector<16x32xf32> to vector<16x32xbf16>
    %cst_83 = arith.constant dense<0.000000e+00> : vector<16x96xf32>
    %189 = tpu.matmul %188, %187, %cst_83 {dimension_numbers = #tpu.dot_dimension_numbers<[1], [0], [0], [1], [0, 0, 1, 1], [], []>} : vector<16x32xbf16>, vector<32x96xbf16>, vector<16x96xf32> -> vector<16x96xf32>
    %c1_84 = arith.constant 1 : index
    %c0_85 = arith.constant 0 : index
    %c0_86 = arith.constant 0 : index
    %190 = vector.load %arg6[%c1_84, %c0_85, %c0_86] : memref<2x1x96xf32, #tpu.memory_space<vmem>>, vector<1x1x96xf32>
    %191 = vector.shape_cast %190 : vector<1x1x96xf32> to vector<1x96xf32>
    %192 = vector.broadcast %191 : vector<1x96xf32> to vector<16x96xf32>
    %193 = arith.addf %189, %192 : vector<16x96xf32>
    %194 = vector.extract_strided_slice %193 {offsets = [0, 0], sizes = [16, 32], strides = [1, 1]} : vector<16x96xf32> to vector<16x32xf32>
    %195 = vector.extract_strided_slice %193 {offsets = [0, 32], sizes = [16, 32], strides = [1, 1]} : vector<16x96xf32> to vector<16x32xf32>
    %196 = vector.extract_strided_slice %193 {offsets = [0, 64], sizes = [16, 32], strides = [1, 1]} : vector<16x96xf32> to vector<16x32xf32>
    %197 = vector.shape_cast %194 : vector<16x32xf32> to vector<2x8x32xf32>
    %198 = arith.truncf %197 : vector<2x8x32xf32> to vector<2x8x32xbf16>
    %199 = vector.shape_cast %195 : vector<16x32xf32> to vector<2x8x32xf32>
    %200 = arith.truncf %199 : vector<2x8x32xf32> to vector<2x8x32xbf16>
    %201 = vector.shape_cast %196 : vector<16x32xf32> to vector<2x8x32xf32>
    %202 = arith.truncf %201 : vector<2x8x32xf32> to vector<2x8x32xbf16>
    %203 = vector.extract_strided_slice %198 {offsets = [0, 0, 0], sizes = [2, 8, 8], strides = [1, 1, 1]} : vector<2x8x32xbf16> to vector<2x8x8xbf16>
    %204 = vector.extract_strided_slice %200 {offsets = [0, 0, 0], sizes = [2, 8, 8], strides = [1, 1, 1]} : vector<2x8x32xbf16> to vector<2x8x8xbf16>
    "tpu.trace_start"() <{level = 10 : i32, message = "bqd,bkd->bqk"}> : () -> ()
    %cst_87 = arith.constant dense<0.000000e+00> : vector<2x8x8xf32>
    %205 = tpu.matmul %203, %204, %cst_87 {dimension_numbers = #tpu.dot_dimension_numbers<[2], [2], [1], [1], [0, 0, 0, 1, 1, 1], [0], [0]>} : vector<2x8x8xbf16>, vector<2x8x8xbf16>, vector<2x8x8xf32> -> vector<2x8x8xf32>
    %cst_88 = arith.constant 0.000000e+00 : f32
    "tpu.trace_stop"() : () -> ()
    %206 = vector.broadcast %cst_88 : f32 to vector<2x8x8xf32>
    %207 = arith.cmpf oeq, %6, %206 : vector<2x8x8xf32>
    %cst_89 = arith.constant -1.000000e+04 : f32
    %208 = vector.broadcast %cst_89 : f32 to vector<2x8x8xf32>
    %209 = arith.select %207, %208, %205 : vector<2x8x8xi1>, vector<2x8x8xf32>
    %cst_90 = arith.constant dense<0xFF800000> : vector<2x8xf32>
    %210 = vector.multi_reduction <maximumf>, %209, %cst_90 [2] : vector<2x8x8xf32> to vector<2x8xf32>
    %211 = vector.shape_cast %210 : vector<2x8xf32> to vector<2x8x1xf32>
    %212 = vector.broadcast %211 : vector<2x8x1xf32> to vector<2x8x8xf32>
    %213 = arith.subf %209, %212 : vector<2x8x8xf32>
    %214 = math.exp %213 : vector<2x8x8xf32>
    %cst_91 = arith.constant dense<0.000000e+00> : vector<2x8xf32>
    %215 = vector.multi_reduction <add>, %214, %cst_91 [2] : vector<2x8x8xf32> to vector<2x8xf32>
    %216 = vector.shape_cast %215 : vector<2x8xf32> to vector<2x8x1xf32>
    %217 = tpu.reciprocal %216 {approx = true} : vector<2x8x1xf32> -> vector<2x8x1xf32>
    %218 = vector.broadcast %217 : vector<2x8x1xf32> to vector<2x8x8xf32>
    %219 = arith.mulf %214, %218 : vector<2x8x8xf32>
    %220 = arith.truncf %219 : vector<2x8x8xf32> to vector<2x8x8xbf16>
    %221 = vector.extract_strided_slice %202 {offsets = [0, 0, 0], sizes = [2, 8, 8], strides = [1, 1, 1]} : vector<2x8x32xbf16> to vector<2x8x8xbf16>
    "tpu.trace_start"() <{level = 10 : i32, message = "bqk,bkd->bqd"}> : () -> ()
    %cst_92 = arith.constant dense<0.000000e+00> : vector<2x8x8xf32>
    %222 = tpu.matmul %220, %221, %cst_92 {dimension_numbers = #tpu.dot_dimension_numbers<[2], [1], [1], [2], [0, 0, 0, 1, 1, 2], [0], [0]>} : vector<2x8x8xbf16>, vector<2x8x8xbf16>, vector<2x8x8xf32> -> vector<2x8x8xf32>
    "tpu.trace_stop"() : () -> ()
    %223 = vector.extract_strided_slice %198 {offsets = [0, 0, 8], sizes = [2, 8, 8], strides = [1, 1, 1]} : vector<2x8x32xbf16> to vector<2x8x8xbf16>
    %224 = vector.extract_strided_slice %200 {offsets = [0, 0, 8], sizes = [2, 8, 8], strides = [1, 1, 1]} : vector<2x8x32xbf16> to vector<2x8x8xbf16>
    "tpu.trace_start"() <{level = 10 : i32, message = "bqd,bkd->bqk"}> : () -> ()
    %cst_93 = arith.constant dense<0.000000e+00> : vector<2x8x8xf32>
    %225 = tpu.matmul %223, %224, %cst_93 {dimension_numbers = #tpu.dot_dimension_numbers<[2], [2], [1], [1], [0, 0, 0, 1, 1, 1], [0], [0]>} : vector<2x8x8xbf16>, vector<2x8x8xbf16>, vector<2x8x8xf32> -> vector<2x8x8xf32>
    %cst_94 = arith.constant 0.000000e+00 : f32
    "tpu.trace_stop"() : () -> ()
    %226 = vector.broadcast %cst_94 : f32 to vector<2x8x8xf32>
    %227 = arith.cmpf oeq, %6, %226 : vector<2x8x8xf32>
    %cst_95 = arith.constant -1.000000e+04 : f32
    %228 = vector.broadcast %cst_95 : f32 to vector<2x8x8xf32>
    %229 = arith.select %227, %228, %225 : vector<2x8x8xi1>, vector<2x8x8xf32>
    %cst_96 = arith.constant dense<0xFF800000> : vector<2x8xf32>
    %230 = vector.multi_reduction <maximumf>, %229, %cst_96 [2] : vector<2x8x8xf32> to vector<2x8xf32>
    %231 = vector.shape_cast %230 : vector<2x8xf32> to vector<2x8x1xf32>
    %232 = vector.broadcast %231 : vector<2x8x1xf32> to vector<2x8x8xf32>
    %233 = arith.subf %229, %232 : vector<2x8x8xf32>
    %234 = math.exp %233 : vector<2x8x8xf32>
    %cst_97 = arith.constant dense<0.000000e+00> : vector<2x8xf32>
    %235 = vector.multi_reduction <add>, %234, %cst_97 [2] : vector<2x8x8xf32> to vector<2x8xf32>
    %236 = vector.shape_cast %235 : vector<2x8xf32> to vector<2x8x1xf32>
    %237 = tpu.reciprocal %236 {approx = true} : vector<2x8x1xf32> -> vector<2x8x1xf32>
    %238 = vector.broadcast %237 : vector<2x8x1xf32> to vector<2x8x8xf32>
    %239 = arith.mulf %234, %238 : vector<2x8x8xf32>
    %240 = arith.truncf %239 : vector<2x8x8xf32> to vector<2x8x8xbf16>
    %241 = vector.extract_strided_slice %202 {offsets = [0, 0, 8], sizes = [2, 8, 8], strides = [1, 1, 1]} : vector<2x8x32xbf16> to vector<2x8x8xbf16>
    "tpu.trace_start"() <{level = 10 : i32, message = "bqk,bkd->bqd"}> : () -> ()
    %cst_98 = arith.constant dense<0.000000e+00> : vector<2x8x8xf32>
    %242 = tpu.matmul %240, %241, %cst_98 {dimension_numbers = #tpu.dot_dimension_numbers<[2], [1], [1], [2], [0, 0, 0, 1, 1, 2], [0], [0]>} : vector<2x8x8xbf16>, vector<2x8x8xbf16>, vector<2x8x8xf32> -> vector<2x8x8xf32>
    "tpu.trace_stop"() : () -> ()
    %243 = vector.extract_strided_slice %198 {offsets = [0, 0, 16], sizes = [2, 8, 8], strides = [1, 1, 1]} : vector<2x8x32xbf16> to vector<2x8x8xbf16>
    %244 = vector.extract_strided_slice %200 {offsets = [0, 0, 16], sizes = [2, 8, 8], strides = [1, 1, 1]} : vector<2x8x32xbf16> to vector<2x8x8xbf16>
    "tpu.trace_start"() <{level = 10 : i32, message = "bqd,bkd->bqk"}> : () -> ()
    %cst_99 = arith.constant dense<0.000000e+00> : vector<2x8x8xf32>
    %245 = tpu.matmul %243, %244, %cst_99 {dimension_numbers = #tpu.dot_dimension_numbers<[2], [2], [1], [1], [0, 0, 0, 1, 1, 1], [0], [0]>} : vector<2x8x8xbf16>, vector<2x8x8xbf16>, vector<2x8x8xf32> -> vector<2x8x8xf32>
    %cst_100 = arith.constant 0.000000e+00 : f32
    "tpu.trace_stop"() : () -> ()
    %246 = vector.broadcast %cst_100 : f32 to vector<2x8x8xf32>
    %247 = arith.cmpf oeq, %6, %246 : vector<2x8x8xf32>
    %cst_101 = arith.constant -1.000000e+04 : f32
    %248 = vector.broadcast %cst_101 : f32 to vector<2x8x8xf32>
    %249 = arith.select %247, %248, %245 : vector<2x8x8xi1>, vector<2x8x8xf32>
    %cst_102 = arith.constant dense<0xFF800000> : vector<2x8xf32>
    %250 = vector.multi_reduction <maximumf>, %249, %cst_102 [2] : vector<2x8x8xf32> to vector<2x8xf32>
    %251 = vector.shape_cast %250 : vector<2x8xf32> to vector<2x8x1xf32>
    %252 = vector.broadcast %251 : vector<2x8x1xf32> to vector<2x8x8xf32>
    %253 = arith.subf %249, %252 : vector<2x8x8xf32>
    %254 = math.exp %253 : vector<2x8x8xf32>
    %cst_103 = arith.constant dense<0.000000e+00> : vector<2x8xf32>
    %255 = vector.multi_reduction <add>, %254, %cst_103 [2] : vector<2x8x8xf32> to vector<2x8xf32>
    %256 = vector.shape_cast %255 : vector<2x8xf32> to vector<2x8x1xf32>
    %257 = tpu.reciprocal %256 {approx = true} : vector<2x8x1xf32> -> vector<2x8x1xf32>
    %258 = vector.broadcast %257 : vector<2x8x1xf32> to vector<2x8x8xf32>
    %259 = arith.mulf %254, %258 : vector<2x8x8xf32>
    %260 = arith.truncf %259 : vector<2x8x8xf32> to vector<2x8x8xbf16>
    %261 = vector.extract_strided_slice %202 {offsets = [0, 0, 16], sizes = [2, 8, 8], strides = [1, 1, 1]} : vector<2x8x32xbf16> to vector<2x8x8xbf16>
    "tpu.trace_start"() <{level = 10 : i32, message = "bqk,bkd->bqd"}> : () -> ()
    %cst_104 = arith.constant dense<0.000000e+00> : vector<2x8x8xf32>
    %262 = tpu.matmul %260, %261, %cst_104 {dimension_numbers = #tpu.dot_dimension_numbers<[2], [1], [1], [2], [0, 0, 0, 1, 1, 2], [0], [0]>} : vector<2x8x8xbf16>, vector<2x8x8xbf16>, vector<2x8x8xf32> -> vector<2x8x8xf32>
    "tpu.trace_stop"() : () -> ()
    %263 = vector.extract_strided_slice %198 {offsets = [0, 0, 24], sizes = [2, 8, 8], strides = [1, 1, 1]} : vector<2x8x32xbf16> to vector<2x8x8xbf16>
    %264 = vector.extract_strided_slice %200 {offsets = [0, 0, 24], sizes = [2, 8, 8], strides = [1, 1, 1]} : vector<2x8x32xbf16> to vector<2x8x8xbf16>
    "tpu.trace_start"() <{level = 10 : i32, message = "bqd,bkd->bqk"}> : () -> ()
    %cst_105 = arith.constant dense<0.000000e+00> : vector<2x8x8xf32>
    %265 = tpu.matmul %263, %264, %cst_105 {dimension_numbers = #tpu.dot_dimension_numbers<[2], [2], [1], [1], [0, 0, 0, 1, 1, 1], [0], [0]>} : vector<2x8x8xbf16>, vector<2x8x8xbf16>, vector<2x8x8xf32> -> vector<2x8x8xf32>
    %cst_106 = arith.constant 0.000000e+00 : f32
    "tpu.trace_stop"() : () -> ()
    %266 = vector.broadcast %cst_106 : f32 to vector<2x8x8xf32>
    %267 = arith.cmpf oeq, %6, %266 : vector<2x8x8xf32>
    %cst_107 = arith.constant -1.000000e+04 : f32
    %268 = vector.broadcast %cst_107 : f32 to vector<2x8x8xf32>
    %269 = arith.select %267, %268, %265 : vector<2x8x8xi1>, vector<2x8x8xf32>
    %cst_108 = arith.constant dense<0xFF800000> : vector<2x8xf32>
    %270 = vector.multi_reduction <maximumf>, %269, %cst_108 [2] : vector<2x8x8xf32> to vector<2x8xf32>
    %271 = vector.shape_cast %270 : vector<2x8xf32> to vector<2x8x1xf32>
    %272 = vector.broadcast %271 : vector<2x8x1xf32> to vector<2x8x8xf32>
    %273 = arith.subf %269, %272 : vector<2x8x8xf32>
    %274 = math.exp %273 : vector<2x8x8xf32>
    %cst_109 = arith.constant dense<0.000000e+00> : vector<2x8xf32>
    %275 = vector.multi_reduction <add>, %274, %cst_109 [2] : vector<2x8x8xf32> to vector<2x8xf32>
    %276 = vector.shape_cast %275 : vector<2x8xf32> to vector<2x8x1xf32>
    %277 = tpu.reciprocal %276 {approx = true} : vector<2x8x1xf32> -> vector<2x8x1xf32>
    %278 = vector.broadcast %277 : vector<2x8x1xf32> to vector<2x8x8xf32>
    %279 = arith.mulf %274, %278 : vector<2x8x8xf32>
    %280 = arith.truncf %279 : vector<2x8x8xf32> to vector<2x8x8xbf16>
    %281 = vector.extract_strided_slice %202 {offsets = [0, 0, 24], sizes = [2, 8, 8], strides = [1, 1, 1]} : vector<2x8x32xbf16> to vector<2x8x8xbf16>
    "tpu.trace_start"() <{level = 10 : i32, message = "bqk,bkd->bqd"}> : () -> ()
    %cst_110 = arith.constant dense<0.000000e+00> : vector<2x8x8xf32>
    %282 = tpu.matmul %280, %281, %cst_110 {dimension_numbers = #tpu.dot_dimension_numbers<[2], [1], [1], [2], [0, 0, 0, 1, 1, 2], [0], [0]>} : vector<2x8x8xbf16>, vector<2x8x8xbf16>, vector<2x8x8xf32> -> vector<2x8x8xf32>
    "tpu.trace_stop"() : () -> ()
    %283 = tpu.concatenate %222, %242, %262, %282 in 2 : vector<2x8x8xf32>, vector<2x8x8xf32>, vector<2x8x8xf32>, vector<2x8x8xf32> -> vector<2x8x32xf32>
    %284 = vector.shape_cast %283 : vector<2x8x32xf32> to vector<16x32xf32>
    %c1_111 = arith.constant 1 : index
    %c0_112 = arith.constant 0 : index
    %c0_113 = arith.constant 0 : index
    %285 = vector.load %arg7[%c1_111, %c0_112, %c0_113] : memref<2x32x32xbf16, #tpu.memory_space<vmem>>, vector<1x32x32xbf16>
    %286 = vector.shape_cast %285 : vector<1x32x32xbf16> to vector<32x32xbf16>
    %287 = arith.truncf %284 : vector<16x32xf32> to vector<16x32xbf16>
    %cst_114 = arith.constant dense<0.000000e+00> : vector<16x32xf32>
    %288 = tpu.matmul %287, %286, %cst_114 {dimension_numbers = #tpu.dot_dimension_numbers<[1], [0], [0], [1], [0, 0, 1, 1], [], []>} : vector<16x32xbf16>, vector<32x32xbf16>, vector<16x32xf32> -> vector<16x32xf32>
    %c1_115 = arith.constant 1 : index
    %c0_116 = arith.constant 0 : index
    %c0_117 = arith.constant 0 : index
    %289 = vector.load %arg8[%c1_115, %c0_116, %c0_117] : memref<2x1x32xf32, #tpu.memory_space<vmem>>, vector<1x1x32xf32>
    %290 = vector.shape_cast %289 : vector<1x1x32xf32> to vector<1x32xf32>
    %291 = vector.broadcast %290 : vector<1x32xf32> to vector<16x32xf32>
    %292 = arith.addf %288, %291 : vector<16x32xf32>
    %293 = arith.addf %292, %185 : vector<16x32xf32>
    %c1_118 = arith.constant 1 : index
    %c0_119 = arith.constant 0 : index
    %c0_120 = arith.constant 0 : index
    %294 = vector.load %arg9[%c1_118, %c0_119, %c0_120] : memref<2x1x32xf32, #tpu.memory_space<vmem>>, vector<1x1x32xf32>
    %295 = vector.shape_cast %294 : vector<1x1x32xf32> to vector<1x32xf32>
    %c1_121 = arith.constant 1 : index
    %c0_122 = arith.constant 0 : index
    %c0_123 = arith.constant 0 : index
    %296 = vector.load %arg10[%c1_121, %c0_122, %c0_123] : memref<2x1x32xf32, #tpu.memory_space<vmem>>, vector<1x1x32xf32>
    %297 = vector.shape_cast %296 : vector<1x1x32xf32> to vector<1x32xf32>
    %cst_124 = arith.constant dense<0.000000e+00> : vector<16xf32>
    %298 = vector.multi_reduction <add>, %293, %cst_124 [1] : vector<16x32xf32> to vector<16xf32>
    %299 = vector.shape_cast %298 : vector<16xf32> to vector<16x1xf32>
    %cst_125 = arith.constant 3.200000e+01 : f32
    %300 = vector.broadcast %cst_125 : f32 to vector<16x1xf32>
    %301 = arith.divf %299, %300 : vector<16x1xf32>
    %302 = vector.broadcast %301 : vector<16x1xf32> to vector<16x32xf32>
    %303 = arith.subf %293, %302 : vector<16x32xf32>
    %304 = arith.mulf %303, %303 : vector<16x32xf32>
    %cst_126 = arith.constant dense<0.000000e+00> : vector<16xf32>
    %305 = vector.multi_reduction <add>, %304, %cst_126 [1] : vector<16x32xf32> to vector<16xf32>
    %306 = vector.shape_cast %305 : vector<16xf32> to vector<16x1xf32>
    %cst_127 = arith.constant 3.200000e+01 : f32
    %307 = vector.broadcast %cst_127 : f32 to vector<16x1xf32>
    %308 = arith.divf %306, %307 : vector<16x1xf32>
    %309 = vector.broadcast %301 : vector<16x1xf32> to vector<16x32xf32>
    %310 = arith.subf %293, %309 : vector<16x32xf32>
    %cst_128 = arith.constant 9.99999974E-6 : f32
    %311 = vector.broadcast %cst_128 : f32 to vector<16x1xf32>
    %312 = arith.addf %308, %311 : vector<16x1xf32>
    %313 = math.rsqrt %312 : vector<16x1xf32>
    %314 = vector.broadcast %313 : vector<16x1xf32> to vector<16x32xf32>
    %315 = arith.mulf %310, %314 : vector<16x32xf32>
    %316 = vector.broadcast %295 : vector<1x32xf32> to vector<16x32xf32>
    %317 = arith.mulf %315, %316 : vector<16x32xf32>
    %318 = vector.broadcast %297 : vector<1x32xf32> to vector<16x32xf32>
    %319 = arith.addf %317, %318 : vector<16x32xf32>
    %c1_129 = arith.constant 1 : index
    %c0_130 = arith.constant 0 : index
    %c0_131 = arith.constant 0 : index
    %320 = vector.load %arg11[%c1_129, %c0_130, %c0_131] : memref<2x32x64xbf16, #tpu.memory_space<vmem>>, vector<1x32x64xbf16>
    %321 = vector.shape_cast %320 : vector<1x32x64xbf16> to vector<32x64xbf16>
    %322 = arith.truncf %319 : vector<16x32xf32> to vector<16x32xbf16>
    %cst_132 = arith.constant dense<0.000000e+00> : vector<16x64xf32>
    %323 = tpu.matmul %322, %321, %cst_132 {dimension_numbers = #tpu.dot_dimension_numbers<[1], [0], [0], [1], [0, 0, 1, 1], [], []>} : vector<16x32xbf16>, vector<32x64xbf16>, vector<16x64xf32> -> vector<16x64xf32>
    %c1_133 = arith.constant 1 : index
    %c0_134 = arith.constant 0 : index
    %c0_135 = arith.constant 0 : index
    %324 = vector.load %arg12[%c1_133, %c0_134, %c0_135] : memref<2x1x64xf32, #tpu.memory_space<vmem>>, vector<1x1x64xf32>
    %325 = vector.shape_cast %324 : vector<1x1x64xf32> to vector<1x64xf32>
    %326 = vector.broadcast %325 : vector<1x64xf32> to vector<16x64xf32>
    %327 = arith.addf %323, %326 : vector<16x64xf32>
    %cst_136 = arith.constant 0.000000e+00 : f32
    %328 = vector.broadcast %cst_136 : f32 to vector<16x64xf32>
    %329 = arith.maximumf %327, %328 : vector<16x64xf32>
    %c1_137 = arith.constant 1 : index
    %c0_138 = arith.constant 0 : index
    %c0_139 = arith.constant 0 : index
    %330 = vector.load %arg13[%c1_137, %c0_138, %c0_139] : memref<2x64x32xbf16, #tpu.memory_space<vmem>>, vector<1x64x32xbf16>
    %331 = vector.shape_cast %330 : vector<1x64x32xbf16> to vector<64x32xbf16>
    %332 = arith.truncf %329 : vector<16x64xf32> to vector<16x64xbf16>
    %cst_140 = arith.constant dense<0.000000e+00> : vector<16x32xf32>
    %333 = tpu.matmul %332, %331, %cst_140 {dimension_numbers = #tpu.dot_dimension_numbers<[1], [0], [0], [1], [0, 0, 1, 1], [], []>} : vector<16x64xbf16>, vector<64x32xbf16>, vector<16x32xf32> -> vector<16x32xf32>
    %c1_141 = arith.constant 1 : index
    %c0_142 = arith.constant 0 : index
    %c0_143 = arith.constant 0 : index
    %334 = vector.load %arg14[%c1_141, %c0_142, %c0_143] : memref<2x1x32xf32, #tpu.memory_space<vmem>>, vector<1x1x32xf32>
    %335 = vector.shape_cast %334 : vector<1x1x32xf32> to vector<1x32xf32>
    %336 = vector.broadcast %335 : vector<1x32xf32> to vector<16x32xf32>
    %337 = arith.addf %333, %336 : vector<16x32xf32>
    %338 = arith.addf %337, %319 : vector<16x32xf32>
    %c1_144 = arith.constant 1 : index
    %c0_145 = arith.constant 0 : index
    %c0_146 = arith.constant 0 : index
    %339 = vector.load %arg15[%c1_144, %c0_145, %c0_146] : memref<2x1x32xf32, #tpu.memory_space<vmem>>, vector<1x1x32xf32>
    %340 = vector.shape_cast %339 : vector<1x1x32xf32> to vector<1x32xf32>
    %c1_147 = arith.constant 1 : index
    %c0_148 = arith.constant 0 : index
    %c0_149 = arith.constant 0 : index
    %341 = vector.load %arg16[%c1_147, %c0_148, %c0_149] : memref<2x1x32xf32, #tpu.memory_space<vmem>>, vector<1x1x32xf32>
    %342 = vector.shape_cast %341 : vector<1x1x32xf32> to vector<1x32xf32>
    %cst_150 = arith.constant dense<0.000000e+00> : vector<16xf32>
    %343 = vector.multi_reduction <add>, %338, %cst_150 [1] : vector<16x32xf32> to vector<16xf32>
    %344 = vector.shape_cast %343 : vector<16xf32> to vector<16x1xf32>
    %cst_151 = arith.constant 3.200000e+01 : f32
    %345 = vector.broadcast %cst_151 : f32 to vector<16x1xf32>
    %346 = arith.divf %344, %345 : vector<16x1xf32>
    %347 = vector.broadcast %346 : vector<16x1xf32> to vector<16x32xf32>
    %348 = arith.subf %338, %347 : vector<16x32xf32>
    %349 = arith.mulf %348, %348 : vector<16x32xf32>
    %cst_152 = arith.constant dense<0.000000e+00> : vector<16xf32>
    %350 = vector.multi_reduction <add>, %349, %cst_152 [1] : vector<16x32xf32> to vector<16xf32>
    %351 = vector.shape_cast %350 : vector<16xf32> to vector<16x1xf32>
    %cst_153 = arith.constant 3.200000e+01 : f32
    %352 = vector.broadcast %cst_153 : f32 to vector<16x1xf32>
    %353 = arith.divf %351, %352 : vector<16x1xf32>
    %354 = vector.broadcast %346 : vector<16x1xf32> to vector<16x32xf32>
    %355 = arith.subf %338, %354 : vector<16x32xf32>
    %cst_154 = arith.constant 9.99999974E-6 : f32
    %356 = vector.broadcast %cst_154 : f32 to vector<16x1xf32>
    %357 = arith.addf %353, %356 : vector<16x1xf32>
    %358 = math.rsqrt %357 : vector<16x1xf32>
    %359 = vector.broadcast %358 : vector<16x1xf32> to vector<16x32xf32>
    %360 = arith.mulf %355, %359 : vector<16x32xf32>
    %361 = vector.broadcast %340 : vector<1x32xf32> to vector<16x32xf32>
    %362 = arith.mulf %360, %361 : vector<16x32xf32>
    %363 = vector.broadcast %342 : vector<1x32xf32> to vector<16x32xf32>
    %364 = arith.addf %362, %363 : vector<16x32xf32>
    %c0_155 = arith.constant 0 : index
    %c0_156 = arith.constant 0 : index
    %365 = vector.load %arg1[%c0_155, %c0_156] : memref<16x32xf32, #tpu.memory_space<vmem>>, vector<16x32xf32>
    %366 = vector.shape_cast %2 : vector<8x8xf32> to vector<1x8x8xf32>
    %367 = vector.shape_cast %1 : vector<2x8xf32> to vector<2x1x8xf32>
    %368 = vector.shape_cast %367 : vector<2x1x8xf32> to vector<2x1x8xf32>
    %369 = vector.broadcast %368 : vector<2x1x8xf32> to vector<2x8x8xf32>
    %370 = vector.broadcast %366 : vector<1x8x8xf32> to vector<2x8x8xf32>
    %371 = arith.mulf %370, %369 : vector<2x8x8xf32>
    %372 = vector.shape_cast %0 : vector<2x8xf32> to vector<2x1x8xf32>
    %373 = vector.shape_cast %372 : vector<2x1x8xf32> to vector<2x1x8xf32>
    %374 = vector.broadcast %373 : vector<2x1x8xf32> to vector<2x8x8xf32>
    %c0_157 = arith.constant 0 : index
    %c0_158 = arith.constant 0 : index
    %375 = vector.load %arg17[%c0_157, %c0_158] : memref<32x96xbf16, #tpu.memory_space<vmem>>, vector<32x96xbf16>
    %376 = arith.truncf %365 : vector<16x32xf32> to vector<16x32xbf16>
    %cst_159 = arith.constant dense<0.000000e+00> : vector<16x96xf32>
    %377 = tpu.matmul %376, %375, %cst_159 {dimension_numbers = #tpu.dot_dimension_numbers<[1], [0], [0], [1], [0, 0, 1, 1], [], []>} : vector<16x32xbf16>, vector<32x96xbf16>, vector<16x96xf32> -> vector<16x96xf32>
    %c0_160 = arith.constant 0 : index
    %c0_161 = arith.constant 0 : index
    %378 = vector.load %arg18[%c0_160, %c0_161] : memref<1x96xf32, #tpu.memory_space<vmem>>, vector<1x96xf32>
    %379 = vector.broadcast %378 : vector<1x96xf32> to vector<16x96xf32>
    %380 = arith.addf %377, %379 : vector<16x96xf32>
    %381 = vector.extract_strided_slice %380 {offsets = [0, 0], sizes = [16, 32], strides = [1, 1]} : vector<16x96xf32> to vector<16x32xf32>
    %382 = vector.extract_strided_slice %380 {offsets = [0, 32], sizes = [16, 32], strides = [1, 1]} : vector<16x96xf32> to vector<16x32xf32>
    %383 = vector.extract_strided_slice %380 {offsets = [0, 64], sizes = [16, 32], strides = [1, 1]} : vector<16x96xf32> to vector<16x32xf32>
    %384 = vector.shape_cast %381 : vector<16x32xf32> to vector<2x8x32xf32>
    %385 = arith.truncf %384 : vector<2x8x32xf32> to vector<2x8x32xbf16>
    %386 = vector.shape_cast %382 : vector<16x32xf32> to vector<2x8x32xf32>
    %387 = arith.truncf %386 : vector<2x8x32xf32> to vector<2x8x32xbf16>
    %388 = vector.shape_cast %383 : vector<16x32xf32> to vector<2x8x32xf32>
    %389 = arith.truncf %388 : vector<2x8x32xf32> to vector<2x8x32xbf16>
    %390 = vector.extract_strided_slice %385 {offsets = [0, 0, 0], sizes = [2, 8, 8], strides = [1, 1, 1]} : vector<2x8x32xbf16> to vector<2x8x8xbf16>
    %391 = vector.extract_strided_slice %387 {offsets = [0, 0, 0], sizes = [2, 8, 8], strides = [1, 1, 1]} : vector<2x8x32xbf16> to vector<2x8x8xbf16>
    "tpu.trace_start"() <{level = 10 : i32, message = "bqd,bkd->bqk"}> : () -> ()
    %cst_162 = arith.constant dense<0.000000e+00> : vector<2x8x8xf32>
    %392 = tpu.matmul %390, %391, %cst_162 {dimension_numbers = #tpu.dot_dimension_numbers<[2], [2], [1], [1], [0, 0, 0, 1, 1, 1], [0], [0]>} : vector<2x8x8xbf16>, vector<2x8x8xbf16>, vector<2x8x8xf32> -> vector<2x8x8xf32>
    %cst_163 = arith.constant 0.000000e+00 : f32
    "tpu.trace_stop"() : () -> ()
    %393 = vector.broadcast %cst_163 : f32 to vector<2x8x8xf32>
    %394 = arith.cmpf oeq, %371, %393 : vector<2x8x8xf32>
    %cst_164 = arith.constant -1.000000e+04 : f32
    %395 = vector.broadcast %cst_164 : f32 to vector<2x8x8xf32>
    %396 = arith.select %394, %395, %392 : vector<2x8x8xi1>, vector<2x8x8xf32>
    %cst_165 = arith.constant dense<0xFF800000> : vector<2x8xf32>
    %397 = vector.multi_reduction <maximumf>, %396, %cst_165 [2] : vector<2x8x8xf32> to vector<2x8xf32>
    %398 = vector.shape_cast %397 : vector<2x8xf32> to vector<2x8x1xf32>
    %399 = vector.broadcast %398 : vector<2x8x1xf32> to vector<2x8x8xf32>
    %400 = arith.subf %396, %399 : vector<2x8x8xf32>
    %401 = math.exp %400 : vector<2x8x8xf32>
    %cst_166 = arith.constant dense<0.000000e+00> : vector<2x8xf32>
    %402 = vector.multi_reduction <add>, %401, %cst_166 [2] : vector<2x8x8xf32> to vector<2x8xf32>
    %403 = vector.shape_cast %402 : vector<2x8xf32> to vector<2x8x1xf32>
    %404 = tpu.reciprocal %403 {approx = true} : vector<2x8x1xf32> -> vector<2x8x1xf32>
    %405 = vector.broadcast %404 : vector<2x8x1xf32> to vector<2x8x8xf32>
    %406 = arith.mulf %401, %405 : vector<2x8x8xf32>
    %407 = arith.truncf %406 : vector<2x8x8xf32> to vector<2x8x8xbf16>
    %408 = vector.extract_strided_slice %389 {offsets = [0, 0, 0], sizes = [2, 8, 8], strides = [1, 1, 1]} : vector<2x8x32xbf16> to vector<2x8x8xbf16>
    "tpu.trace_start"() <{level = 10 : i32, message = "bqk,bkd->bqd"}> : () -> ()
    %cst_167 = arith.constant dense<0.000000e+00> : vector<2x8x8xf32>
    %409 = tpu.matmul %407, %408, %cst_167 {dimension_numbers = #tpu.dot_dimension_numbers<[2], [1], [1], [2], [0, 0, 0, 1, 1, 2], [0], [0]>} : vector<2x8x8xbf16>, vector<2x8x8xbf16>, vector<2x8x8xf32> -> vector<2x8x8xf32>
    "tpu.trace_stop"() : () -> ()
    %410 = vector.extract_strided_slice %385 {offsets = [0, 0, 8], sizes = [2, 8, 8], strides = [1, 1, 1]} : vector<2x8x32xbf16> to vector<2x8x8xbf16>
    %411 = vector.extract_strided_slice %387 {offsets = [0, 0, 8], sizes = [2, 8, 8], strides = [1, 1, 1]} : vector<2x8x32xbf16> to vector<2x8x8xbf16>
    "tpu.trace_start"() <{level = 10 : i32, message = "bqd,bkd->bqk"}> : () -> ()
    %cst_168 = arith.constant dense<0.000000e+00> : vector<2x8x8xf32>
    %412 = tpu.matmul %410, %411, %cst_168 {dimension_numbers = #tpu.dot_dimension_numbers<[2], [2], [1], [1], [0, 0, 0, 1, 1, 1], [0], [0]>} : vector<2x8x8xbf16>, vector<2x8x8xbf16>, vector<2x8x8xf32> -> vector<2x8x8xf32>
    %cst_169 = arith.constant 0.000000e+00 : f32
    "tpu.trace_stop"() : () -> ()
    %413 = vector.broadcast %cst_169 : f32 to vector<2x8x8xf32>
    %414 = arith.cmpf oeq, %371, %413 : vector<2x8x8xf32>
    %cst_170 = arith.constant -1.000000e+04 : f32
    %415 = vector.broadcast %cst_170 : f32 to vector<2x8x8xf32>
    %416 = arith.select %414, %415, %412 : vector<2x8x8xi1>, vector<2x8x8xf32>
    %cst_171 = arith.constant dense<0xFF800000> : vector<2x8xf32>
    %417 = vector.multi_reduction <maximumf>, %416, %cst_171 [2] : vector<2x8x8xf32> to vector<2x8xf32>
    %418 = vector.shape_cast %417 : vector<2x8xf32> to vector<2x8x1xf32>
    %419 = vector.broadcast %418 : vector<2x8x1xf32> to vector<2x8x8xf32>
    %420 = arith.subf %416, %419 : vector<2x8x8xf32>
    %421 = math.exp %420 : vector<2x8x8xf32>
    %cst_172 = arith.constant dense<0.000000e+00> : vector<2x8xf32>
    %422 = vector.multi_reduction <add>, %421, %cst_172 [2] : vector<2x8x8xf32> to vector<2x8xf32>
    %423 = vector.shape_cast %422 : vector<2x8xf32> to vector<2x8x1xf32>
    %424 = tpu.reciprocal %423 {approx = true} : vector<2x8x1xf32> -> vector<2x8x1xf32>
    %425 = vector.broadcast %424 : vector<2x8x1xf32> to vector<2x8x8xf32>
    %426 = arith.mulf %421, %425 : vector<2x8x8xf32>
    %427 = arith.truncf %426 : vector<2x8x8xf32> to vector<2x8x8xbf16>
    %428 = vector.extract_strided_slice %389 {offsets = [0, 0, 8], sizes = [2, 8, 8], strides = [1, 1, 1]} : vector<2x8x32xbf16> to vector<2x8x8xbf16>
    "tpu.trace_start"() <{level = 10 : i32, message = "bqk,bkd->bqd"}> : () -> ()
    %cst_173 = arith.constant dense<0.000000e+00> : vector<2x8x8xf32>
    %429 = tpu.matmul %427, %428, %cst_173 {dimension_numbers = #tpu.dot_dimension_numbers<[2], [1], [1], [2], [0, 0, 0, 1, 1, 2], [0], [0]>} : vector<2x8x8xbf16>, vector<2x8x8xbf16>, vector<2x8x8xf32> -> vector<2x8x8xf32>
    "tpu.trace_stop"() : () -> ()
    %430 = vector.extract_strided_slice %385 {offsets = [0, 0, 16], sizes = [2, 8, 8], strides = [1, 1, 1]} : vector<2x8x32xbf16> to vector<2x8x8xbf16>
    %431 = vector.extract_strided_slice %387 {offsets = [0, 0, 16], sizes = [2, 8, 8], strides = [1, 1, 1]} : vector<2x8x32xbf16> to vector<2x8x8xbf16>
    "tpu.trace_start"() <{level = 10 : i32, message = "bqd,bkd->bqk"}> : () -> ()
    %cst_174 = arith.constant dense<0.000000e+00> : vector<2x8x8xf32>
    %432 = tpu.matmul %430, %431, %cst_174 {dimension_numbers = #tpu.dot_dimension_numbers<[2], [2], [1], [1], [0, 0, 0, 1, 1, 1], [0], [0]>} : vector<2x8x8xbf16>, vector<2x8x8xbf16>, vector<2x8x8xf32> -> vector<2x8x8xf32>
    %cst_175 = arith.constant 0.000000e+00 : f32
    "tpu.trace_stop"() : () -> ()
    %433 = vector.broadcast %cst_175 : f32 to vector<2x8x8xf32>
    %434 = arith.cmpf oeq, %371, %433 : vector<2x8x8xf32>
    %cst_176 = arith.constant -1.000000e+04 : f32
    %435 = vector.broadcast %cst_176 : f32 to vector<2x8x8xf32>
    %436 = arith.select %434, %435, %432 : vector<2x8x8xi1>, vector<2x8x8xf32>
    %cst_177 = arith.constant dense<0xFF800000> : vector<2x8xf32>
    %437 = vector.multi_reduction <maximumf>, %436, %cst_177 [2] : vector<2x8x8xf32> to vector<2x8xf32>
    %438 = vector.shape_cast %437 : vector<2x8xf32> to vector<2x8x1xf32>
    %439 = vector.broadcast %438 : vector<2x8x1xf32> to vector<2x8x8xf32>
    %440 = arith.subf %436, %439 : vector<2x8x8xf32>
    %441 = math.exp %440 : vector<2x8x8xf32>
    %cst_178 = arith.constant dense<0.000000e+00> : vector<2x8xf32>
    %442 = vector.multi_reduction <add>, %441, %cst_178 [2] : vector<2x8x8xf32> to vector<2x8xf32>
    %443 = vector.shape_cast %442 : vector<2x8xf32> to vector<2x8x1xf32>
    %444 = tpu.reciprocal %443 {approx = true} : vector<2x8x1xf32> -> vector<2x8x1xf32>
    %445 = vector.broadcast %444 : vector<2x8x1xf32> to vector<2x8x8xf32>
    %446 = arith.mulf %441, %445 : vector<2x8x8xf32>
    %447 = arith.truncf %446 : vector<2x8x8xf32> to vector<2x8x8xbf16>
    %448 = vector.extract_strided_slice %389 {offsets = [0, 0, 16], sizes = [2, 8, 8], strides = [1, 1, 1]} : vector<2x8x32xbf16> to vector<2x8x8xbf16>
    "tpu.trace_start"() <{level = 10 : i32, message = "bqk,bkd->bqd"}> : () -> ()
    %cst_179 = arith.constant dense<0.000000e+00> : vector<2x8x8xf32>
    %449 = tpu.matmul %447, %448, %cst_179 {dimension_numbers = #tpu.dot_dimension_numbers<[2], [1], [1], [2], [0, 0, 0, 1, 1, 2], [0], [0]>} : vector<2x8x8xbf16>, vector<2x8x8xbf16>, vector<2x8x8xf32> -> vector<2x8x8xf32>
    "tpu.trace_stop"() : () -> ()
    %450 = vector.extract_strided_slice %385 {offsets = [0, 0, 24], sizes = [2, 8, 8], strides = [1, 1, 1]} : vector<2x8x32xbf16> to vector<2x8x8xbf16>
    %451 = vector.extract_strided_slice %387 {offsets = [0, 0, 24], sizes = [2, 8, 8], strides = [1, 1, 1]} : vector<2x8x32xbf16> to vector<2x8x8xbf16>
    "tpu.trace_start"() <{level = 10 : i32, message = "bqd,bkd->bqk"}> : () -> ()
    %cst_180 = arith.constant dense<0.000000e+00> : vector<2x8x8xf32>
    %452 = tpu.matmul %450, %451, %cst_180 {dimension_numbers = #tpu.dot_dimension_numbers<[2], [2], [1], [1], [0, 0, 0, 1, 1, 1], [0], [0]>} : vector<2x8x8xbf16>, vector<2x8x8xbf16>, vector<2x8x8xf32> -> vector<2x8x8xf32>
    %cst_181 = arith.constant 0.000000e+00 : f32
    "tpu.trace_stop"() : () -> ()
    %453 = vector.broadcast %cst_181 : f32 to vector<2x8x8xf32>
    %454 = arith.cmpf oeq, %371, %453 : vector<2x8x8xf32>
    %cst_182 = arith.constant -1.000000e+04 : f32
    %455 = vector.broadcast %cst_182 : f32 to vector<2x8x8xf32>
    %456 = arith.select %454, %455, %452 : vector<2x8x8xi1>, vector<2x8x8xf32>
    %cst_183 = arith.constant dense<0xFF800000> : vector<2x8xf32>
    %457 = vector.multi_reduction <maximumf>, %456, %cst_183 [2] : vector<2x8x8xf32> to vector<2x8xf32>
    %458 = vector.shape_cast %457 : vector<2x8xf32> to vector<2x8x1xf32>
    %459 = vector.broadcast %458 : vector<2x8x1xf32> to vector<2x8x8xf32>
    %460 = arith.subf %456, %459 : vector<2x8x8xf32>
    %461 = math.exp %460 : vector<2x8x8xf32>
    %cst_184 = arith.constant dense<0.000000e+00> : vector<2x8xf32>
    %462 = vector.multi_reduction <add>, %461, %cst_184 [2] : vector<2x8x8xf32> to vector<2x8xf32>
    %463 = vector.shape_cast %462 : vector<2x8xf32> to vector<2x8x1xf32>
    %464 = tpu.reciprocal %463 {approx = true} : vector<2x8x1xf32> -> vector<2x8x1xf32>
    %465 = vector.broadcast %464 : vector<2x8x1xf32> to vector<2x8x8xf32>
    %466 = arith.mulf %461, %465 : vector<2x8x8xf32>
    %467 = arith.truncf %466 : vector<2x8x8xf32> to vector<2x8x8xbf16>
    %468 = vector.extract_strided_slice %389 {offsets = [0, 0, 24], sizes = [2, 8, 8], strides = [1, 1, 1]} : vector<2x8x32xbf16> to vector<2x8x8xbf16>
    "tpu.trace_start"() <{level = 10 : i32, message = "bqk,bkd->bqd"}> : () -> ()
    %cst_185 = arith.constant dense<0.000000e+00> : vector<2x8x8xf32>
    %469 = tpu.matmul %467, %468, %cst_185 {dimension_numbers = #tpu.dot_dimension_numbers<[2], [1], [1], [2], [0, 0, 0, 1, 1, 2], [0], [0]>} : vector<2x8x8xbf16>, vector<2x8x8xbf16>, vector<2x8x8xf32> -> vector<2x8x8xf32>
    "tpu.trace_stop"() : () -> ()
    %470 = tpu.concatenate %409, %429, %449, %469 in 2 : vector<2x8x8xf32>, vector<2x8x8xf32>, vector<2x8x8xf32>, vector<2x8x8xf32> -> vector<2x8x32xf32>
    %471 = vector.shape_cast %470 : vector<2x8x32xf32> to vector<16x32xf32>
    %c0_186 = arith.constant 0 : index
    %c0_187 = arith.constant 0 : index
    %472 = vector.load %arg19[%c0_186, %c0_187] : memref<32x32xbf16, #tpu.memory_space<vmem>>, vector<32x32xbf16>
    %473 = arith.truncf %471 : vector<16x32xf32> to vector<16x32xbf16>
    %cst_188 = arith.constant dense<0.000000e+00> : vector<16x32xf32>
    %474 = tpu.matmul %473, %472, %cst_188 {dimension_numbers = #tpu.dot_dimension_numbers<[1], [0], [0], [1], [0, 0, 1, 1], [], []>} : vector<16x32xbf16>, vector<32x32xbf16>, vector<16x32xf32> -> vector<16x32xf32>
    %c0_189 = arith.constant 0 : index
    %c0_190 = arith.constant 0 : index
    %475 = vector.load %arg20[%c0_189, %c0_190] : memref<1x32xf32, #tpu.memory_space<vmem>>, vector<1x32xf32>
    %476 = vector.broadcast %475 : vector<1x32xf32> to vector<16x32xf32>
    %477 = arith.addf %474, %476 : vector<16x32xf32>
    %478 = arith.addf %477, %365 : vector<16x32xf32>
    %c0_191 = arith.constant 0 : index
    %c0_192 = arith.constant 0 : index
    %479 = vector.load %arg21[%c0_191, %c0_192] : memref<1x32xf32, #tpu.memory_space<vmem>>, vector<1x32xf32>
    %c0_193 = arith.constant 0 : index
    %c0_194 = arith.constant 0 : index
    %480 = vector.load %arg22[%c0_193, %c0_194] : memref<1x32xf32, #tpu.memory_space<vmem>>, vector<1x32xf32>
    %cst_195 = arith.constant dense<0.000000e+00> : vector<16xf32>
    %481 = vector.multi_reduction <add>, %478, %cst_195 [1] : vector<16x32xf32> to vector<16xf32>
    %482 = vector.shape_cast %481 : vector<16xf32> to vector<16x1xf32>
    %cst_196 = arith.constant 3.200000e+01 : f32
    %483 = vector.broadcast %cst_196 : f32 to vector<16x1xf32>
    %484 = arith.divf %482, %483 : vector<16x1xf32>
    %485 = vector.broadcast %484 : vector<16x1xf32> to vector<16x32xf32>
    %486 = arith.subf %478, %485 : vector<16x32xf32>
    %487 = arith.mulf %486, %486 : vector<16x32xf32>
    %cst_197 = arith.constant dense<0.000000e+00> : vector<16xf32>
    %488 = vector.multi_reduction <add>, %487, %cst_197 [1] : vector<16x32xf32> to vector<16xf32>
    %489 = vector.shape_cast %488 : vector<16xf32> to vector<16x1xf32>
    %cst_198 = arith.constant 3.200000e+01 : f32
    %490 = vector.broadcast %cst_198 : f32 to vector<16x1xf32>
    %491 = arith.divf %489, %490 : vector<16x1xf32>
    %492 = vector.broadcast %484 : vector<16x1xf32> to vector<16x32xf32>
    %493 = arith.subf %478, %492 : vector<16x32xf32>
    %cst_199 = arith.constant 9.99999974E-6 : f32
    %494 = vector.broadcast %cst_199 : f32 to vector<16x1xf32>
    %495 = arith.addf %491, %494 : vector<16x1xf32>
    %496 = math.rsqrt %495 : vector<16x1xf32>
    %497 = vector.broadcast %496 : vector<16x1xf32> to vector<16x32xf32>
    %498 = arith.mulf %493, %497 : vector<16x32xf32>
    %499 = vector.broadcast %479 : vector<1x32xf32> to vector<16x32xf32>
    %500 = arith.mulf %498, %499 : vector<16x32xf32>
    %501 = vector.broadcast %480 : vector<1x32xf32> to vector<16x32xf32>
    %502 = arith.addf %500, %501 : vector<16x32xf32>
    %c0_200 = arith.constant 0 : index
    %c0_201 = arith.constant 0 : index
    %503 = vector.load %arg23[%c0_200, %c0_201] : memref<32x32xbf16, #tpu.memory_space<vmem>>, vector<32x32xbf16>
    %504 = arith.truncf %502 : vector<16x32xf32> to vector<16x32xbf16>
    %cst_202 = arith.constant dense<0.000000e+00> : vector<16x32xf32>
    %505 = tpu.matmul %504, %503, %cst_202 {dimension_numbers = #tpu.dot_dimension_numbers<[1], [0], [0], [1], [0, 0, 1, 1], [], []>} : vector<16x32xbf16>, vector<32x32xbf16>, vector<16x32xf32> -> vector<16x32xf32>
    %c0_203 = arith.constant 0 : index
    %c0_204 = arith.constant 0 : index
    %506 = vector.load %arg24[%c0_203, %c0_204] : memref<1x32xf32, #tpu.memory_space<vmem>>, vector<1x32xf32>
    %507 = vector.broadcast %506 : vector<1x32xf32> to vector<16x32xf32>
    %508 = arith.addf %505, %507 : vector<16x32xf32>
    %c0_205 = arith.constant 0 : index
    %c0_206 = arith.constant 0 : index
    %509 = vector.load %arg25[%c0_205, %c0_206] : memref<32x64xbf16, #tpu.memory_space<vmem>>, vector<32x64xbf16>
    %510 = arith.truncf %364 : vector<16x32xf32> to vector<16x32xbf16>
    %cst_207 = arith.constant dense<0.000000e+00> : vector<16x64xf32>
    %511 = tpu.matmul %510, %509, %cst_207 {dimension_numbers = #tpu.dot_dimension_numbers<[1], [0], [0], [1], [0, 0, 1, 1], [], []>} : vector<16x32xbf16>, vector<32x64xbf16>, vector<16x64xf32> -> vector<16x64xf32>
    %c0_208 = arith.constant 0 : index
    %c0_209 = arith.constant 0 : index
    %512 = vector.load %arg26[%c0_208, %c0_209] : memref<1x64xf32, #tpu.memory_space<vmem>>, vector<1x64xf32>
    %513 = vector.broadcast %512 : vector<1x64xf32> to vector<16x64xf32>
    %514 = arith.addf %511, %513 : vector<16x64xf32>
    %515 = vector.extract_strided_slice %514 {offsets = [0, 0], sizes = [16, 32], strides = [1, 1]} : vector<16x64xf32> to vector<16x32xf32>
    %516 = vector.extract_strided_slice %514 {offsets = [0, 32], sizes = [16, 32], strides = [1, 1]} : vector<16x64xf32> to vector<16x32xf32>
    %517 = vector.shape_cast %508 : vector<16x32xf32> to vector<2x8x32xf32>
    %518 = arith.truncf %517 : vector<2x8x32xf32> to vector<2x8x32xbf16>
    %519 = vector.shape_cast %515 : vector<16x32xf32> to vector<2x8x32xf32>
    %520 = arith.truncf %519 : vector<2x8x32xf32> to vector<2x8x32xbf16>
    %521 = vector.shape_cast %516 : vector<16x32xf32> to vector<2x8x32xf32>
    %522 = arith.truncf %521 : vector<2x8x32xf32> to vector<2x8x32xbf16>
    %523 = vector.extract_strided_slice %518 {offsets = [0, 0, 0], sizes = [2, 8, 8], strides = [1, 1, 1]} : vector<2x8x32xbf16> to vector<2x8x8xbf16>
    %524 = vector.extract_strided_slice %520 {offsets = [0, 0, 0], sizes = [2, 8, 8], strides = [1, 1, 1]} : vector<2x8x32xbf16> to vector<2x8x8xbf16>
    "tpu.trace_start"() <{level = 10 : i32, message = "bqd,bkd->bqk"}> : () -> ()
    %cst_210 = arith.constant dense<0.000000e+00> : vector<2x8x8xf32>
    %525 = tpu.matmul %523, %524, %cst_210 {dimension_numbers = #tpu.dot_dimension_numbers<[2], [2], [1], [1], [0, 0, 0, 1, 1, 1], [0], [0]>} : vector<2x8x8xbf16>, vector<2x8x8xbf16>, vector<2x8x8xf32> -> vector<2x8x8xf32>
    %cst_211 = arith.constant 0.000000e+00 : f32
    "tpu.trace_stop"() : () -> ()
    %526 = vector.broadcast %cst_211 : f32 to vector<2x8x8xf32>
    %527 = arith.cmpf oeq, %374, %526 : vector<2x8x8xf32>
    %cst_212 = arith.constant -1.000000e+04 : f32
    %528 = vector.broadcast %cst_212 : f32 to vector<2x8x8xf32>
    %529 = arith.select %527, %528, %525 : vector<2x8x8xi1>, vector<2x8x8xf32>
    %cst_213 = arith.constant dense<0xFF800000> : vector<2x8xf32>
    %530 = vector.multi_reduction <maximumf>, %529, %cst_213 [2] : vector<2x8x8xf32> to vector<2x8xf32>
    %531 = vector.shape_cast %530 : vector<2x8xf32> to vector<2x8x1xf32>
    %532 = vector.broadcast %531 : vector<2x8x1xf32> to vector<2x8x8xf32>
    %533 = arith.subf %529, %532 : vector<2x8x8xf32>
    %534 = math.exp %533 : vector<2x8x8xf32>
    %cst_214 = arith.constant dense<0.000000e+00> : vector<2x8xf32>
    %535 = vector.multi_reduction <add>, %534, %cst_214 [2] : vector<2x8x8xf32> to vector<2x8xf32>
    %536 = vector.shape_cast %535 : vector<2x8xf32> to vector<2x8x1xf32>
    %537 = tpu.reciprocal %536 {approx = true} : vector<2x8x1xf32> -> vector<2x8x1xf32>
    %538 = vector.broadcast %537 : vector<2x8x1xf32> to vector<2x8x8xf32>
    %539 = arith.mulf %534, %538 : vector<2x8x8xf32>
    %540 = arith.truncf %539 : vector<2x8x8xf32> to vector<2x8x8xbf16>
    %541 = vector.extract_strided_slice %522 {offsets = [0, 0, 0], sizes = [2, 8, 8], strides = [1, 1, 1]} : vector<2x8x32xbf16> to vector<2x8x8xbf16>
    "tpu.trace_start"() <{level = 10 : i32, message = "bqk,bkd->bqd"}> : () -> ()
    %cst_215 = arith.constant dense<0.000000e+00> : vector<2x8x8xf32>
    %542 = tpu.matmul %540, %541, %cst_215 {dimension_numbers = #tpu.dot_dimension_numbers<[2], [1], [1], [2], [0, 0, 0, 1, 1, 2], [0], [0]>} : vector<2x8x8xbf16>, vector<2x8x8xbf16>, vector<2x8x8xf32> -> vector<2x8x8xf32>
    "tpu.trace_stop"() : () -> ()
    %543 = vector.extract_strided_slice %518 {offsets = [0, 0, 8], sizes = [2, 8, 8], strides = [1, 1, 1]} : vector<2x8x32xbf16> to vector<2x8x8xbf16>
    %544 = vector.extract_strided_slice %520 {offsets = [0, 0, 8], sizes = [2, 8, 8], strides = [1, 1, 1]} : vector<2x8x32xbf16> to vector<2x8x8xbf16>
    "tpu.trace_start"() <{level = 10 : i32, message = "bqd,bkd->bqk"}> : () -> ()
    %cst_216 = arith.constant dense<0.000000e+00> : vector<2x8x8xf32>
    %545 = tpu.matmul %543, %544, %cst_216 {dimension_numbers = #tpu.dot_dimension_numbers<[2], [2], [1], [1], [0, 0, 0, 1, 1, 1], [0], [0]>} : vector<2x8x8xbf16>, vector<2x8x8xbf16>, vector<2x8x8xf32> -> vector<2x8x8xf32>
    %cst_217 = arith.constant 0.000000e+00 : f32
    "tpu.trace_stop"() : () -> ()
    %546 = vector.broadcast %cst_217 : f32 to vector<2x8x8xf32>
    %547 = arith.cmpf oeq, %374, %546 : vector<2x8x8xf32>
    %cst_218 = arith.constant -1.000000e+04 : f32
    %548 = vector.broadcast %cst_218 : f32 to vector<2x8x8xf32>
    %549 = arith.select %547, %548, %545 : vector<2x8x8xi1>, vector<2x8x8xf32>
    %cst_219 = arith.constant dense<0xFF800000> : vector<2x8xf32>
    %550 = vector.multi_reduction <maximumf>, %549, %cst_219 [2] : vector<2x8x8xf32> to vector<2x8xf32>
    %551 = vector.shape_cast %550 : vector<2x8xf32> to vector<2x8x1xf32>
    %552 = vector.broadcast %551 : vector<2x8x1xf32> to vector<2x8x8xf32>
    %553 = arith.subf %549, %552 : vector<2x8x8xf32>
    %554 = math.exp %553 : vector<2x8x8xf32>
    %cst_220 = arith.constant dense<0.000000e+00> : vector<2x8xf32>
    %555 = vector.multi_reduction <add>, %554, %cst_220 [2] : vector<2x8x8xf32> to vector<2x8xf32>
    %556 = vector.shape_cast %555 : vector<2x8xf32> to vector<2x8x1xf32>
    %557 = tpu.reciprocal %556 {approx = true} : vector<2x8x1xf32> -> vector<2x8x1xf32>
    %558 = vector.broadcast %557 : vector<2x8x1xf32> to vector<2x8x8xf32>
    %559 = arith.mulf %554, %558 : vector<2x8x8xf32>
    %560 = arith.truncf %559 : vector<2x8x8xf32> to vector<2x8x8xbf16>
    %561 = vector.extract_strided_slice %522 {offsets = [0, 0, 8], sizes = [2, 8, 8], strides = [1, 1, 1]} : vector<2x8x32xbf16> to vector<2x8x8xbf16>
    "tpu.trace_start"() <{level = 10 : i32, message = "bqk,bkd->bqd"}> : () -> ()
    %cst_221 = arith.constant dense<0.000000e+00> : vector<2x8x8xf32>
    %562 = tpu.matmul %560, %561, %cst_221 {dimension_numbers = #tpu.dot_dimension_numbers<[2], [1], [1], [2], [0, 0, 0, 1, 1, 2], [0], [0]>} : vector<2x8x8xbf16>, vector<2x8x8xbf16>, vector<2x8x8xf32> -> vector<2x8x8xf32>
    "tpu.trace_stop"() : () -> ()
    %563 = vector.extract_strided_slice %518 {offsets = [0, 0, 16], sizes = [2, 8, 8], strides = [1, 1, 1]} : vector<2x8x32xbf16> to vector<2x8x8xbf16>
    %564 = vector.extract_strided_slice %520 {offsets = [0, 0, 16], sizes = [2, 8, 8], strides = [1, 1, 1]} : vector<2x8x32xbf16> to vector<2x8x8xbf16>
    "tpu.trace_start"() <{level = 10 : i32, message = "bqd,bkd->bqk"}> : () -> ()
    %cst_222 = arith.constant dense<0.000000e+00> : vector<2x8x8xf32>
    %565 = tpu.matmul %563, %564, %cst_222 {dimension_numbers = #tpu.dot_dimension_numbers<[2], [2], [1], [1], [0, 0, 0, 1, 1, 1], [0], [0]>} : vector<2x8x8xbf16>, vector<2x8x8xbf16>, vector<2x8x8xf32> -> vector<2x8x8xf32>
    %cst_223 = arith.constant 0.000000e+00 : f32
    "tpu.trace_stop"() : () -> ()
    %566 = vector.broadcast %cst_223 : f32 to vector<2x8x8xf32>
    %567 = arith.cmpf oeq, %374, %566 : vector<2x8x8xf32>
    %cst_224 = arith.constant -1.000000e+04 : f32
    %568 = vector.broadcast %cst_224 : f32 to vector<2x8x8xf32>
    %569 = arith.select %567, %568, %565 : vector<2x8x8xi1>, vector<2x8x8xf32>
    %cst_225 = arith.constant dense<0xFF800000> : vector<2x8xf32>
    %570 = vector.multi_reduction <maximumf>, %569, %cst_225 [2] : vector<2x8x8xf32> to vector<2x8xf32>
    %571 = vector.shape_cast %570 : vector<2x8xf32> to vector<2x8x1xf32>
    %572 = vector.broadcast %571 : vector<2x8x1xf32> to vector<2x8x8xf32>
    %573 = arith.subf %569, %572 : vector<2x8x8xf32>
    %574 = math.exp %573 : vector<2x8x8xf32>
    %cst_226 = arith.constant dense<0.000000e+00> : vector<2x8xf32>
    %575 = vector.multi_reduction <add>, %574, %cst_226 [2] : vector<2x8x8xf32> to vector<2x8xf32>
    %576 = vector.shape_cast %575 : vector<2x8xf32> to vector<2x8x1xf32>
    %577 = tpu.reciprocal %576 {approx = true} : vector<2x8x1xf32> -> vector<2x8x1xf32>
    %578 = vector.broadcast %577 : vector<2x8x1xf32> to vector<2x8x8xf32>
    %579 = arith.mulf %574, %578 : vector<2x8x8xf32>
    %580 = arith.truncf %579 : vector<2x8x8xf32> to vector<2x8x8xbf16>
    %581 = vector.extract_strided_slice %522 {offsets = [0, 0, 16], sizes = [2, 8, 8], strides = [1, 1, 1]} : vector<2x8x32xbf16> to vector<2x8x8xbf16>
    "tpu.trace_start"() <{level = 10 : i32, message = "bqk,bkd->bqd"}> : () -> ()
    %cst_227 = arith.constant dense<0.000000e+00> : vector<2x8x8xf32>
    %582 = tpu.matmul %580, %581, %cst_227 {dimension_numbers = #tpu.dot_dimension_numbers<[2], [1], [1], [2], [0, 0, 0, 1, 1, 2], [0], [0]>} : vector<2x8x8xbf16>, vector<2x8x8xbf16>, vector<2x8x8xf32> -> vector<2x8x8xf32>
    "tpu.trace_stop"() : () -> ()
    %583 = vector.extract_strided_slice %518 {offsets = [0, 0, 24], sizes = [2, 8, 8], strides = [1, 1, 1]} : vector<2x8x32xbf16> to vector<2x8x8xbf16>
    %584 = vector.extract_strided_slice %520 {offsets = [0, 0, 24], sizes = [2, 8, 8], strides = [1, 1, 1]} : vector<2x8x32xbf16> to vector<2x8x8xbf16>
    "tpu.trace_start"() <{level = 10 : i32, message = "bqd,bkd->bqk"}> : () -> ()
    %cst_228 = arith.constant dense<0.000000e+00> : vector<2x8x8xf32>
    %585 = tpu.matmul %583, %584, %cst_228 {dimension_numbers = #tpu.dot_dimension_numbers<[2], [2], [1], [1], [0, 0, 0, 1, 1, 1], [0], [0]>} : vector<2x8x8xbf16>, vector<2x8x8xbf16>, vector<2x8x8xf32> -> vector<2x8x8xf32>
    %cst_229 = arith.constant 0.000000e+00 : f32
    "tpu.trace_stop"() : () -> ()
    %586 = vector.broadcast %cst_229 : f32 to vector<2x8x8xf32>
    %587 = arith.cmpf oeq, %374, %586 : vector<2x8x8xf32>
    %cst_230 = arith.constant -1.000000e+04 : f32
    %588 = vector.broadcast %cst_230 : f32 to vector<2x8x8xf32>
    %589 = arith.select %587, %588, %585 : vector<2x8x8xi1>, vector<2x8x8xf32>
    %cst_231 = arith.constant dense<0xFF800000> : vector<2x8xf32>
    %590 = vector.multi_reduction <maximumf>, %589, %cst_231 [2] : vector<2x8x8xf32> to vector<2x8xf32>
    %591 = vector.shape_cast %590 : vector<2x8xf32> to vector<2x8x1xf32>
    %592 = vector.broadcast %591 : vector<2x8x1xf32> to vector<2x8x8xf32>
    %593 = arith.subf %589, %592 : vector<2x8x8xf32>
    %594 = math.exp %593 : vector<2x8x8xf32>
    %cst_232 = arith.constant dense<0.000000e+00> : vector<2x8xf32>
    %595 = vector.multi_reduction <add>, %594, %cst_232 [2] : vector<2x8x8xf32> to vector<2x8xf32>
    %596 = vector.shape_cast %595 : vector<2x8xf32> to vector<2x8x1xf32>
    %597 = tpu.reciprocal %596 {approx = true} : vector<2x8x1xf32> -> vector<2x8x1xf32>
    %598 = vector.broadcast %597 : vector<2x8x1xf32> to vector<2x8x8xf32>
    %599 = arith.mulf %594, %598 : vector<2x8x8xf32>
    %600 = arith.truncf %599 : vector<2x8x8xf32> to vector<2x8x8xbf16>
    %601 = vector.extract_strided_slice %522 {offsets = [0, 0, 24], sizes = [2, 8, 8], strides = [1, 1, 1]} : vector<2x8x32xbf16> to vector<2x8x8xbf16>
    "tpu.trace_start"() <{level = 10 : i32, message = "bqk,bkd->bqd"}> : () -> ()
    %cst_233 = arith.constant dense<0.000000e+00> : vector<2x8x8xf32>
    %602 = tpu.matmul %600, %601, %cst_233 {dimension_numbers = #tpu.dot_dimension_numbers<[2], [1], [1], [2], [0, 0, 0, 1, 1, 2], [0], [0]>} : vector<2x8x8xbf16>, vector<2x8x8xbf16>, vector<2x8x8xf32> -> vector<2x8x8xf32>
    "tpu.trace_stop"() : () -> ()
    %603 = tpu.concatenate %542, %562, %582, %602 in 2 : vector<2x8x8xf32>, vector<2x8x8xf32>, vector<2x8x8xf32>, vector<2x8x8xf32> -> vector<2x8x32xf32>
    %604 = vector.shape_cast %603 : vector<2x8x32xf32> to vector<16x32xf32>
    %c0_234 = arith.constant 0 : index
    %c0_235 = arith.constant 0 : index
    %605 = vector.load %arg27[%c0_234, %c0_235] : memref<32x32xbf16, #tpu.memory_space<vmem>>, vector<32x32xbf16>
    %606 = arith.truncf %604 : vector<16x32xf32> to vector<16x32xbf16>
    %cst_236 = arith.constant dense<0.000000e+00> : vector<16x32xf32>
    %607 = tpu.matmul %606, %605, %cst_236 {dimension_numbers = #tpu.dot_dimension_numbers<[1], [0], [0], [1], [0, 0, 1, 1], [], []>} : vector<16x32xbf16>, vector<32x32xbf16>, vector<16x32xf32> -> vector<16x32xf32>
    %c0_237 = arith.constant 0 : index
    %c0_238 = arith.constant 0 : index
    %608 = vector.load %arg28[%c0_237, %c0_238] : memref<1x32xf32, #tpu.memory_space<vmem>>, vector<1x32xf32>
    %609 = vector.broadcast %608 : vector<1x32xf32> to vector<16x32xf32>
    %610 = arith.addf %607, %609 : vector<16x32xf32>
    %611 = arith.addf %610, %502 : vector<16x32xf32>
    %c0_239 = arith.constant 0 : index
    %c0_240 = arith.constant 0 : index
    %612 = vector.load %arg29[%c0_239, %c0_240] : memref<1x32xf32, #tpu.memory_space<vmem>>, vector<1x32xf32>
    %c0_241 = arith.constant 0 : index
    %c0_242 = arith.constant 0 : index
    %613 = vector.load %arg30[%c0_241, %c0_242] : memref<1x32xf32, #tpu.memory_space<vmem>>, vector<1x32xf32>
    %cst_243 = arith.constant dense<0.000000e+00> : vector<16xf32>
    %614 = vector.multi_reduction <add>, %611, %cst_243 [1] : vector<16x32xf32> to vector<16xf32>
    %615 = vector.shape_cast %614 : vector<16xf32> to vector<16x1xf32>
    %cst_244 = arith.constant 3.200000e+01 : f32
    %616 = vector.broadcast %cst_244 : f32 to vector<16x1xf32>
    %617 = arith.divf %615, %616 : vector<16x1xf32>
    %618 = vector.broadcast %617 : vector<16x1xf32> to vector<16x32xf32>
    %619 = arith.subf %611, %618 : vector<16x32xf32>
    %620 = arith.mulf %619, %619 : vector<16x32xf32>
    %cst_245 = arith.constant dense<0.000000e+00> : vector<16xf32>
    %621 = vector.multi_reduction <add>, %620, %cst_245 [1] : vector<16x32xf32> to vector<16xf32>
    %622 = vector.shape_cast %621 : vector<16xf32> to vector<16x1xf32>
    %cst_246 = arith.constant 3.200000e+01 : f32
    %623 = vector.broadcast %cst_246 : f32 to vector<16x1xf32>
    %624 = arith.divf %622, %623 : vector<16x1xf32>
    %625 = vector.broadcast %617 : vector<16x1xf32> to vector<16x32xf32>
    %626 = arith.subf %611, %625 : vector<16x32xf32>
    %cst_247 = arith.constant 9.99999974E-6 : f32
    %627 = vector.broadcast %cst_247 : f32 to vector<16x1xf32>
    %628 = arith.addf %624, %627 : vector<16x1xf32>
    %629 = math.rsqrt %628 : vector<16x1xf32>
    %630 = vector.broadcast %629 : vector<16x1xf32> to vector<16x32xf32>
    %631 = arith.mulf %626, %630 : vector<16x32xf32>
    %632 = vector.broadcast %612 : vector<1x32xf32> to vector<16x32xf32>
    %633 = arith.mulf %631, %632 : vector<16x32xf32>
    %634 = vector.broadcast %613 : vector<1x32xf32> to vector<16x32xf32>
    %635 = arith.addf %633, %634 : vector<16x32xf32>
    %c0_248 = arith.constant 0 : index
    %c0_249 = arith.constant 0 : index
    %636 = vector.load %arg31[%c0_248, %c0_249] : memref<32x64xbf16, #tpu.memory_space<vmem>>, vector<32x64xbf16>
    %637 = arith.truncf %635 : vector<16x32xf32> to vector<16x32xbf16>
    %cst_250 = arith.constant dense<0.000000e+00> : vector<16x64xf32>
    %638 = tpu.matmul %637, %636, %cst_250 {dimension_numbers = #tpu.dot_dimension_numbers<[1], [0], [0], [1], [0, 0, 1, 1], [], []>} : vector<16x32xbf16>, vector<32x64xbf16>, vector<16x64xf32> -> vector<16x64xf32>
    %c0_251 = arith.constant 0 : index
    %c0_252 = arith.constant 0 : index
    %639 = vector.load %arg32[%c0_251, %c0_252] : memref<1x64xf32, #tpu.memory_space<vmem>>, vector<1x64xf32>
    %640 = vector.broadcast %639 : vector<1x64xf32> to vector<16x64xf32>
    %641 = arith.addf %638, %640 : vector<16x64xf32>
    %cst_253 = arith.constant 0.000000e+00 : f32
    %642 = vector.broadcast %cst_253 : f32 to vector<16x64xf32>
    %643 = arith.maximumf %641, %642 : vector<16x64xf32>
    %c0_254 = arith.constant 0 : index
    %c0_255 = arith.constant 0 : index
    %644 = vector.load %arg33[%c0_254, %c0_255] : memref<64x32xbf16, #tpu.memory_space<vmem>>, vector<64x32xbf16>
    %645 = arith.truncf %643 : vector<16x64xf32> to vector<16x64xbf16>
    %cst_256 = arith.constant dense<0.000000e+00> : vector<16x32xf32>
    %646 = tpu.matmul %645, %644, %cst_256 {dimension_numbers = #tpu.dot_dimension_numbers<[1], [0], [0], [1], [0, 0, 1, 1], [], []>} : vector<16x64xbf16>, vector<64x32xbf16>, vector<16x32xf32> -> vector<16x32xf32>
    %c0_257 = arith.constant 0 : index
    %c0_258 = arith.constant 0 : index
    %647 = vector.load %arg34[%c0_257, %c0_258] : memref<1x32xf32, #tpu.memory_space<vmem>>, vector<1x32xf32>
    %648 = vector.broadcast %647 : vector<1x32xf32> to vector<16x32xf32>
    %649 = arith.addf %646, %648 : vector<16x32xf32>
    %650 = arith.addf %635, %649 : vector<16x32xf32>
    %c0_259 = arith.constant 0 : index
    %c0_260 = arith.constant 0 : index
    %651 = vector.load %arg35[%c0_259, %c0_260] : memref<1x32xf32, #tpu.memory_space<vmem>>, vector<1x32xf32>
    %c0_261 = arith.constant 0 : index
    %c0_262 = arith.constant 0 : index
    %652 = vector.load %arg36[%c0_261, %c0_262] : memref<1x32xf32, #tpu.memory_space<vmem>>, vector<1x32xf32>
    %cst_263 = arith.constant dense<0.000000e+00> : vector<16xf32>
    %653 = vector.multi_reduction <add>, %650, %cst_263 [1] : vector<16x32xf32> to vector<16xf32>
    %654 = vector.shape_cast %653 : vector<16xf32> to vector<16x1xf32>
    %cst_264 = arith.constant 3.200000e+01 : f32
    %655 = vector.broadcast %cst_264 : f32 to vector<16x1xf32>
    %656 = arith.divf %654, %655 : vector<16x1xf32>
    %657 = vector.broadcast %656 : vector<16x1xf32> to vector<16x32xf32>
    %658 = arith.subf %650, %657 : vector<16x32xf32>
    %659 = arith.mulf %658, %658 : vector<16x32xf32>
    %cst_265 = arith.constant dense<0.000000e+00> : vector<16xf32>
    %660 = vector.multi_reduction <add>, %659, %cst_265 [1] : vector<16x32xf32> to vector<16xf32>
    %661 = vector.shape_cast %660 : vector<16xf32> to vector<16x1xf32>
    %cst_266 = arith.constant 3.200000e+01 : f32
    %662 = vector.broadcast %cst_266 : f32 to vector<16x1xf32>
    %663 = arith.divf %661, %662 : vector<16x1xf32>
    %664 = vector.broadcast %656 : vector<16x1xf32> to vector<16x32xf32>
    %665 = arith.subf %650, %664 : vector<16x32xf32>
    %cst_267 = arith.constant 9.99999974E-6 : f32
    %666 = vector.broadcast %cst_267 : f32 to vector<16x1xf32>
    %667 = arith.addf %663, %666 : vector<16x1xf32>
    %668 = math.rsqrt %667 : vector<16x1xf32>
    %669 = vector.broadcast %668 : vector<16x1xf32> to vector<16x32xf32>
    %670 = arith.mulf %665, %669 : vector<16x32xf32>
    %671 = vector.broadcast %651 : vector<1x32xf32> to vector<16x32xf32>
    %672 = arith.mulf %670, %671 : vector<16x32xf32>
    %673 = vector.broadcast %652 : vector<1x32xf32> to vector<16x32xf32>
    %674 = arith.addf %672, %673 : vector<16x32xf32>
    %c0_268 = arith.constant 0 : index
    %c0_269 = arith.constant 0 : index
    %675 = vector.load %arg37[%c0_268, %c0_269] : memref<32x256xbf16, #tpu.memory_space<vmem>>, vector<32x256xbf16>
    %676 = arith.truncf %674 : vector<16x32xf32> to vector<16x32xbf16>
    %cst_270 = arith.constant dense<0.000000e+00> : vector<16x256xf32>
    %677 = tpu.matmul %676, %675, %cst_270 {dimension_numbers = #tpu.dot_dimension_numbers<[1], [0], [0], [1], [0, 0, 1, 1], [], []>} : vector<16x32xbf16>, vector<32x256xbf16>, vector<16x256xf32> -> vector<16x256xf32>
    %c0_271 = arith.constant 0 : index
    %c0_272 = arith.constant 0 : index
    %678 = vector.load %arg38[%c0_271, %c0_272] : memref<1x256xf32, #tpu.memory_space<vmem>>, vector<1x256xf32>
    %679 = vector.broadcast %678 : vector<1x256xf32> to vector<16x256xf32>
    %680 = arith.addf %677, %679 : vector<16x256xf32>
    %c0_273 = arith.constant 0 : index
    %c0_274 = arith.constant 0 : index
    %681 = vector.load %arg39[%c0_273, %c0_274] : memref<16x256xf32, #tpu.memory_space<vmem>>, vector<16x256xf32>
    tpu.vector_store %arg39[%c0_273, %c0_274], %680 {strides = array<i32>} : memref<16x256xf32, #tpu.memory_space<vmem>>, vector<16x256xf32>,
    %682 = vector.shape_cast %680 : vector<16x256xf32> to vector<2x8x256xf32>
    %683 = tpu.iota {dimensions = array<i32: 2>} : vector<2x8x256xi32>
    %cst_275 = arith.constant dense<0xFF800000> : vector<2x8xf32>
    %684 = vector.multi_reduction <maximumf>, %682, %cst_275 [2] : vector<2x8x256xf32> to vector<2x8xf32>
    %685 = vector.shape_cast %684 : vector<2x8xf32> to vector<2x8x1xf32>
    %686 = vector.broadcast %685 : vector<2x8x1xf32> to vector<2x8x256xf32>
    %687 = arith.cmpf oeq, %682, %686 : vector<2x8x256xf32>
    %c256_i32 = arith.constant 256 : i32
    %688 = vector.broadcast %c256_i32 : i32 to vector<2x8x256xi32>
    %689 = arith.select %687, %683, %688 : vector<2x8x256xi1>, vector<2x8x256xi32>
    %cst_276 = arith.constant dense<2147483647> : vector<2x8xi32>
    %690 = vector.multi_reduction <minsi>, %689, %cst_276 [2] : vector<2x8x256xi32> to vector<2x8xi32>
    %c0_277 = arith.constant 0 : index
    %c0_278 = arith.constant 0 : index
    %691 = vector.load %arg40[%c0_277, %c0_278] : memref<2x8xi32, #tpu.memory_space<vmem>>, vector<2x8xi32>
    tpu.vector_store %arg40[%c0_277, %c0_278], %690 {strides = array<i32>} : memref<2x8xi32, #tpu.memory_space<vmem>>, vector<2x8xi32>,
    return
  }
}

</mosaic_0001>

<llo_original>
// kernel: transformer_forward.1
$region0: #{transformer_forward.1}
  #allocation0 [shape = 'u32[]', space=smem, size = 0x4, offset = 0x4, fixed_abs, tag = 'smem constant byte address 0x4 - core index']
  #allocation1 [shape = 'u32[72,128]{1,0:T(1,128)}', space=vmem, size = 0x9000, scoped, tag = 'internal scratch']
  %s0 = inlined_call_operand.smem [shape: u32[41], index: -1, kind: input, shape index: {}]
  %s1 = sld [smem:[%s0]]
  %s2 = scalar_lea.smem %s0, 1
  %s3 = sld [smem:[%s2]]
  %s4 = scalar_lea.smem %s0, 2
  %s5 = sld [smem:[%s4]]
  %s6 = scalar_lea.smem %s0, 3
  %s7 = sld [smem:[%s6]]
  %s8 = scalar_lea.smem %s0, 4
  %s9 = sld [smem:[%s8]]
  %s10 = scalar_lea.smem %s0, 5
  %s11 = sld [smem:[%s10]]
  %s12 = scalar_lea.smem %s0, 6
  %s13 = sld [smem:[%s12]]
  %s14 = scalar_lea.smem %s0, 7
  %s15 = sld [smem:[%s14]]
  %s16 = scalar_lea.smem %s0, 8
  %s17 = sld [smem:[%s16]]
  %s18 = scalar_lea.smem %s0, 9
  %s19 = sld [smem:[%s18]]
  %s20 = scalar_lea.smem %s0, 10
  %s21 = sld [smem:[%s20]]
  %s22 = scalar_lea.smem %s0, 11
  %s23 = sld [smem:[%s22]]
  %s24 = scalar_lea.smem %s0, 12
  %s25 = sld [smem:[%s24]]
  %s26 = scalar_lea.smem %s0, 13
  %s27 = sld [smem:[%s26]]
  %s28 = scalar_lea.smem %s0, 14
  %s29 = sld [smem:[%s28]]
  %s30 = scalar_lea.smem %s0, 15
  %s31 = sld [smem:[%s30]]
  %s32 = scalar_lea.smem %s0, 16
  %s33 = sld [smem:[%s32]]
  %s34 = scalar_lea.smem %s0, 17
  %s35 = sld [smem:[%s34]]
  %s36 = scalar_lea.smem %s0, 18
  %s37 = sld [smem:[%s36]]
  %s38 = scalar_lea.smem %s0, 19
  %s39 = sld [smem:[%s38]]
  %s40 = scalar_lea.smem %s0, 20
  %s41 = sld [smem:[%s40]]
  %s42 = scalar_lea.smem %s0, 21
  %s43 = sld [smem:[%s42]]
  %s44 = scalar_lea.smem %s0, 22
  %s45 = sld [smem:[%s44]]
  %s46 = scalar_lea.smem %s0, 23
  %s47 = sld [smem:[%s46]]
  %s48 = scalar_lea.smem %s0, 24
  %s49 = sld [smem:[%s48]]
  %s50 = scalar_lea.smem %s0, 25
  %s51 = sld [smem:[%s50]]
  %s52 = scalar_lea.smem %s0, 26
  %s53 = sld [smem:[%s52]]
  %s54 = scalar_lea.smem %s0, 27
  %s55 = sld [smem:[%s54]]
  %s56 = scalar_lea.smem %s0, 28
  %s57 = sld [smem:[%s56]]
  %s58 = scalar_lea.smem %s0, 29
  %s59 = sld [smem:[%s58]]
  %s60 = scalar_lea.smem %s0, 30
  %s61 = sld [smem:[%s60]]
  %s62 = scalar_lea.smem %s0, 31
  %s63 = sld [smem:[%s62]]
  %s64 = scalar_lea.smem %s0, 32
  %s65 = sld [smem:[%s64]]
  %s66 = scalar_lea.smem %s0, 33
  %s67 = sld [smem:[%s66]]
  %s68 = scalar_lea.smem %s0, 34
  %s69 = sld [smem:[%s68]]
  %s70 = scalar_lea.smem %s0, 35
  %s71 = sld [smem:[%s70]]
  %s72 = scalar_lea.smem %s0, 36
  %s73 = sld [smem:[%s72]]
  %s74 = scalar_lea.smem %s0, 37
  %s75 = sld [smem:[%s74]]
  %s76 = scalar_lea.smem %s0, 38
  %s77 = sld [smem:[%s76]]
  %s78 = scalar_lea.smem %s0, 39
  %s79 = sld [smem:[%s78]]
  %s80 = scalar_lea.smem %s0, 40
  %s81 = sld [smem:[%s80]]
  %82 = xla_tuple %s79, %s81
  %s83 = sld [smem:[#allocation0]]
  $region174: #{transformer_forward.1} parent=0
    _
  %s85 = ssub.s32 1, %s83
  %s86 = scalar_select 0, %s85, %s83
  $region1: #{transformer_forward.1} parent=0
    #allocation2 [shape = 'u8[16384]{0}', space=vmem, size = 0x4000, scoped, tag = 'output window, operand 0, single buffered']
    #allocation3 [shape = 's32[1]{0}', space=sflag, size = 0x4, scoped, tag = 'scoped memory for transformer_forward.1']
    #allocation4 [shape = 'u8[1024]{0}', space=vmem, size = 0x400, scoped, tag = 'output window, operand 1, single buffered']
    #allocation5 [shape = 's32[1]{0}', space=sflag, size = 0x4, scoped, tag = 'scoped memory for transformer_forward.1']
    %87 = vsyncpa [#allocation3], 0
    %88 = vsyncpa [#allocation5], 0
    // Predicated region
    $region2: #{transformer_forward.1} parent=1 // pred_check
      _
    $region3: #{transformer_forward.1} parent=1 // pred_check_branch
      %90 = sbr.rel (0) target = $region5
    $region4: #{transformer_forward.1} parent=1 // pred_region
      _
    $region5: #{transformer_forward.1} parent=1 // pred_fallthru
      _
    // Predicated region
    $region6: #{transformer_forward.1} parent=1 // pred_check
      _
    $region7: #{transformer_forward.1} parent=1 // pred_check_branch
      %92 = sbr.rel (0) target = $region9
    $region8: #{transformer_forward.1} parent=1 // pred_region
      _
    $region9: #{transformer_forward.1} parent=1 // pred_fallthru
      _
    // Predicated region
    $region10: #{transformer_forward.1} parent=1 // pred_check
      _
    $region11: #{transformer_forward.1} parent=1 // pred_check_branch
      %94 = sbr.rel (0) target = $region13
    $region12: #{transformer_forward.1} parent=1 // pred_region
      _
    $region13: #{transformer_forward.1} parent=1 // pred_fallthru
      _
    // Predicated region
    $region14: #{transformer_forward.1} parent=1 // pred_check
      _
    $region15: #{transformer_forward.1} parent=1 // pred_check_branch
      %96 = sbr.rel (0) target = $region17
    $region16: #{transformer_forward.1} parent=1 // pred_region
      _
    $region17: #{transformer_forward.1} parent=1 // pred_fallthru
      _
    // Predicated region
    $region18: #{transformer_forward.1} parent=1 // pred_check
      _
    $region19: #{transformer_forward.1} parent=1 // pred_check_branch
      %98 = sbr.rel (0) target = $region21
    $region20: #{transformer_forward.1} parent=1 // pred_region
      _
    $region21: #{transformer_forward.1} parent=1 // pred_fallthru
      _
    // Predicated region
    $region22: #{transformer_forward.1} parent=1 // pred_check
      _
    $region23: #{transformer_forward.1} parent=1 // pred_check_branch
      %100 = sbr.rel (0) target = $region25
    $region24: #{transformer_forward.1} parent=1 // pred_region
      _
    $region25: #{transformer_forward.1} parent=1 // pred_fallthru
      _
    // Predicated region
    $region26: #{transformer_forward.1} parent=1 // pred_check
      _
    $region27: #{transformer_forward.1} parent=1 // pred_check_branch
      %102 = sbr.rel (0) target = $region29
    $region28: #{transformer_forward.1} parent=1 // pred_region
      _
    $region29: #{transformer_forward.1} parent=1 // pred_fallthru
      _
    // Predicated region
    $region30: #{transformer_forward.1} parent=1 // pred_check
      _
    $region31: #{transformer_forward.1} parent=1 // pred_check_branch
      %104 = sbr.rel (0) target = $region33
    $region32: #{transformer_forward.1} parent=1 // pred_region
      _
    $region33: #{transformer_forward.1} parent=1 // pred_fallthru
      _
    // Predicated region
    $region34: #{transformer_forward.1} parent=1 // pred_check
      _
    $region35: #{transformer_forward.1} parent=1 // pred_check_branch
      %106 = sbr.rel (0) target = $region37
    $region36: #{transformer_forward.1} parent=1 // pred_region
      _
    $region37: #{transformer_forward.1} parent=1 // pred_fallthru
      _
    // Predicated region
    $region38: #{transformer_forward.1} parent=1 // pred_check
      _
    $region39: #{transformer_forward.1} parent=1 // pred_check_branch
      %108 = sbr.rel (0) target = $region41
    $region40: #{transformer_forward.1} parent=1 // pred_region
      _
    $region41: #{transformer_forward.1} parent=1 // pred_fallthru
      _
    // Predicated region
    $region42: #{transformer_forward.1} parent=1 // pred_check
      _
    $region43: #{transformer_forward.1} parent=1 // pred_check_branch
      %110 = sbr.rel (0) target = $region45
    $region44: #{transformer_forward.1} parent=1 // pred_region
      _
    $region45: #{transformer_forward.1} parent=1 // pred_fallthru
      _
    // Predicated region
    $region46: #{transformer_forward.1} parent=1 // pred_check
      _
    $region47: #{transformer_forward.1} parent=1 // pred_check_branch
      %112 = sbr.rel (0) target = $region49
    $region48: #{transformer_forward.1} parent=1 // pred_region
      _
    $region49: #{transformer_forward.1} parent=1 // pred_fallthru
      _
    // Predicated region
    $region50: #{transformer_forward.1} parent=1 // pred_check
      _
    $region51: #{transformer_forward.1} parent=1 // pred_check_branch
      %114 = sbr.rel (0) target = $region53
    $region52: #{transformer_forward.1} parent=1 // pred_region
      _
    $region53: #{transformer_forward.1} parent=1 // pred_fallthru
      _
    // Predicated region
    $region54: #{transformer_forward.1} parent=1 // pred_check
      _
    $region55: #{transformer_forward.1} parent=1 // pred_check_branch
      %116 = sbr.rel (0) target = $region57
    $region56: #{transformer_forward.1} parent=1 // pred_region
      _
    $region57: #{transformer_forward.1} parent=1 // pred_fallthru
      _
    // Predicated region
    $region58: #{transformer_forward.1} parent=1 // pred_check
      _
    $region59: #{transformer_forward.1} parent=1 // pred_check_branch
      %118 = sbr.rel (0) target = $region61
    $region60: #{transformer_forward.1} parent=1 // pred_region
      _
    $region61: #{transformer_forward.1} parent=1 // pred_fallthru
      _
    // Predicated region
    $region62: #{transformer_forward.1} parent=1 // pred_check
      _
    $region63: #{transformer_forward.1} parent=1 // pred_check_branch
      %120 = sbr.rel (0) target = $region65
    $region64: #{transformer_forward.1} parent=1 // pred_region
      _
    $region65: #{transformer_forward.1} parent=1 // pred_fallthru
      _
    // Predicated region
    $region66: #{transformer_forward.1} parent=1 // pred_check
      _
    $region67: #{transformer_forward.1} parent=1 // pred_check_branch
      %122 = sbr.rel (0) target = $region69
    $region68: #{transformer_forward.1} parent=1 // pred_region
      _
    $region69: #{transformer_forward.1} parent=1 // pred_fallthru
      _
    // Predicated region
    $region70: #{transformer_forward.1} parent=1 // pred_check
      _
    $region71: #{transformer_forward.1} parent=1 // pred_check_branch
      %124 = sbr.rel (0) target = $region73
    $region72: #{transformer_forward.1} parent=1 // pred_region
      _
    $region73: #{transformer_forward.1} parent=1 // pred_fallthru
      _
    // Predicated region
    $region74: #{transformer_forward.1} parent=1 // pred_check
      _
    $region75: #{transformer_forward.1} parent=1 // pred_check_branch
      %126 = sbr.rel (0) target = $region77
    $region76: #{transformer_forward.1} parent=1 // pred_region
      _
    $region77: #{transformer_forward.1} parent=1 // pred_fallthru
      _
    // Predicated region
    $region78: #{transformer_forward.1} parent=1 // pred_check
      _
    $region79: #{transformer_forward.1} parent=1 // pred_check_branch
      %128 = sbr.rel (0) target = $region81
    $region80: #{transformer_forward.1} parent=1 // pred_region
      _
    $region81: #{transformer_forward.1} parent=1 // pred_fallthru
      _
    // Predicated region
    $region82: #{transformer_forward.1} parent=1 // pred_check
      _
    $region83: #{transformer_forward.1} parent=1 // pred_check_branch
      %130 = sbr.rel (0) target = $region85
    $region84: #{transformer_forward.1} parent=1 // pred_region
      _
    $region85: #{transformer_forward.1} parent=1 // pred_fallthru
      _
    // Predicated region
    $region86: #{transformer_forward.1} parent=1 // pred_check
      _
    $region87: #{transformer_forward.1} parent=1 // pred_check_branch
      %132 = sbr.rel (0) target = $region89
    $region88: #{transformer_forward.1} parent=1 // pred_region
      _
    $region89: #{transformer_forward.1} parent=1 // pred_fallthru
      _
    // Predicated region
    $region90: #{transformer_forward.1} parent=1 // pred_check
      _
    $region91: #{transformer_forward.1} parent=1 // pred_check_branch
      %134 = sbr.rel (0) target = $region93
    $region92: #{transformer_forward.1} parent=1 // pred_region
      _
    $region93: #{transformer_forward.1} parent=1 // pred_fallthru
      _
    // Predicated region
    $region94: #{transformer_forward.1} parent=1 // pred_check
      _
    $region95: #{transformer_forward.1} parent=1 // pred_check_branch
      %136 = sbr.rel (0) target = $region97
    $region96: #{transformer_forward.1} parent=1 // pred_region
      _
    $region97: #{transformer_forward.1} parent=1 // pred_fallthru
      _
    // Predicated region
    $region98: #{transformer_forward.1} parent=1 // pred_check
      _
    $region99: #{transformer_forward.1} parent=1 // pred_check_branch
      %138 = sbr.rel (0) target = $region101
    $region100: #{transformer_forward.1} parent=1 // pred_region
      _
    $region101: #{transformer_forward.1} parent=1 // pred_fallthru
      _
    // Predicated region
    $region102: #{transformer_forward.1} parent=1 // pred_check
      _
    $region103: #{transformer_forward.1} parent=1 // pred_check_branch
      %140 = sbr.rel (0) target = $region105
    $region104: #{transformer_forward.1} parent=1 // pred_region
      _
    $region105: #{transformer_forward.1} parent=1 // pred_fallthru
      _
    // Predicated region
    $region106: #{transformer_forward.1} parent=1 // pred_check
      _
    $region107: #{transformer_forward.1} parent=1 // pred_check_branch
      %142 = sbr.rel (0) target = $region109
    $region108: #{transformer_forward.1} parent=1 // pred_region
      _
    $region109: #{transformer_forward.1} parent=1 // pred_fallthru
      _
    // Predicated region
    $region110: #{transformer_forward.1} parent=1 // pred_check
      _
    $region111: #{transformer_forward.1} parent=1 // pred_check_branch
      %144 = sbr.rel (0) target = $region113
    $region112: #{transformer_forward.1} parent=1 // pred_region
      _
    $region113: #{transformer_forward.1} parent=1 // pred_fallthru
      _
    // Predicated region
    $region114: #{transformer_forward.1} parent=1 // pred_check
      _
    $region115: #{transformer_forward.1} parent=1 // pred_check_branch
      %146 = sbr.rel (0) target = $region117
    $region116: #{transformer_forward.1} parent=1 // pred_region
      _
    $region117: #{transformer_forward.1} parent=1 // pred_fallthru
      _
    // Predicated region
    $region118: #{transformer_forward.1} parent=1 // pred_check
      _
    $region119: #{transformer_forward.1} parent=1 // pred_check_branch
      %148 = sbr.rel (0) target = $region121
    $region120: #{transformer_forward.1} parent=1 // pred_region
      _
    $region121: #{transformer_forward.1} parent=1 // pred_fallthru
      _
    // Predicated region
    $region122: #{transformer_forward.1} parent=1 // pred_check
      _
    $region123: #{transformer_forward.1} parent=1 // pred_check_branch
      %150 = sbr.rel (0) target = $region125
    $region124: #{transformer_forward.1} parent=1 // pred_region
      _
    $region125: #{transformer_forward.1} parent=1 // pred_fallthru
      _
    // Predicated region
    $region126: #{transformer_forward.1} parent=1 // pred_check
      _
    $region127: #{transformer_forward.1} parent=1 // pred_check_branch
      %152 = sbr.rel (0) target = $region129
    $region128: #{transformer_forward.1} parent=1 // pred_region
      _
    $region129: #{transformer_forward.1} parent=1 // pred_fallthru
      _
    // Predicated region
    $region130: #{transformer_forward.1} parent=1 // pred_check
      _
    $region131: #{transformer_forward.1} parent=1 // pred_check_branch
      %154 = sbr.rel (0) target = $region133
    $region132: #{transformer_forward.1} parent=1 // pred_region
      _
    $region133: #{transformer_forward.1} parent=1 // pred_fallthru
      _
    // Predicated region
    $region134: #{transformer_forward.1} parent=1 // pred_check
      _
    $region135: #{transformer_forward.1} parent=1 // pred_check_branch
      %156 = sbr.rel (0) target = $region137
    $region136: #{transformer_forward.1} parent=1 // pred_region
      _
    $region137: #{transformer_forward.1} parent=1 // pred_fallthru
      _
    // Predicated region
    $region138: #{transformer_forward.1} parent=1 // pred_check
      _
    $region139: #{transformer_forward.1} parent=1 // pred_check_branch
      %158 = sbr.rel (0) target = $region141
    $region140: #{transformer_forward.1} parent=1 // pred_region
      _
    $region141: #{transformer_forward.1} parent=1 // pred_fallthru
      _
    // Predicated region
    $region142: #{transformer_forward.1} parent=1 // pred_check
      _
    $region143: #{transformer_forward.1} parent=1 // pred_check_branch
      %160 = sbr.rel (0) target = $region145
    $region144: #{transformer_forward.1} parent=1 // pred_region
      _
    $region145: #{transformer_forward.1} parent=1 // pred_fallthru
      _
    // Predicated region
    $region146: #{transformer_forward.1} parent=1 // pred_check
      _
    $region147: #{transformer_forward.1} parent=1 // pred_check_branch
      %162 = sbr.rel (0) target = $region149
    $region148: #{transformer_forward.1} parent=1 // pred_region
      _
    $region149: #{transformer_forward.1} parent=1 // pred_fallthru
      _
    // Predicated region
    $region150: #{transformer_forward.1} parent=1 // pred_check
      _
    $region151: #{transformer_forward.1} parent=1 // pred_check_branch
      %164 = sbr.rel (0) target = $region153
    $region152: #{transformer_forward.1} parent=1 // pred_region
      _
    $region153: #{transformer_forward.1} parent=1 // pred_fallthru
      _
    // Predicated region
    $region154: #{transformer_forward.1} parent=1 // pred_check
      _
    $region155: #{transformer_forward.1} parent=1 // pred_check_branch
      %166 = sbr.rel (0) target = $region157
    $region156: #{transformer_forward.1} parent=1 // pred_region
      _
    $region157: #{transformer_forward.1} parent=1 // pred_fallthru
      _
    %v168 = vld [vmem:[%s5] sm:$0x3]
    %v169 = vld [vmem:[%s7] sm:$0x3]
    %v170 = vld [vmem:[%s9] sm:$0xff]
    %v171 = vld [vmem:[%s1] sm:$0xff]
    %v172 = vld [vmem:[%s1 + $0x8] sm:$0xff]
    %v174 = vrot.slane %v168, 1
    %v175 = vperm.slane %v168, 0
    %v176 = vperm.slane %v174, 0
    %v179 = vld [vmem:[%s11] sm:$0xf]
    %v180 = vld [vmem:[%s11 + $0x4] sm:$0xf]
    %v181 = vld [vmem:[%s11 + $0x8] sm:$0xf]
    %v182 = vld [vmem:[%s11 + $0xc] sm:$0xf]
    %v183 = vpack.c.bf16 %v172, %v171
    %v184 = vld [vmem:[%s13] sm:$0x1]
    %v186 = vperm.slane %v184, 0
    %v192 = vunpack.c.l.b16 %v179
    %v193 = vunpack.c.l.b16 %v180
    %v194 = vunpack.c.l.b16 %v181
    %v195 = vunpack.c.l.b16 %v182
    %v196 = vpack.c.b16 %v193, %v192
    %v197 = vpack.c.b16 %v195, %v194
    %vm200 = vcmask 261120
    %v202 = vsel %vm200, %v183, 0
    %204 = vmatpush.bf16.msra.mxu0 0
    %205 = vmatpush.bf16.msra.mxu0 0
    %206 = vmatpush.bf16.msra.mxu0 0
    %207 = vmatpush.bf16.msra.mxu0 0
    %208 = vmatpush.bf16.msra.mxu0 0
    %209 = vmatpush.bf16.msra.mxu0 0
    %210 = vmatpush.bf16.msra.mxu0 %v197
    %211 = vmatpush.bf16.msra.mxu0 %v196
    %212 = vmatmul.bf16.gmra.mxu0 %v202
    %v213 = vpop.f32.mrf.mxu0
    %v214 = vadd.f32 %v186, %v213
    %v215 = vpop.f32.mrf.mxu0
    %v216 = vadd.f32 %v186, %v215
    %217 = vdwg.mxu0
    %v218 = vpack.c.bf16 %v214, %v214
    %v219 = vpack.c.bf16 %v216, %v216
    %v221 = vunpack.c.l.b16 %v218
    %v222 = vpack.c.b16 %v221, %v221
    %223 = vrot.lane.b32.xlu0 %v222, 96
    %v224 = vpop.permute.xlu0 %223
    %vm225 = vcmask 64512
    %v227 = vsel %vm225, %v218, 0
    %v230 = vsel %vm225, %v224, 0
    %232 = vmatpush.bf16.xpose.msra.mxu0 0
    %233 = vmatpush.bf16.xpose.msra.mxu0 0
    %234 = vmatpush.bf16.xpose.msra.mxu0 0
    %235 = vmatpush.bf16.xpose.msra.mxu0 0
    %236 = vmatpush.bf16.xpose.msra.mxu0 0
    %237 = vmatpush.bf16.xpose.msra.mxu0 0
    %238 = vmatpush.bf16.xpose.msra.mxu0 0
    %239 = vmatpush.bf16.xpose.msra.mxu0 %v230
    %240 = vmatmul.bf16.gmra.mxu0 %v227
    %v241 = vpop.f32.mrf.mxu0
    %v242 = vadd.f32 0.0, %v241
    %v243 = vpop.f32.mrf.mxu0
    %244 = vdwg.mxu0
    %v246 = vunpack.c.l.b16 %v219
    %v247 = vpack.c.b16 %v246, %v246
    %248 = vrot.lane.b32.xlu0 %v247, 96
    %v249 = vpop.permute.xlu0 %248
    %v251 = vsel %vm225, %v219, 0
    %v254 = vsel %vm225, %v249, 0
    %256 = vmatpush.bf16.xpose.msra.mxu0 0
    %257 = vmatpush.bf16.xpose.msra.mxu0 0
    %258 = vmatpush.bf16.xpose.msra.mxu0 0
    %259 = vmatpush.bf16.xpose.msra.mxu0 0
    %260 = vmatpush.bf16.xpose.msra.mxu0 0
    %261 = vmatpush.bf16.xpose.msra.mxu0 0
    %262 = vmatpush.bf16.xpose.msra.mxu0 0
    %263 = vmatpush.bf16.xpose.msra.mxu0 %v254
    %264 = vmatmul.bf16.gmra.mxu0 %v251
    %v265 = vpop.f32.mrf.mxu0
    %v266 = vadd.f32 0.0, %v265
    %v267 = vpop.f32.mrf.mxu0
    %268 = vdwg.mxu0
    %vm269 = vcmp.eq.f32.partialorder %v175, 0.0
    %vm270 = vcmp.eq.f32.partialorder %v176, 0.0
    %v271 = vsel %vm269, -10000.0, %v242
    %v272 = vsel %vm270, -10000.0, %v266
    %v273 = vsel %vm225, %v271, -inf
    %274 = vmax.xlane.f32.xlu0 %v273
    %v275 = vpop.xlane.xlu0 %274
    %v276 = vsel %vm225, %v272, -inf
    %277 = vmax.xlane.f32.xlu0 %v276
    %v278 = vpop.xlane.xlu0 %277
    %v279 = vsub.f32 %v271, %v275
    %v280 = vsub.f32 %v272, %v278
    %v281 = vmul.f32 %v279, 1.442695
    %v282 = vpow.pop %v281
    %v283 = vmul.f32 %v280, 1.442695
    %v284 = vpow.pop %v283
    %v285 = vsel %vm225, %v282, 0.0
    %286 = vadd.xlane.f32.xlu0 %v285
    %v287 = vpop.xlane.xlu0 %286
    %v288 = vsel %vm225, %v284, 0.0
    %289 = vadd.xlane.f32.xlu0 %v288
    %v290 = vpop.xlane.xlu0 %289
    %v291 = vrcp.pop %v287
    %v292 = vrcp.pop %v290
    %v293 = vmul.f32 %v282, %v291
    %v294 = vmul.f32 %v284, %v292
    %v295 = vpack.c.bf16 %v293, %v293
    %v296 = vpack.c.bf16 %v294, %v294
    %297 = vrot.lane.b32.xlu0 %v222, 64
    %v298 = vpop.permute.xlu0 %297
    %v300 = vsel %vm225, %v295, 0
    %vm302 = vcmask 1043456
    %v304 = vsel %vm302, %v298, 0
    %306 = vmatpush.bf16.msra.mxu0 0
    %307 = vmatpush.bf16.msra.mxu0 0
    %308 = vmatpush.bf16.msra.mxu0 0
    %309 = vmatpush.bf16.msra.mxu0 0
    %310 = vmatpush.bf16.msra.mxu0 0
    %311 = vmatpush.bf16.msra.mxu0 0
    %312 = vmatpush.bf16.msra.mxu0 0
    %313 = vmatpush.bf16.msra.mxu0 %v304
    %314 = vmatmul.bf16.gmra.mxu0 %v300
    %v315 = vpop.f32.mrf.mxu0
    %v316 = vadd.f32 0.0, %v315
    %v317 = vpop.f32.mrf.mxu0
    %318 = vdwg.mxu0
    %319 = vrot.lane.b32.xlu0 %v247, 64
    %v320 = vpop.permute.xlu0 %319
    %v322 = vsel %vm225, %v296, 0
    %v325 = vsel %vm302, %v320, 0
    %327 = vmatpush.bf16.msra.mxu0 0
    %328 = vmatpush.bf16.msra.mxu0 0
    %329 = vmatpush.bf16.msra.mxu0 0
    %330 = vmatpush.bf16.msra.mxu0 0
    %331 = vmatpush.bf16.msra.mxu0 0
    %332 = vmatpush.bf16.msra.mxu0 0
    %333 = vmatpush.bf16.msra.mxu0 0
    %334 = vmatpush.bf16.msra.mxu0 %v325
    %335 = vmatmul.bf16.gmra.mxu0 %v322
    %v336 = vpop.f32.mrf.mxu0
    %v337 = vadd.f32 0.0, %v336
    %v338 = vpop.f32.mrf.mxu0
    %339 = vdwg.mxu0
    %340 = vrot.lane.b32.xlu0 %v222, 120
    %v341 = vpop.permute.xlu0 %340
    %342 = vrot.lane.b32.xlu0 %v222, 88
    %v343 = vpop.permute.xlu0 %342
    %v345 = vsel %vm225, %v341, 0
    %v348 = vsel %vm225, %v343, 0
    %350 = vmatpush.bf16.xpose.msra.mxu0 0
    %351 = vmatpush.bf16.xpose.msra.mxu0 0
    %352 = vmatpush.bf16.xpose.msra.mxu0 0
    %353 = vmatpush.bf16.xpose.msra.mxu0 0
    %354 = vmatpush.bf16.xpose.msra.mxu0 0
    %355 = vmatpush.bf16.xpose.msra.mxu0 0
    %356 = vmatpush.bf16.xpose.msra.mxu0 0
    %357 = vmatpush.bf16.xpose.msra.mxu0 %v348
    %358 = vmatmul.bf16.gmra.mxu0 %v345
    %v359 = vpop.f32.mrf.mxu0
    %v360 = vadd.f32 0.0, %v359
    %v361 = vpop.f32.mrf.mxu0
    %362 = vdwg.mxu0
    %363 = vrot.lane.b32.xlu0 %v247, 120
    %v364 = vpop.permute.xlu0 %363
    %365 = vrot.lane.b32.xlu0 %v247, 88
    %v366 = vpop.permute.xlu0 %365
    %v368 = vsel %vm225, %v364, 0
    %v371 = vsel %vm225, %v366, 0
    %373 = vmatpush.bf16.xpose.msra.mxu0 0
    %374 = vmatpush.bf16.xpose.msra.mxu0 0
    %375 = vmatpush.bf16.xpose.msra.mxu0 0
    %376 = vmatpush.bf16.xpose.msra.mxu0 0
    %377 = vmatpush.bf16.xpose.msra.mxu0 0
    %378 = vmatpush.bf16.xpose.msra.mxu0 0
    %379 = vmatpush.bf16.xpose.msra.mxu0 0
    %380 = vmatpush.bf16.xpose.msra.mxu0 %v371
    %381 = vmatmul.bf16.gmra.mxu0 %v368
    %v382 = vpop.f32.mrf.mxu0
    %v383 = vadd.f32 0.0, %v382
    %v384 = vpop.f32.mrf.mxu0
    %385 = vdwg.mxu0
    %v386 = vsel %vm269, -10000.0, %v360
    %v387 = vsel %vm270, -10000.0, %v383
    %v388 = vsel %vm225, %v386, -inf
    %389 = vmax.xlane.f32.xlu0 %v388
    %v390 = vpop.xlane.xlu0 %389
    %v391 = vsel %vm225, %v387, -inf
    %392 = vmax.xlane.f32.xlu0 %v391
    %v393 = vpop.xlane.xlu0 %392
    %v394 = vsub.f32 %v386, %v390
    %v395 = vsub.f32 %v387, %v393
    %v396 = vmul.f32 %v394, 1.442695
    %v397 = vpow.pop %v396
    %v398 = vmul.f32 %v395, 1.442695
    %v399 = vpow.pop %v398
    %v400 = vsel %vm225, %v397, 0.0
    %401 = vadd.xlane.f32.xlu0 %v400
    %v402 = vpop.xlane.xlu0 %401
    %v403 = vsel %vm225, %v399, 0.0
    %404 = vadd.xlane.f32.xlu0 %v403
    %v405 = vpop.xlane.xlu0 %404
    %v406 = vrcp.pop %v402
    %v407 = vrcp.pop %v405
    %v408 = vmul.f32 %v397, %v406
    %v409 = vmul.f32 %v399, %v407
    %v410 = vpack.c.bf16 %v408, %v408
    %v411 = vpack.c.bf16 %v409, %v409
    %412 = vrot.lane.b32.xlu0 %v222, 56
    %v413 = vpop.permute.xlu0 %412
    %v415 = vsel %vm225, %v410, 0
    %v418 = vsel %vm302, %v413, 0
    %420 = vmatpush.bf16.msra.mxu0 0
    %421 = vmatpush.bf16.msra.mxu0 0
    %422 = vmatpush.bf16.msra.mxu0 0
    %423 = vmatpush.bf16.msra.mxu0 0
    %424 = vmatpush.bf16.msra.mxu0 0
    %425 = vmatpush.bf16.msra.mxu0 0
    %426 = vmatpush.bf16.msra.mxu0 0
    %427 = vmatpush.bf16.msra.mxu0 %v418
    %428 = vmatmul.bf16.gmra.mxu0 %v415
    %v429 = vpop.f32.mrf.mxu0
    %v430 = vadd.f32 0.0, %v429
    %v431 = vpop.f32.mrf.mxu0
    %432 = vdwg.mxu0
    %433 = vrot.lane.b32.xlu0 %v247, 56
    %v434 = vpop.permute.xlu0 %433
    %v436 = vsel %vm225, %v411, 0
    %v439 = vsel %vm302, %v434, 0
    %441 = vmatpush.bf16.msra.mxu0 0
    %442 = vmatpush.bf16.msra.mxu0 0
    %443 = vmatpush.bf16.msra.mxu0 0
    %444 = vmatpush.bf16.msra.mxu0 0
    %445 = vmatpush.bf16.msra.mxu0 0
    %446 = vmatpush.bf16.msra.mxu0 0
    %447 = vmatpush.bf16.msra.mxu0 0
    %448 = vmatpush.bf16.msra.mxu0 %v439
    %449 = vmatmul.bf16.gmra.mxu0 %v436
    %v450 = vpop.f32.mrf.mxu0
    %v451 = vadd.f32 0.0, %v450
    %v452 = vpop.f32.mrf.mxu0
    %453 = vdwg.mxu0
    %454 = vrot.lane.b32.xlu0 %v222, 112
    %v455 = vpop.permute.xlu0 %454
    %456 = vrot.lane.b32.xlu0 %v222, 80
    %v457 = vpop.permute.xlu0 %456
    %v459 = vsel %vm225, %v455, 0
    %v462 = vsel %vm225, %v457, 0
    %464 = vmatpush.bf16.xpose.msra.mxu0 0
    %465 = vmatpush.bf16.xpose.msra.mxu0 0
    %466 = vmatpush.bf16.xpose.msra.mxu0 0
    %467 = vmatpush.bf16.xpose.msra.mxu0 0
    %468 = vmatpush.bf16.xpose.msra.mxu0 0
    %469 = vmatpush.bf16.xpose.msra.mxu0 0
    %470 = vmatpush.bf16.xpose.msra.mxu0 0
    %471 = vmatpush.bf16.xpose.msra.mxu0 %v462
    %472 = vmatmul.bf16.gmra.mxu0 %v459
    %v473 = vpop.f32.mrf.mxu0
    %v474 = vadd.f32 0.0, %v473
    %v475 = vpop.f32.mrf.mxu0
    %476 = vdwg.mxu0
    %477 = vrot.lane.b32.xlu0 %v247, 112
    %v478 = vpop.permute.xlu0 %477
    %479 = vrot.lane.b32.xlu0 %v247, 80
    %v480 = vpop.permute.xlu0 %479
    %v482 = vsel %vm225, %v478, 0
    %v485 = vsel %vm225, %v480, 0
    %487 = vmatpush.bf16.xpose.msra.mxu0 0
    %488 = vmatpush.bf16.xpose.msra.mxu0 0
    %489 = vmatpush.bf16.xpose.msra.mxu0 0
    %490 = vmatpush.bf16.xpose.msra.mxu0 0
    %491 = vmatpush.bf16.xpose.msra.mxu0 0
    %492 = vmatpush.bf16.xpose.msra.mxu0 0
    %493 = vmatpush.bf16.xpose.msra.mxu0 0
    %494 = vmatpush.bf16.xpose.msra.mxu0 %v485
    %495 = vmatmul.bf16.gmra.mxu0 %v482
    %v496 = vpop.f32.mrf.mxu0
    %v497 = vadd.f32 0.0, %v496
    %v498 = vpop.f32.mrf.mxu0
    %499 = vdwg.mxu0
    %v500 = vsel %vm269, -10000.0, %v474
    %v501 = vsel %vm270, -10000.0, %v497
    %v502 = vsel %vm225, %v500, -inf
    %503 = vmax.xlane.f32.xlu0 %v502
    %v504 = vpop.xlane.xlu0 %503
    %v505 = vsel %vm225, %v501, -inf
    %506 = vmax.xlane.f32.xlu0 %v505
    %v507 = vpop.xlane.xlu0 %506
    %v508 = vsub.f32 %v500, %v504
    %v509 = vsub.f32 %v501, %v507
    %v510 = vmul.f32 %v508, 1.442695
    %v511 = vpow.pop %v510
    %v512 = vmul.f32 %v509, 1.442695
    %v513 = vpow.pop %v512
    %v514 = vsel %vm225, %v511, 0.0
    %515 = vadd.xlane.f32.xlu0 %v514
    %v516 = vpop.xlane.xlu0 %515
    %v517 = vsel %vm225, %v513, 0.0
    %518 = vadd.xlane.f32.xlu0 %v517
    %v519 = vpop.xlane.xlu0 %518
    %v520 = vrcp.pop %v516
    %v521 = vrcp.pop %v519
    %v522 = vmul.f32 %v511, %v520
    %v523 = vmul.f32 %v513, %v521
    %v524 = vpack.c.bf16 %v522, %v522
    %v525 = vpack.c.bf16 %v523, %v523
    %526 = vrot.lane.b32.xlu0 %v222, 48
    %v527 = vpop.permute.xlu0 %526
    %v529 = vsel %vm225, %v524, 0
    %v532 = vsel %vm302, %v527, 0
    %534 = vmatpush.bf16.msra.mxu0 0
    %535 = vmatpush.bf16.msra.mxu0 0
    %536 = vmatpush.bf16.msra.mxu0 0
    %537 = vmatpush.bf16.msra.mxu0 0
    %538 = vmatpush.bf16.msra.mxu0 0
    %539 = vmatpush.bf16.msra.mxu0 0
    %540 = vmatpush.bf16.msra.mxu0 0
    %541 = vmatpush.bf16.msra.mxu0 %v532
    %542 = vmatmul.bf16.gmra.mxu0 %v529
    %v543 = vpop.f32.mrf.mxu0
    %v544 = vadd.f32 0.0, %v543
    %v545 = vpop.f32.mrf.mxu0
    %546 = vdwg.mxu0
    %547 = vrot.lane.b32.xlu0 %v247, 48
    %v548 = vpop.permute.xlu0 %547
    %v550 = vsel %vm225, %v525, 0
    %v553 = vsel %vm302, %v548, 0
    %555 = vmatpush.bf16.msra.mxu0 0
    %556 = vmatpush.bf16.msra.mxu0 0
    %557 = vmatpush.bf16.msra.mxu0 0
    %558 = vmatpush.bf16.msra.mxu0 0
    %559 = vmatpush.bf16.msra.mxu0 0
    %560 = vmatpush.bf16.msra.mxu0 0
    %561 = vmatpush.bf16.msra.mxu0 0
    %562 = vmatpush.bf16.msra.mxu0 %v553
    %563 = vmatmul.bf16.gmra.mxu0 %v550
    %v564 = vpop.f32.mrf.mxu0
    %v565 = vadd.f32 0.0, %v564
    %v566 = vpop.f32.mrf.mxu0
    %567 = vdwg.mxu0
    %568 = vrot.lane.b32.xlu0 %v222, 104
    %v569 = vpop.permute.xlu0 %568
    %570 = vrot.lane.b32.xlu0 %v222, 72
    %v571 = vpop.permute.xlu0 %570
    %v573 = vsel %vm225, %v569, 0
    %v576 = vsel %vm225, %v571, 0
    %578 = vmatpush.bf16.xpose.msra.mxu0 0
    %579 = vmatpush.bf16.xpose.msra.mxu0 0
    %580 = vmatpush.bf16.xpose.msra.mxu0 0
    %581 = vmatpush.bf16.xpose.msra.mxu0 0
    %582 = vmatpush.bf16.xpose.msra.mxu0 0
    %583 = vmatpush.bf16.xpose.msra.mxu0 0
    %584 = vmatpush.bf16.xpose.msra.mxu0 0
    %585 = vmatpush.bf16.xpose.msra.mxu0 %v576
    %586 = vmatmul.bf16.gmra.mxu0 %v573
    %v587 = vpop.f32.mrf.mxu0
    %v588 = vadd.f32 0.0, %v587
    %v589 = vpop.f32.mrf.mxu0
    %590 = vdwg.mxu0
    %591 = vrot.lane.b32.xlu0 %v247, 104
    %v592 = vpop.permute.xlu0 %591
    %593 = vrot.lane.b32.xlu0 %v247, 72
    %v594 = vpop.permute.xlu0 %593
    %v596 = vsel %vm225, %v592, 0
    %v599 = vsel %vm225, %v594, 0
    %601 = vmatpush.bf16.xpose.msra.mxu0 0
    %602 = vmatpush.bf16.xpose.msra.mxu0 0
    %603 = vmatpush.bf16.xpose.msra.mxu0 0
    %604 = vmatpush.bf16.xpose.msra.mxu0 0
    %605 = vmatpush.bf16.xpose.msra.mxu0 0
    %606 = vmatpush.bf16.xpose.msra.mxu0 0
    %607 = vmatpush.bf16.xpose.msra.mxu0 0
    %608 = vmatpush.bf16.xpose.msra.mxu0 %v599
    %609 = vmatmul.bf16.gmra.mxu0 %v596
    %v610 = vpop.f32.mrf.mxu0
    %v611 = vadd.f32 0.0, %v610
    %v612 = vpop.f32.mrf.mxu0
    %613 = vdwg.mxu0
    %v614 = vsel %vm269, -10000.0, %v588
    %v615 = vsel %vm270, -10000.0, %v611
    %v616 = vsel %vm225, %v614, -inf
    %617 = vmax.xlane.f32.xlu0 %v616
    %v618 = vpop.xlane.xlu0 %617
    %v619 = vsel %vm225, %v615, -inf
    %620 = vmax.xlane.f32.xlu0 %v619
    %v621 = vpop.xlane.xlu0 %620
    %v622 = vsub.f32 %v614, %v618
    %v623 = vsub.f32 %v615, %v621
    %v624 = vmul.f32 %v622, 1.442695
    %v625 = vpow.pop %v624
    %v626 = vmul.f32 %v623, 1.442695
    %v627 = vpow.pop %v626
    %v628 = vsel %vm225, %v625, 0.0
    %629 = vadd.xlane.f32.xlu0 %v628
    %v630 = vpop.xlane.xlu0 %629
    %v631 = vsel %vm225, %v627, 0.0
    %632 = vadd.xlane.f32.xlu0 %v631
    %v633 = vpop.xlane.xlu0 %632
    %v634 = vrcp.pop %v630
    %v635 = vrcp.pop %v633
    %v636 = vmul.f32 %v625, %v634
    %v637 = vmul.f32 %v627, %v635
    %v638 = vpack.c.bf16 %v636, %v636
    %v639 = vpack.c.bf16 %v637, %v637
    %640 = vrot.lane.b32.xlu0 %v222, 40
    %v641 = vpop.permute.xlu0 %640
    %v643 = vsel %vm225, %v638, 0
    %v646 = vsel %vm302, %v641, 0
    %648 = vmatpush.bf16.msra.mxu0 0
    %649 = vmatpush.bf16.msra.mxu0 0
    %650 = vmatpush.bf16.msra.mxu0 0
    %651 = vmatpush.bf16.msra.mxu0 0
    %652 = vmatpush.bf16.msra.mxu0 0
    %653 = vmatpush.bf16.msra.mxu0 0
    %654 = vmatpush.bf16.msra.mxu0 0
    %655 = vmatpush.bf16.msra.mxu0 %v646
    %656 = vmatmul.bf16.gmra.mxu0 %v643
    %v657 = vpop.f32.mrf.mxu0
    %v658 = vadd.f32 0.0, %v657
    %v659 = vpop.f32.mrf.mxu0
    %660 = vdwg.mxu0
    %661 = vrot.lane.b32.xlu0 %v247, 40
    %v662 = vpop.permute.xlu0 %661
    %v664 = vsel %vm225, %v639, 0
    %v667 = vsel %vm302, %v662, 0
    %669 = vmatpush.bf16.msra.mxu0 0
    %670 = vmatpush.bf16.msra.mxu0 0
    %671 = vmatpush.bf16.msra.mxu0 0
    %672 = vmatpush.bf16.msra.mxu0 0
    %673 = vmatpush.bf16.msra.mxu0 0
    %674 = vmatpush.bf16.msra.mxu0 0
    %675 = vmatpush.bf16.msra.mxu0 0
    %676 = vmatpush.bf16.msra.mxu0 %v667
    %677 = vmatmul.bf16.gmra.mxu0 %v664
    %v678 = vpop.f32.mrf.mxu0
    %v679 = vadd.f32 0.0, %v678
    %v680 = vpop.f32.mrf.mxu0
    %681 = vdwg.mxu0
    %684 = vrot.lane.b32.xlu0 %v430, 8
    %v685 = vpop.permute.xlu0 %684
    %686 = vrot.lane.b32.xlu0 %v451, 8
    %v687 = vpop.permute.xlu0 %686
    %692 = vrot.lane.b32.xlu0 %v544, 16
    %v693 = vpop.permute.xlu0 %692
    %694 = vrot.lane.b32.xlu0 %v565, 16
    %v695 = vpop.permute.xlu0 %694
    %700 = vrot.lane.b32.xlu0 %v658, 24
    %v701 = vpop.permute.xlu0 %700
    %702 = vrot.lane.b32.xlu0 %v679, 24
    %v703 = vpop.permute.xlu0 %702
    %v706 = vsel %vm225, %v316, %v685
    %v707 = vsel %vm225, %v337, %v687
    %vm708 = vcmask 130048
    %v709 = vsel %vm708, %v706, %v693
    %v710 = vsel %vm708, %v707, %v695
    %vm711 = vcmask 195584
    %v712 = vsel %vm711, %v709, %v701
    %v713 = vsel %vm711, %v710, %v703
    %v714 = vld [vmem:[%s15] sm:$0xf]
    %v715 = vld [vmem:[%s15 + $0x4] sm:$0xf]
    %v716 = vld [vmem:[%s15 + $0x8] sm:$0xf]
    %v717 = vld [vmem:[%s15 + $0xc] sm:$0xf]
    %v718 = vpack.c.bf16 %v713, %v712
    %v719 = vld [vmem:[%s17] sm:$0x1]
    %v721 = vperm.slane %v719, 0
    %v727 = vunpack.c.l.b16 %v714
    %v728 = vunpack.c.l.b16 %v715
    %v729 = vunpack.c.l.b16 %v716
    %v730 = vunpack.c.l.b16 %v717
    %v731 = vpack.c.b16 %v728, %v727
    %v732 = vpack.c.b16 %v730, %v729
    %v736 = vsel %vm200, %v718, 0
    %738 = vmatpush.bf16.msra.mxu0 0
    %739 = vmatpush.bf16.msra.mxu0 0
    %740 = vmatpush.bf16.msra.mxu0 0
    %741 = vmatpush.bf16.msra.mxu0 0
    %742 = vmatpush.bf16.msra.mxu0 0
    %743 = vmatpush.bf16.msra.mxu0 0
    %744 = vmatpush.bf16.msra.mxu0 %v732
    %745 = vmatpush.bf16.msra.mxu0 %v731
    %746 = vmatmul.bf16.gmra.mxu0 %v736
    %v747 = vpop.f32.mrf.mxu0
    %v748 = vadd.f32 %v721, %v747
    %v749 = vpop.f32.mrf.mxu0
    %v750 = vadd.f32 %v721, %v749
    %751 = vdwg.mxu0
    %v752 = vadd.f32 %v748, %v171
    %v753 = vadd.f32 %v750, %v172
    %v754 = vld [vmem:[%s19] sm:$0x1]
    %v755 = vld [vmem:[%s21] sm:$0x1]
    %v756 = vsel %vm200, %v752, 0.0
    %757 = vadd.xlane.f32.xlu0 %v756
    %v758 = vpop.xlane.xlu0 %757
    %v759 = vsel %vm200, %v753, 0.0
    %760 = vadd.xlane.f32.xlu0 %v759
    %v761 = vpop.xlane.xlu0 %760
    %v762 = vrcp.pop 32.0
    %v763 = vmul.f32 32.0, %v762
    %v764 = vsub.f32 1.0, %v763
    %v765 = vmul.f32 %v762, %v764
    %v766 = vadd.f32 %v762, %v765
    %vm767 = vweird.f32 %v762
    %v768 = vsel %vm767, %v762, %v766
    %v769 = vmul.f32 %v758, %v768
    %v770 = vmul.f32 %v761, %v768
    %v771 = vsub.f32 %v752, %v769
    %v772 = vsub.f32 %v753, %v770
    %v773 = vmul.f32 %v771, %v771
    %v774 = vmul.f32 %v772, %v772
    %v775 = vsel %vm200, %v773, 0.0
    %776 = vadd.xlane.f32.xlu0 %v775
    %v777 = vpop.xlane.xlu0 %776
    %v778 = vsel %vm200, %v774, 0.0
    %779 = vadd.xlane.f32.xlu0 %v778
    %v780 = vpop.xlane.xlu0 %779
    %v781 = vmul.f32 %v777, %v768
    %v782 = vmul.f32 %v780, %v768
    %v783 = vadd.f32 %v781, 1e-05
    %v784 = vadd.f32 %v782, 1e-05
    %v785 = vrsqrt.pop %v783
    %v786 = vmul.f32 %v785, %v783
    %v787 = vmul.f32 %v786, %v785
    %v788 = vmul.f32 0.5, %v787
    %v789 = vsub.f32 1.5, %v788
    %v790 = vmul.f32 %v785, %v789
    %vm791 = vweird.f32 %v783
    %vm792 = vweird.f32 %v785
    %vm793 = vmor %vm791, %vm792
    %v794 = vsel %vm793, %v785, %v790
    %v795 = vrsqrt.pop %v784
    %v796 = vmul.f32 %v795, %v784
    %v797 = vmul.f32 %v796, %v795
    %v798 = vmul.f32 0.5, %v797
    %v799 = vsub.f32 1.5, %v798
    %v800 = vmul.f32 %v795, %v799
    %vm801 = vweird.f32 %v784
    %vm802 = vweird.f32 %v795
    %vm803 = vmor %vm801, %vm802
    %v804 = vsel %vm803, %v795, %v800
    %v805 = vmul.f32 %v771, %v794
    %v806 = vmul.f32 %v772, %v804
    %v808 = vperm.slane %v754, 0
    %v810 = vmul.f32 %v805, %v808
    %v811 = vmul.f32 %v806, %v808
    %v813 = vperm.slane %v755, 0
    %v815 = vadd.f32 %v810, %v813
    %v816 = vadd.f32 %v811, %v813
    %v817 = vld [vmem:[%s23] sm:$0xf]
    %v818 = vld [vmem:[%s23 + $0x4] sm:$0xf]
    %v819 = vld [vmem:[%s23 + $0x8] sm:$0xf]
    %v820 = vld [vmem:[%s23 + $0xc] sm:$0xf]
    %v821 = vpack.c.bf16 %v816, %v815
    %v822 = vld [vmem:[%s25] sm:$0x1]
    %v824 = vperm.slane %v822, 0
    %v830 = vunpack.c.l.b16 %v817
    %v831 = vunpack.c.l.b16 %v818
    %v832 = vunpack.c.l.b16 %v819
    %v833 = vunpack.c.l.b16 %v820
    %v834 = vpack.c.b16 %v831, %v830
    %v835 = vpack.c.b16 %v833, %v832
    %v839 = vsel %vm200, %v821, 0
    %841 = vmatpush.bf16.msra.mxu0 0
    %842 = vmatpush.bf16.msra.mxu0 0
    %843 = vmatpush.bf16.msra.mxu0 0
    %844 = vmatpush.bf16.msra.mxu0 0
    %845 = vmatpush.bf16.msra.mxu0 0
    %846 = vmatpush.bf16.msra.mxu0 0
    %847 = vmatpush.bf16.msra.mxu0 %v835
    %848 = vmatpush.bf16.msra.mxu0 %v834
    %849 = vmatmul.bf16.gmra.mxu0 %v839
    %v850 = vpop.f32.mrf.mxu0
    %v851 = vadd.f32 %v824, %v850
    %v852 = vpop.f32.mrf.mxu0
    %v853 = vadd.f32 %v824, %v852
    %854 = vdwg.mxu0
    %v855 = vmax.f32 %v851, 0.0
    %v856 = vmax.f32 %v853, 0.0
    %v857 = vld [vmem:[%s27] sm:$0xf]
    %v858 = vld [vmem:[%s27 + $0x4] sm:$0xf]
    %v859 = vld [vmem:[%s27 + $0x8] sm:$0xf]
    %v860 = vld [vmem:[%s27 + $0xc] sm:$0xf]
    %v861 = vld [vmem:[%s27 + $0x10] sm:$0xf]
    %v862 = vld [vmem:[%s27 + $0x14] sm:$0xf]
    %v863 = vld [vmem:[%s27 + $0x18] sm:$0xf]
    %v864 = vld [vmem:[%s27 + $0x1c] sm:$0xf]
    %v865 = vpack.c.bf16 %v856, %v855
    %v866 = vld [vmem:[%s29] sm:$0x1]
    %v868 = vperm.slane %v866, 0
    %v878 = vunpack.c.l.b16 %v857
    %v879 = vunpack.c.l.b16 %v858
    %v880 = vunpack.c.l.b16 %v859
    %v881 = vunpack.c.l.b16 %v860
    %v882 = vunpack.c.l.b16 %v861
    %v883 = vunpack.c.l.b16 %v862
    %v884 = vunpack.c.l.b16 %v863
    %v885 = vunpack.c.l.b16 %v864
    %v886 = vpack.c.b16 %v879, %v878
    %v887 = vpack.c.b16 %v881, %v880
    %v888 = vpack.c.b16 %v883, %v882
    %v889 = vpack.c.b16 %v885, %v884
    %vm894 = vcmask 523264
    %v896 = vsel %vm894, %v865, 0
    %898 = vmatpush.bf16.msra.mxu0 0
    %899 = vmatpush.bf16.msra.mxu0 0
    %900 = vmatpush.bf16.msra.mxu0 0
    %901 = vmatpush.bf16.msra.mxu0 0
    %902 = vmatpush.bf16.msra.mxu0 %v889
    %903 = vmatpush.bf16.msra.mxu0 %v888
    %904 = vmatpush.bf16.msra.mxu0 %v887
    %905 = vmatpush.bf16.msra.mxu0 %v886
    %906 = vmatmul.bf16.gmra.mxu0 %v896
    %v907 = vpop.f32.mrf.mxu0
    %v908 = vadd.f32 %v868, %v907
    %v909 = vpop.f32.mrf.mxu0
    %v910 = vadd.f32 %v868, %v909
    %911 = vdwg.mxu0
    %v912 = vadd.f32 %v908, %v815
    %v913 = vadd.f32 %v910, %v816
    %v914 = vld [vmem:[%s31] sm:$0x1]
    %v915 = vld [vmem:[%s33] sm:$0x1]
    %v916 = vsel %vm200, %v912, 0.0
    %917 = vadd.xlane.f32.xlu0 %v916
    %v918 = vpop.xlane.xlu0 %917
    %v919 = vsel %vm200, %v913, 0.0
    %920 = vadd.xlane.f32.xlu0 %v919
    %v921 = vpop.xlane.xlu0 %920
    %v922 = vmul.f32 %v918, %v768
    %v923 = vmul.f32 %v921, %v768
    %v924 = vsub.f32 %v912, %v922
    %v925 = vsub.f32 %v913, %v923
    %v926 = vmul.f32 %v924, %v924
    %v927 = vmul.f32 %v925, %v925
    %v928 = vsel %vm200, %v926, 0.0
    %929 = vadd.xlane.f32.xlu0 %v928
    %v930 = vpop.xlane.xlu0 %929
    %v931 = vsel %vm200, %v927, 0.0
    %932 = vadd.xlane.f32.xlu0 %v931
    %v933 = vpop.xlane.xlu0 %932
    %v934 = vmul.f32 %v930, %v768
    %v935 = vmul.f32 %v933, %v768
    %v936 = vadd.f32 %v934, 1e-05
    %v937 = vadd.f32 %v935, 1e-05
    %v938 = vrsqrt.pop %v936
    %v939 = vmul.f32 %v938, %v936
    %v940 = vmul.f32 %v939, %v938
    %v941 = vmul.f32 0.5, %v940
    %v942 = vsub.f32 1.5, %v941
    %v943 = vmul.f32 %v938, %v942
    %vm944 = vweird.f32 %v936
    %vm945 = vweird.f32 %v938
    %vm946 = vmor %vm944, %vm945
    %v947 = vsel %vm946, %v938, %v943
    %v948 = vrsqrt.pop %v937
    %v949 = vmul.f32 %v948, %v937
    %v950 = vmul.f32 %v949, %v948
    %v951 = vmul.f32 0.5, %v950
    %v952 = vsub.f32 1.5, %v951
    %v953 = vmul.f32 %v948, %v952
    %vm954 = vweird.f32 %v937
    %vm955 = vweird.f32 %v948
    %vm956 = vmor %vm954, %vm955
    %v957 = vsel %vm956, %v948, %v953
    %v958 = vmul.f32 %v924, %v947
    %v959 = vmul.f32 %v925, %v957
    %v961 = vperm.slane %v914, 0
    %v963 = vmul.f32 %v958, %v961
    %v964 = vmul.f32 %v959, %v961
    %v966 = vperm.slane %v915, 0
    %v968 = vadd.f32 %v963, %v966
    %v969 = vadd.f32 %v964, %v966
    %s970 = scalar_lea.vmem %s11, 16
    %v971 = vld [vmem:[%s970] sm:$0xf]
    %v972 = vld [vmem:[%s970 + $0x4] sm:$0xf]
    %v973 = vld [vmem:[%s970 + $0x8] sm:$0xf]
    %v974 = vld [vmem:[%s970 + $0xc] sm:$0xf]
    %v975 = vpack.c.bf16 %v969, %v968
    %s976 = scalar_lea.vmem %s13, 1
    %v977 = vld [vmem:[%s976] sm:$0x1]
    %v979 = vperm.slane %v977, 0
    %v985 = vunpack.c.l.b16 %v971
    %v986 = vunpack.c.l.b16 %v972
    %v987 = vunpack.c.l.b16 %v973
    %v988 = vunpack.c.l.b16 %v974
    %v989 = vpack.c.b16 %v986, %v985
    %v990 = vpack.c.b16 %v988, %v987
    %v994 = vsel %vm200, %v975, 0
    %996 = vmatpush.bf16.msra.mxu0 0
    %997 = vmatpush.bf16.msra.mxu0 0
    %998 = vmatpush.bf16.msra.mxu0 0
    %999 = vmatpush.bf16.msra.mxu0 0
    %1000 = vmatpush.bf16.msra.mxu0 0
    %1001 = vmatpush.bf16.msra.mxu0 0
    %1002 = vmatpush.bf16.msra.mxu0 %v990
    %1003 = vmatpush.bf16.msra.mxu0 %v989
    %1004 = vmatmul.bf16.gmra.mxu0 %v994
    %v1005 = vpop.f32.mrf.mxu0
    %v1006 = vadd.f32 %v979, %v1005
    %v1007 = vpop.f32.mrf.mxu0
    %v1008 = vadd.f32 %v979, %v1007
    %1009 = vdwg.mxu0
    %v1010 = vpack.c.bf16 %v1006, %v1006
    %v1011 = vpack.c.bf16 %v1008, %v1008
    %v1013 = vunpack.c.l.b16 %v1010
    %v1014 = vpack.c.b16 %v1013, %v1013
    %1015 = vrot.lane.b32.xlu0 %v1014, 96
    %v1016 = vpop.permute.xlu0 %1015
    %v1018 = vsel %vm225, %v1010, 0
    %v1021 = vsel %vm225, %v1016, 0
    %1023 = vmatpush.bf16.xpose.msra.mxu0 0
    %1024 = vmatpush.bf16.xpose.msra.mxu0 0
    %1025 = vmatpush.bf16.xpose.msra.mxu0 0
    %1026 = vmatpush.bf16.xpose.msra.mxu0 0
    %1027 = vmatpush.bf16.xpose.msra.mxu0 0
    %1028 = vmatpush.bf16.xpose.msra.mxu0 0
    %1029 = vmatpush.bf16.xpose.msra.mxu0 0
    %1030 = vmatpush.bf16.xpose.msra.mxu0 %v1021
    %1031 = vmatmul.bf16.gmra.mxu0 %v1018
    %v1032 = vpop.f32.mrf.mxu0
    %v1033 = vadd.f32 0.0, %v1032
    %v1034 = vpop.f32.mrf.mxu0
    %1035 = vdwg.mxu0
    %v1037 = vunpack.c.l.b16 %v1011
    %v1038 = vpack.c.b16 %v1037, %v1037
    %1039 = vrot.lane.b32.xlu0 %v1038, 96
    %v1040 = vpop.permute.xlu0 %1039
    %v1042 = vsel %vm225, %v1011, 0
    %v1045 = vsel %vm225, %v1040, 0
    %1047 = vmatpush.bf16.xpose.msra.mxu0 0
    %1048 = vmatpush.bf16.xpose.msra.mxu0 0
    %1049 = vmatpush.bf16.xpose.msra.mxu0 0
    %1050 = vmatpush.bf16.xpose.msra.mxu0 0
    %1051 = vmatpush.bf16.xpose.msra.mxu0 0
    %1052 = vmatpush.bf16.xpose.msra.mxu0 0
    %1053 = vmatpush.bf16.xpose.msra.mxu0 0
    %1054 = vmatpush.bf16.xpose.msra.mxu0 %v1045
    %1055 = vmatmul.bf16.gmra.mxu0 %v1042
    %v1056 = vpop.f32.mrf.mxu0
    %v1057 = vadd.f32 0.0, %v1056
    %v1058 = vpop.f32.mrf.mxu0
    %1059 = vdwg.mxu0
    %v1060 = vsel %vm269, -10000.0, %v1033
    %v1061 = vsel %vm270, -10000.0, %v1057
    %v1062 = vsel %vm225, %v1060, -inf
    %1063 = vmax.xlane.f32.xlu0 %v1062
    %v1064 = vpop.xlane.xlu0 %1063
    %v1065 = vsel %vm225, %v1061, -inf
    %1066 = vmax.xlane.f32.xlu0 %v1065
    %v1067 = vpop.xlane.xlu0 %1066
    %v1068 = vsub.f32 %v1060, %v1064
    %v1069 = vsub.f32 %v1061, %v1067
    %v1070 = vmul.f32 %v1068, 1.442695
    %v1071 = vpow.pop %v1070
    %v1072 = vmul.f32 %v1069, 1.442695
    %v1073 = vpow.pop %v1072
    %v1074 = vsel %vm225, %v1071, 0.0
    %1075 = vadd.xlane.f32.xlu0 %v1074
    %v1076 = vpop.xlane.xlu0 %1075
    %v1077 = vsel %vm225, %v1073, 0.0
    %1078 = vadd.xlane.f32.xlu0 %v1077
    %v1079 = vpop.xlane.xlu0 %1078
    %v1080 = vrcp.pop %v1076
    %v1081 = vrcp.pop %v1079
    %v1082 = vmul.f32 %v1071, %v1080
    %v1083 = vmul.f32 %v1073, %v1081
    %v1084 = vpack.c.bf16 %v1082, %v1082
    %v1085 = vpack.c.bf16 %v1083, %v1083
    %1086 = vrot.lane.b32.xlu0 %v1014, 64
    %v1087 = vpop.permute.xlu0 %1086
    %v1089 = vsel %vm225, %v1084, 0
    %v1092 = vsel %vm302, %v1087, 0
    %1094 = vmatpush.bf16.msra.mxu0 0
    %1095 = vmatpush.bf16.msra.mxu0 0
    %1096 = vmatpush.bf16.msra.mxu0 0
    %1097 = vmatpush.bf16.msra.mxu0 0
    %1098 = vmatpush.bf16.msra.mxu0 0
    %1099 = vmatpush.bf16.msra.mxu0 0
    %1100 = vmatpush.bf16.msra.mxu0 0
    %1101 = vmatpush.bf16.msra.mxu0 %v1092
    %1102 = vmatmul.bf16.gmra.mxu0 %v1089
    %v1103 = vpop.f32.mrf.mxu0
    %v1104 = vadd.f32 0.0, %v1103
    %v1105 = vpop.f32.mrf.mxu0
    %1106 = vdwg.mxu0
    %1107 = vrot.lane.b32.xlu0 %v1038, 64
    %v1108 = vpop.permute.xlu0 %1107
    %v1110 = vsel %vm225, %v1085, 0
    %v1113 = vsel %vm302, %v1108, 0
    %1115 = vmatpush.bf16.msra.mxu0 0
    %1116 = vmatpush.bf16.msra.mxu0 0
    %1117 = vmatpush.bf16.msra.mxu0 0
    %1118 = vmatpush.bf16.msra.mxu0 0
    %1119 = vmatpush.bf16.msra.mxu0 0
    %1120 = vmatpush.bf16.msra.mxu0 0
    %1121 = vmatpush.bf16.msra.mxu0 0
    %1122 = vmatpush.bf16.msra.mxu0 %v1113
    %1123 = vmatmul.bf16.gmra.mxu0 %v1110
    %v1124 = vpop.f32.mrf.mxu0
    %v1125 = vadd.f32 0.0, %v1124
    %v1126 = vpop.f32.mrf.mxu0
    %1127 = vdwg.mxu0
    %1128 = vrot.lane.b32.xlu0 %v1014, 120
    %v1129 = vpop.permute.xlu0 %1128
    %1130 = vrot.lane.b32.xlu0 %v1014, 88
    %v1131 = vpop.permute.xlu0 %1130
    %v1133 = vsel %vm225, %v1129, 0
    %v1136 = vsel %vm225, %v1131, 0
    %1138 = vmatpush.bf16.xpose.msra.mxu0 0
    %1139 = vmatpush.bf16.xpose.msra.mxu0 0
    %1140 = vmatpush.bf16.xpose.msra.mxu0 0
    %1141 = vmatpush.bf16.xpose.msra.mxu0 0
    %1142 = vmatpush.bf16.xpose.msra.mxu0 0
    %1143 = vmatpush.bf16.xpose.msra.mxu0 0
    %1144 = vmatpush.bf16.xpose.msra.mxu0 0
    %1145 = vmatpush.bf16.xpose.msra.mxu0 %v1136
    %1146 = vmatmul.bf16.gmra.mxu0 %v1133
    %v1147 = vpop.f32.mrf.mxu0
    %v1148 = vadd.f32 0.0, %v1147
    %v1149 = vpop.f32.mrf.mxu0
    %1150 = vdwg.mxu0
    %1151 = vrot.lane.b32.xlu0 %v1038, 120
    %v1152 = vpop.permute.xlu0 %1151
    %1153 = vrot.lane.b32.xlu0 %v1038, 88
    %v1154 = vpop.permute.xlu0 %1153
    %v1156 = vsel %vm225, %v1152, 0
    %v1159 = vsel %vm225, %v1154, 0
    %1161 = vmatpush.bf16.xpose.msra.mxu0 0
    %1162 = vmatpush.bf16.xpose.msra.mxu0 0
    %1163 = vmatpush.bf16.xpose.msra.mxu0 0
    %1164 = vmatpush.bf16.xpose.msra.mxu0 0
    %1165 = vmatpush.bf16.xpose.msra.mxu0 0
    %1166 = vmatpush.bf16.xpose.msra.mxu0 0
    %1167 = vmatpush.bf16.xpose.msra.mxu0 0
    %1168 = vmatpush.bf16.xpose.msra.mxu0 %v1159
    %1169 = vmatmul.bf16.gmra.mxu0 %v1156
    %v1170 = vpop.f32.mrf.mxu0
    %v1171 = vadd.f32 0.0, %v1170
    %v1172 = vpop.f32.mrf.mxu0
    %1173 = vdwg.mxu0
    %v1174 = vsel %vm269, -10000.0, %v1148
    %v1175 = vsel %vm270, -10000.0, %v1171
    %v1176 = vsel %vm225, %v1174, -inf
    %1177 = vmax.xlane.f32.xlu0 %v1176
    %v1178 = vpop.xlane.xlu0 %1177
    %v1179 = vsel %vm225, %v1175, -inf
    %1180 = vmax.xlane.f32.xlu0 %v1179
    %v1181 = vpop.xlane.xlu0 %1180
    %v1182 = vsub.f32 %v1174, %v1178
    %v1183 = vsub.f32 %v1175, %v1181
    %v1184 = vmul.f32 %v1182, 1.442695
    %v1185 = vpow.pop %v1184
    %v1186 = vmul.f32 %v1183, 1.442695
    %v1187 = vpow.pop %v1186
    %v1188 = vsel %vm225, %v1185, 0.0
    %1189 = vadd.xlane.f32.xlu0 %v1188
    %v1190 = vpop.xlane.xlu0 %1189
    %v1191 = vsel %vm225, %v1187, 0.0
    %1192 = vadd.xlane.f32.xlu0 %v1191
    %v1193 = vpop.xlane.xlu0 %1192
    %v1194 = vrcp.pop %v1190
    %v1195 = vrcp.pop %v1193
    %v1196 = vmul.f32 %v1185, %v1194
    %v1197 = vmul.f32 %v1187, %v1195
    %v1198 = vpack.c.bf16 %v1196, %v1196
    %v1199 = vpack.c.bf16 %v1197, %v1197
    %1200 = vrot.lane.b32.xlu0 %v1014, 56
    %v1201 = vpop.permute.xlu0 %1200
    %v1203 = vsel %vm225, %v1198, 0
    %v1206 = vsel %vm302, %v1201, 0
    %1208 = vmatpush.bf16.msra.mxu0 0
    %1209 = vmatpush.bf16.msra.mxu0 0
    %1210 = vmatpush.bf16.msra.mxu0 0
    %1211 = vmatpush.bf16.msra.mxu0 0
    %1212 = vmatpush.bf16.msra.mxu0 0
    %1213 = vmatpush.bf16.msra.mxu0 0
    %1214 = vmatpush.bf16.msra.mxu0 0
    %1215 = vmatpush.bf16.msra.mxu0 %v1206
    %1216 = vmatmul.bf16.gmra.mxu0 %v1203
    %v1217 = vpop.f32.mrf.mxu0
    %v1218 = vadd.f32 0.0, %v1217
    %v1219 = vpop.f32.mrf.mxu0
    %1220 = vdwg.mxu0
    %1221 = vrot.lane.b32.xlu0 %v1038, 56
    %v1222 = vpop.permute.xlu0 %1221
    %v1224 = vsel %vm225, %v1199, 0
    %v1227 = vsel %vm302, %v1222, 0
    %1229 = vmatpush.bf16.msra.mxu0 0
    %1230 = vmatpush.bf16.msra.mxu0 0
    %1231 = vmatpush.bf16.msra.mxu0 0
    %1232 = vmatpush.bf16.msra.mxu0 0
    %1233 = vmatpush.bf16.msra.mxu0 0
    %1234 = vmatpush.bf16.msra.mxu0 0
    %1235 = vmatpush.bf16.msra.mxu0 0
    %1236 = vmatpush.bf16.msra.mxu0 %v1227
    %1237 = vmatmul.bf16.gmra.mxu0 %v1224
    %v1238 = vpop.f32.mrf.mxu0
    %v1239 = vadd.f32 0.0, %v1238
    %v1240 = vpop.f32.mrf.mxu0
    %1241 = vdwg.mxu0
    %1242 = vrot.lane.b32.xlu0 %v1014, 112
    %v1243 = vpop.permute.xlu0 %1242
    %1244 = vrot.lane.b32.xlu0 %v1014, 80
    %v1245 = vpop.permute.xlu0 %1244
    %v1247 = vsel %vm225, %v1243, 0
    %v1250 = vsel %vm225, %v1245, 0
    %1252 = vmatpush.bf16.xpose.msra.mxu0 0
    %1253 = vmatpush.bf16.xpose.msra.mxu0 0
    %1254 = vmatpush.bf16.xpose.msra.mxu0 0
    %1255 = vmatpush.bf16.xpose.msra.mxu0 0
    %1256 = vmatpush.bf16.xpose.msra.mxu0 0
    %1257 = vmatpush.bf16.xpose.msra.mxu0 0
    %1258 = vmatpush.bf16.xpose.msra.mxu0 0
    %1259 = vmatpush.bf16.xpose.msra.mxu0 %v1250
    %1260 = vmatmul.bf16.gmra.mxu0 %v1247
    %v1261 = vpop.f32.mrf.mxu0
    %v1262 = vadd.f32 0.0, %v1261
    %v1263 = vpop.f32.mrf.mxu0
    %1264 = vdwg.mxu0
    %1265 = vrot.lane.b32.xlu0 %v1038, 112
    %v1266 = vpop.permute.xlu0 %1265
    %1267 = vrot.lane.b32.xlu0 %v1038, 80
    %v1268 = vpop.permute.xlu0 %1267
    %v1270 = vsel %vm225, %v1266, 0
    %v1273 = vsel %vm225, %v1268, 0
    %1275 = vmatpush.bf16.xpose.msra.mxu0 0
    %1276 = vmatpush.bf16.xpose.msra.mxu0 0
    %1277 = vmatpush.bf16.xpose.msra.mxu0 0
    %1278 = vmatpush.bf16.xpose.msra.mxu0 0
    %1279 = vmatpush.bf16.xpose.msra.mxu0 0
    %1280 = vmatpush.bf16.xpose.msra.mxu0 0
    %1281 = vmatpush.bf16.xpose.msra.mxu0 0
    %1282 = vmatpush.bf16.xpose.msra.mxu0 %v1273
    %1283 = vmatmul.bf16.gmra.mxu0 %v1270
    %v1284 = vpop.f32.mrf.mxu0
    %v1285 = vadd.f32 0.0, %v1284
    %v1286 = vpop.f32.mrf.mxu0
    %1287 = vdwg.mxu0
    %v1288 = vsel %vm269, -10000.0, %v1262
    %v1289 = vsel %vm270, -10000.0, %v1285
    %v1290 = vsel %vm225, %v1288, -inf
    %1291 = vmax.xlane.f32.xlu0 %v1290
    %v1292 = vpop.xlane.xlu0 %1291
    %v1293 = vsel %vm225, %v1289, -inf
    %1294 = vmax.xlane.f32.xlu0 %v1293
    %v1295 = vpop.xlane.xlu0 %1294
    %v1296 = vsub.f32 %v1288, %v1292
    %v1297 = vsub.f32 %v1289, %v1295
    %v1298 = vmul.f32 %v1296, 1.442695
    %v1299 = vpow.pop %v1298
    %v1300 = vmul.f32 %v1297, 1.442695
    %v1301 = vpow.pop %v1300
    %v1302 = vsel %vm225, %v1299, 0.0
    %1303 = vadd.xlane.f32.xlu0 %v1302
    %v1304 = vpop.xlane.xlu0 %1303
    %v1305 = vsel %vm225, %v1301, 0.0
    %1306 = vadd.xlane.f32.xlu0 %v1305
    %v1307 = vpop.xlane.xlu0 %1306
    %v1308 = vrcp.pop %v1304
    %v1309 = vrcp.pop %v1307
    %v1310 = vmul.f32 %v1299, %v1308
    %v1311 = vmul.f32 %v1301, %v1309
    %v1312 = vpack.c.bf16 %v1310, %v1310
    %v1313 = vpack.c.bf16 %v1311, %v1311
    %1314 = vrot.lane.b32.xlu0 %v1014, 48
    %v1315 = vpop.permute.xlu0 %1314
    %v1317 = vsel %vm225, %v1312, 0
    %v1320 = vsel %vm302, %v1315, 0
    %1322 = vmatpush.bf16.msra.mxu0 0
    %1323 = vmatpush.bf16.msra.mxu0 0
    %1324 = vmatpush.bf16.msra.mxu0 0
    %1325 = vmatpush.bf16.msra.mxu0 0
    %1326 = vmatpush.bf16.msra.mxu0 0
    %1327 = vmatpush.bf16.msra.mxu0 0
    %1328 = vmatpush.bf16.msra.mxu0 0
    %1329 = vmatpush.bf16.msra.mxu0 %v1320
    %1330 = vmatmul.bf16.gmra.mxu0 %v1317
    %v1331 = vpop.f32.mrf.mxu0
    %v1332 = vadd.f32 0.0, %v1331
    %v1333 = vpop.f32.mrf.mxu0
    %1334 = vdwg.mxu0
    %1335 = vrot.lane.b32.xlu0 %v1038, 48
    %v1336 = vpop.permute.xlu0 %1335
    %v1338 = vsel %vm225, %v1313, 0
    %v1341 = vsel %vm302, %v1336, 0
    %1343 = vmatpush.bf16.msra.mxu0 0
    %1344 = vmatpush.bf16.msra.mxu0 0
    %1345 = vmatpush.bf16.msra.mxu0 0
    %1346 = vmatpush.bf16.msra.mxu0 0
    %1347 = vmatpush.bf16.msra.mxu0 0
    %1348 = vmatpush.bf16.msra.mxu0 0
    %1349 = vmatpush.bf16.msra.mxu0 0
    %1350 = vmatpush.bf16.msra.mxu0 %v1341
    %1351 = vmatmul.bf16.gmra.mxu0 %v1338
    %v1352 = vpop.f32.mrf.mxu0
    %v1353 = vadd.f32 0.0, %v1352
    %v1354 = vpop.f32.mrf.mxu0
    %1355 = vdwg.mxu0
    %1356 = vrot.lane.b32.xlu0 %v1014, 104
    %v1357 = vpop.permute.xlu0 %1356
    %1358 = vrot.lane.b32.xlu0 %v1014, 72
    %v1359 = vpop.permute.xlu0 %1358
    %v1361 = vsel %vm225, %v1357, 0
    %v1364 = vsel %vm225, %v1359, 0
    %1366 = vmatpush.bf16.xpose.msra.mxu0 0
    %1367 = vmatpush.bf16.xpose.msra.mxu0 0
    %1368 = vmatpush.bf16.xpose.msra.mxu0 0
    %1369 = vmatpush.bf16.xpose.msra.mxu0 0
    %1370 = vmatpush.bf16.xpose.msra.mxu0 0
    %1371 = vmatpush.bf16.xpose.msra.mxu0 0
    %1372 = vmatpush.bf16.xpose.msra.mxu0 0
    %1373 = vmatpush.bf16.xpose.msra.mxu0 %v1364
    %1374 = vmatmul.bf16.gmra.mxu0 %v1361
    %v1375 = vpop.f32.mrf.mxu0
    %v1376 = vadd.f32 0.0, %v1375
    %v1377 = vpop.f32.mrf.mxu0
    %1378 = vdwg.mxu0
    %1379 = vrot.lane.b32.xlu0 %v1038, 104
    %v1380 = vpop.permute.xlu0 %1379
    %1381 = vrot.lane.b32.xlu0 %v1038, 72
    %v1382 = vpop.permute.xlu0 %1381
    %v1384 = vsel %vm225, %v1380, 0
    %v1387 = vsel %vm225, %v1382, 0
    %1389 = vmatpush.bf16.xpose.msra.mxu0 0
    %1390 = vmatpush.bf16.xpose.msra.mxu0 0
    %1391 = vmatpush.bf16.xpose.msra.mxu0 0
    %1392 = vmatpush.bf16.xpose.msra.mxu0 0
    %1393 = vmatpush.bf16.xpose.msra.mxu0 0
    %1394 = vmatpush.bf16.xpose.msra.mxu0 0
    %1395 = vmatpush.bf16.xpose.msra.mxu0 0
    %1396 = vmatpush.bf16.xpose.msra.mxu0 %v1387
    %1397 = vmatmul.bf16.gmra.mxu0 %v1384
    %v1398 = vpop.f32.mrf.mxu0
    %v1399 = vadd.f32 0.0, %v1398
    %v1400 = vpop.f32.mrf.mxu0
    %1401 = vdwg.mxu0
    %v1402 = vsel %vm269, -10000.0, %v1376
    %v1403 = vsel %vm270, -10000.0, %v1399
    %v1404 = vsel %vm225, %v1402, -inf
    %1405 = vmax.xlane.f32.xlu0 %v1404
    %v1406 = vpop.xlane.xlu0 %1405
    %v1407 = vsel %vm225, %v1403, -inf
    %1408 = vmax.xlane.f32.xlu0 %v1407
    %v1409 = vpop.xlane.xlu0 %1408
    %v1410 = vsub.f32 %v1402, %v1406
    %v1411 = vsub.f32 %v1403, %v1409
    %v1412 = vmul.f32 %v1410, 1.442695
    %v1413 = vpow.pop %v1412
    %v1414 = vmul.f32 %v1411, 1.442695
    %v1415 = vpow.pop %v1414
    %v1416 = vsel %vm225, %v1413, 0.0
    %1417 = vadd.xlane.f32.xlu0 %v1416
    %v1418 = vpop.xlane.xlu0 %1417
    %v1419 = vsel %vm225, %v1415, 0.0
    %1420 = vadd.xlane.f32.xlu0 %v1419
    %v1421 = vpop.xlane.xlu0 %1420
    %v1422 = vrcp.pop %v1418
    %v1423 = vrcp.pop %v1421
    %v1424 = vmul.f32 %v1413, %v1422
    %v1425 = vmul.f32 %v1415, %v1423
    %v1426 = vpack.c.bf16 %v1424, %v1424
    %v1427 = vpack.c.bf16 %v1425, %v1425
    %1428 = vrot.lane.b32.xlu0 %v1014, 40
    %v1429 = vpop.permute.xlu0 %1428
    %v1431 = vsel %vm225, %v1426, 0
    %v1434 = vsel %vm302, %v1429, 0
    %1436 = vmatpush.bf16.msra.mxu0 0
    %1437 = vmatpush.bf16.msra.mxu0 0
    %1438 = vmatpush.bf16.msra.mxu0 0
    %1439 = vmatpush.bf16.msra.mxu0 0
    %1440 = vmatpush.bf16.msra.mxu0 0
    %1441 = vmatpush.bf16.msra.mxu0 0
    %1442 = vmatpush.bf16.msra.mxu0 0
    %1443 = vmatpush.bf16.msra.mxu0 %v1434
    %1444 = vmatmul.bf16.gmra.mxu0 %v1431
    %v1445 = vpop.f32.mrf.mxu0
    %v1446 = vadd.f32 0.0, %v1445
    %v1447 = vpop.f32.mrf.mxu0
    %1448 = vdwg.mxu0
    %1449 = vrot.lane.b32.xlu0 %v1038, 40
    %v1450 = vpop.permute.xlu0 %1449
    %v1452 = vsel %vm225, %v1427, 0
    %v1455 = vsel %vm302, %v1450, 0
    %1457 = vmatpush.bf16.msra.mxu0 0
    %1458 = vmatpush.bf16.msra.mxu0 0
    %1459 = vmatpush.bf16.msra.mxu0 0
    %1460 = vmatpush.bf16.msra.mxu0 0
    %1461 = vmatpush.bf16.msra.mxu0 0
    %1462 = vmatpush.bf16.msra.mxu0 0
    %1463 = vmatpush.bf16.msra.mxu0 0
    %1464 = vmatpush.bf16.msra.mxu0 %v1455
    %1465 = vmatmul.bf16.gmra.mxu0 %v1452
    %v1466 = vpop.f32.mrf.mxu0
    %v1467 = vadd.f32 0.0, %v1466
    %v1468 = vpop.f32.mrf.mxu0
    %1469 = vdwg.mxu0
    %1472 = vrot.lane.b32.xlu0 %v1218, 8
    %v1473 = vpop.permute.xlu0 %1472
    %1474 = vrot.lane.b32.xlu0 %v1239, 8
    %v1475 = vpop.permute.xlu0 %1474
    %1480 = vrot.lane.b32.xlu0 %v1332, 16
    %v1481 = vpop.permute.xlu0 %1480
    %1482 = vrot.lane.b32.xlu0 %v1353, 16
    %v1483 = vpop.permute.xlu0 %1482
    %1488 = vrot.lane.b32.xlu0 %v1446, 24
    %v1489 = vpop.permute.xlu0 %1488
    %1490 = vrot.lane.b32.xlu0 %v1467, 24
    %v1491 = vpop.permute.xlu0 %1490
    %v1494 = vsel %vm225, %v1104, %v1473
    %v1495 = vsel %vm225, %v1125, %v1475
    %v1496 = vsel %vm708, %v1494, %v1481
    %v1497 = vsel %vm708, %v1495, %v1483
    %v1498 = vsel %vm711, %v1496, %v1489
    %v1499 = vsel %vm711, %v1497, %v1491
    %s1500 = scalar_lea.vmem %s15, 16
    %v1501 = vld [vmem:[%s1500] sm:$0xf]
    %v1502 = vld [vmem:[%s1500 + $0x4] sm:$0xf]
    %v1503 = vld [vmem:[%s1500 + $0x8] sm:$0xf]
    %v1504 = vld [vmem:[%s1500 + $0xc] sm:$0xf]
    %v1505 = vpack.c.bf16 %v1499, %v1498
    %s1506 = scalar_lea.vmem %s17, 1
    %v1507 = vld [vmem:[%s1506] sm:$0x1]
    %v1509 = vperm.slane %v1507, 0
    %v1515 = vunpack.c.l.b16 %v1501
    %v1516 = vunpack.c.l.b16 %v1502
    %v1517 = vunpack.c.l.b16 %v1503
    %v1518 = vunpack.c.l.b16 %v1504
    %v1519 = vpack.c.b16 %v1516, %v1515
    %v1520 = vpack.c.b16 %v1518, %v1517
    %v1524 = vsel %vm200, %v1505, 0
    %1526 = vmatpush.bf16.msra.mxu0 0
    %1527 = vmatpush.bf16.msra.mxu0 0
    %1528 = vmatpush.bf16.msra.mxu0 0
    %1529 = vmatpush.bf16.msra.mxu0 0
    %1530 = vmatpush.bf16.msra.mxu0 0
    %1531 = vmatpush.bf16.msra.mxu0 0
    %1532 = vmatpush.bf16.msra.mxu0 %v1520
    %1533 = vmatpush.bf16.msra.mxu0 %v1519
    %1534 = vmatmul.bf16.gmra.mxu0 %v1524
    %v1535 = vpop.f32.mrf.mxu0
    %v1536 = vadd.f32 %v1509, %v1535
    %v1537 = vpop.f32.mrf.mxu0
    %v1538 = vadd.f32 %v1509, %v1537
    %1539 = vdwg.mxu0
    %v1540 = vadd.f32 %v1536, %v968
    %v1541 = vadd.f32 %v1538, %v969
    %s1542 = scalar_lea.vmem %s19, 1
    %v1543 = vld [vmem:[%s1542] sm:$0x1]
    %s1544 = scalar_lea.vmem %s21, 1
    %v1545 = vld [vmem:[%s1544] sm:$0x1]
    %v1546 = vsel %vm200, %v1540, 0.0
    %1547 = vadd.xlane.f32.xlu0 %v1546
    %v1548 = vpop.xlane.xlu0 %1547
    %v1549 = vsel %vm200, %v1541, 0.0
    %1550 = vadd.xlane.f32.xlu0 %v1549
    %v1551 = vpop.xlane.xlu0 %1550
    %v1552 = vmul.f32 %v1548, %v768
    %v1553 = vmul.f32 %v1551, %v768
    %v1554 = vsub.f32 %v1540, %v1552
    %v1555 = vsub.f32 %v1541, %v1553
    %v1556 = vmul.f32 %v1554, %v1554
    %v1557 = vmul.f32 %v1555, %v1555
    %v1558 = vsel %vm200, %v1556, 0.0
    %1559 = vadd.xlane.f32.xlu0 %v1558
    %v1560 = vpop.xlane.xlu0 %1559
    %v1561 = vsel %vm200, %v1557, 0.0
    %1562 = vadd.xlane.f32.xlu0 %v1561
    %v1563 = vpop.xlane.xlu0 %1562
    %v1564 = vmul.f32 %v1560, %v768
    %v1565 = vmul.f32 %v1563, %v768
    %v1566 = vadd.f32 %v1564, 1e-05
    %v1567 = vadd.f32 %v1565, 1e-05
    %v1568 = vrsqrt.pop %v1566
    %v1569 = vmul.f32 %v1568, %v1566
    %v1570 = vmul.f32 %v1569, %v1568
    %v1571 = vmul.f32 0.5, %v1570
    %v1572 = vsub.f32 1.5, %v1571
    %v1573 = vmul.f32 %v1568, %v1572
    %vm1574 = vweird.f32 %v1566
    %vm1575 = vweird.f32 %v1568
    %vm1576 = vmor %vm1574, %vm1575
    %v1577 = vsel %vm1576, %v1568, %v1573
    %v1578 = vrsqrt.pop %v1567
    %v1579 = vmul.f32 %v1578, %v1567
    %v1580 = vmul.f32 %v1579, %v1578
    %v1581 = vmul.f32 0.5, %v1580
    %v1582 = vsub.f32 1.5, %v1581
    %v1583 = vmul.f32 %v1578, %v1582
    %vm1584 = vweird.f32 %v1567
    %vm1585 = vweird.f32 %v1578
    %vm1586 = vmor %vm1584, %vm1585
    %v1587 = vsel %vm1586, %v1578, %v1583
    %v1588 = vmul.f32 %v1554, %v1577
    %v1589 = vmul.f32 %v1555, %v1587
    %v1591 = vperm.slane %v1543, 0
    %v1593 = vmul.f32 %v1588, %v1591
    %v1594 = vmul.f32 %v1589, %v1591
    %v1596 = vperm.slane %v1545, 0
    %v1598 = vadd.f32 %v1593, %v1596
    %v1599 = vadd.f32 %v1594, %v1596
    %s1600 = scalar_lea.vmem %s23, 16
    %v1601 = vld [vmem:[%s1600] sm:$0xf]
    %v1602 = vld [vmem:[%s1600 + $0x4] sm:$0xf]
    %v1603 = vld [vmem:[%s1600 + $0x8] sm:$0xf]
    %v1604 = vld [vmem:[%s1600 + $0xc] sm:$0xf]
    %v1605 = vpack.c.bf16 %v1599, %v1598
    %s1606 = scalar_lea.vmem %s25, 1
    %v1607 = vld [vmem:[%s1606] sm:$0x1]
    %v1609 = vperm.slane %v1607, 0
    %v1615 = vunpack.c.l.b16 %v1601
    %v1616 = vunpack.c.l.b16 %v1602
    %v1617 = vunpack.c.l.b16 %v1603
    %v1618 = vunpack.c.l.b16 %v1604
    %v1619 = vpack.c.b16 %v1616, %v1615
    %v1620 = vpack.c.b16 %v1618, %v1617
    %v1624 = vsel %vm200, %v1605, 0
    %1626 = vmatpush.bf16.msra.mxu0 0
    %1627 = vmatpush.bf16.msra.mxu0 0
    %1628 = vmatpush.bf16.msra.mxu0 0
    %1629 = vmatpush.bf16.msra.mxu0 0
    %1630 = vmatpush.bf16.msra.mxu0 0
    %1631 = vmatpush.bf16.msra.mxu0 0
    %1632 = vmatpush.bf16.msra.mxu0 %v1620
    %1633 = vmatpush.bf16.msra.mxu0 %v1619
    %1634 = vmatmul.bf16.gmra.mxu0 %v1624
    %v1635 = vpop.f32.mrf.mxu0
    %v1636 = vadd.f32 %v1609, %v1635
    %v1637 = vpop.f32.mrf.mxu0
    %v1638 = vadd.f32 %v1609, %v1637
    %1639 = vdwg.mxu0
    %v1640 = vmax.f32 %v1636, 0.0
    %v1641 = vmax.f32 %v1638, 0.0
    %s1642 = scalar_lea.vmem %s27, 32
    %v1643 = vld [vmem:[%s1642] sm:$0xf]
    %v1644 = vld [vmem:[%s1642 + $0x4] sm:$0xf]
    %v1645 = vld [vmem:[%s1642 + $0x8] sm:$0xf]
    %v1646 = vld [vmem:[%s1642 + $0xc] sm:$0xf]
    %v1647 = vld [vmem:[%s1642 + $0x10] sm:$0xf]
    %v1648 = vld [vmem:[%s1642 + $0x14] sm:$0xf]
    %v1649 = vld [vmem:[%s1642 + $0x18] sm:$0xf]
    %v1650 = vld [vmem:[%s1642 + $0x1c] sm:$0xf]
    %v1651 = vpack.c.bf16 %v1641, %v1640
    %s1652 = scalar_lea.vmem %s29, 1
    %v1653 = vld [vmem:[%s1652] sm:$0x1]
    %v1655 = vperm.slane %v1653, 0
    %v1665 = vunpack.c.l.b16 %v1643
    %v1666 = vunpack.c.l.b16 %v1644
    %v1667 = vunpack.c.l.b16 %v1645
    %v1668 = vunpack.c.l.b16 %v1646
    %v1669 = vunpack.c.l.b16 %v1647
    %v1670 = vunpack.c.l.b16 %v1648
    %v1671 = vunpack.c.l.b16 %v1649
    %v1672 = vunpack.c.l.b16 %v1650
    %v1673 = vpack.c.b16 %v1666, %v1665
    %v1674 = vpack.c.b16 %v1668, %v1667
    %v1675 = vpack.c.b16 %v1670, %v1669
    %v1676 = vpack.c.b16 %v1672, %v1671
    %v1682 = vsel %vm894, %v1651, 0
    %1684 = vmatpush.bf16.msra.mxu0 0
    %1685 = vmatpush.bf16.msra.mxu0 0
    %1686 = vmatpush.bf16.msra.mxu0 0
    %1687 = vmatpush.bf16.msra.mxu0 0
    %1688 = vmatpush.bf16.msra.mxu0 %v1676
    %1689 = vmatpush.bf16.msra.mxu0 %v1675
    %1690 = vmatpush.bf16.msra.mxu0 %v1674
    %1691 = vmatpush.bf16.msra.mxu0 %v1673
    %1692 = vmatmul.bf16.gmra.mxu0 %v1682
    %v1693 = vpop.f32.mrf.mxu0
    %v1694 = vadd.f32 %v1655, %v1693
    %v1695 = vpop.f32.mrf.mxu0
    %v1696 = vadd.f32 %v1655, %v1695
    %1697 = vdwg.mxu0
    %v1698 = vadd.f32 %v1694, %v1598
    %v1699 = vadd.f32 %v1696, %v1599
    %s1700 = scalar_lea.vmem %s31, 1
    %v1701 = vld [vmem:[%s1700] sm:$0x1]
    %s1702 = scalar_lea.vmem %s33, 1
    %v1703 = vld [vmem:[%s1702] sm:$0x1]
    %v1704 = vsel %vm200, %v1698, 0.0
    %1705 = vadd.xlane.f32.xlu0 %v1704
    %v1706 = vpop.xlane.xlu0 %1705
    %v1707 = vsel %vm200, %v1699, 0.0
    %1708 = vadd.xlane.f32.xlu0 %v1707
    %v1709 = vpop.xlane.xlu0 %1708
    %v1710 = vmul.f32 %v1706, %v768
    %v1711 = vmul.f32 %v1709, %v768
    %v1712 = vsub.f32 %v1698, %v1710
    %v1713 = vsub.f32 %v1699, %v1711
    %v1714 = vmul.f32 %v1712, %v1712
    %v1715 = vmul.f32 %v1713, %v1713
    %v1716 = vsel %vm200, %v1714, 0.0
    %1717 = vadd.xlane.f32.xlu0 %v1716
    %v1718 = vpop.xlane.xlu0 %1717
    %v1719 = vsel %vm200, %v1715, 0.0
    %1720 = vadd.xlane.f32.xlu0 %v1719
    %v1721 = vpop.xlane.xlu0 %1720
    %v1722 = vmul.f32 %v1718, %v768
    %v1723 = vmul.f32 %v1721, %v768
    %v1724 = vadd.f32 %v1722, 1e-05
    %v1725 = vadd.f32 %v1723, 1e-05
    %v1726 = vrsqrt.pop %v1724
    %v1727 = vmul.f32 %v1726, %v1724
    %v1728 = vmul.f32 %v1727, %v1726
    %v1729 = vmul.f32 0.5, %v1728
    %v1730 = vsub.f32 1.5, %v1729
    %v1731 = vmul.f32 %v1726, %v1730
    %vm1732 = vweird.f32 %v1724
    %vm1733 = vweird.f32 %v1726
    %vm1734 = vmor %vm1732, %vm1733
    %v1735 = vsel %vm1734, %v1726, %v1731
    %v1736 = vrsqrt.pop %v1725
    %v1737 = vmul.f32 %v1736, %v1725
    %v1738 = vmul.f32 %v1737, %v1736
    %v1739 = vmul.f32 0.5, %v1738
    %v1740 = vsub.f32 1.5, %v1739
    %v1741 = vmul.f32 %v1736, %v1740
    %vm1742 = vweird.f32 %v1725
    %vm1743 = vweird.f32 %v1736
    %vm1744 = vmor %vm1742, %vm1743
    %v1745 = vsel %vm1744, %v1736, %v1741
    %v1746 = vmul.f32 %v1712, %v1735
    %v1747 = vmul.f32 %v1713, %v1745
    %v1749 = vperm.slane %v1701, 0
    %v1751 = vmul.f32 %v1746, %v1749
    %v1752 = vmul.f32 %v1747, %v1749
    %v1754 = vperm.slane %v1703, 0
    %v1756 = vadd.f32 %v1751, %v1754
    %v1757 = vadd.f32 %v1752, %v1754
    %v1758 = vld [vmem:[%s3] sm:$0xff]
    %v1759 = vld [vmem:[%s3 + $0x8] sm:$0xff]
    %v1761 = vrot.slane %v169, 1
    %v1762 = vperm.slane %v169, 0
    %v1763 = vperm.slane %v1761, 0
    %v1766 = vmul.f32 %v170, %v1762
    %v1767 = vmul.f32 %v170, %v1763
    %v1768 = vld [vmem:[%s35] sm:$0xf]
    %v1769 = vld [vmem:[%s35 + $0x4] sm:$0xf]
    %v1770 = vld [vmem:[%s35 + $0x8] sm:$0xf]
    %v1771 = vld [vmem:[%s35 + $0xc] sm:$0xf]
    %v1772 = vpack.c.bf16 %v1759, %v1758
    %v1773 = vld [vmem:[%s37] sm:$0x1]
    %v1775 = vperm.slane %v1773, 0
    %v1781 = vunpack.c.l.b16 %v1768
    %v1782 = vunpack.c.l.b16 %v1769
    %v1783 = vunpack.c.l.b16 %v1770
    %v1784 = vunpack.c.l.b16 %v1771
    %v1785 = vpack.c.b16 %v1782, %v1781
    %v1786 = vpack.c.b16 %v1784, %v1783
    %v1790 = vsel %vm200, %v1772, 0
    %1792 = vmatpush.bf16.msra.mxu0 0
    %1793 = vmatpush.bf16.msra.mxu0 0
    %1794 = vmatpush.bf16.msra.mxu0 0
    %1795 = vmatpush.bf16.msra.mxu0 0
    %1796 = vmatpush.bf16.msra.mxu0 0
    %1797 = vmatpush.bf16.msra.mxu0 0
    %1798 = vmatpush.bf16.msra.mxu0 %v1786
    %1799 = vmatpush.bf16.msra.mxu0 %v1785
    %1800 = vmatmul.bf16.gmra.mxu0 %v1790
    %v1801 = vpop.f32.mrf.mxu0
    %v1802 = vadd.f32 %v1775, %v1801
    %v1803 = vpop.f32.mrf.mxu0
    %v1804 = vadd.f32 %v1775, %v1803
    %1805 = vdwg.mxu0
    %v1806 = vpack.c.bf16 %v1802, %v1802
    %v1807 = vpack.c.bf16 %v1804, %v1804
    %v1809 = vunpack.c.l.b16 %v1806
    %v1810 = vpack.c.b16 %v1809, %v1809
    %1811 = vrot.lane.b32.xlu0 %v1810, 96
    %v1812 = vpop.permute.xlu0 %1811
    %v1814 = vsel %vm225, %v1806, 0
    %v1817 = vsel %vm225, %v1812, 0
    %1819 = vmatpush.bf16.xpose.msra.mxu0 0
    %1820 = vmatpush.bf16.xpose.msra.mxu0 0
    %1821 = vmatpush.bf16.xpose.msra.mxu0 0
    %1822 = vmatpush.bf16.xpose.msra.mxu0 0
    %1823 = vmatpush.bf16.xpose.msra.mxu0 0
    %1824 = vmatpush.bf16.xpose.msra.mxu0 0
    %1825 = vmatpush.bf16.xpose.msra.mxu0 0
    %1826 = vmatpush.bf16.xpose.msra.mxu0 %v1817
    %1827 = vmatmul.bf16.gmra.mxu0 %v1814
    %v1828 = vpop.f32.mrf.mxu0
    %v1829 = vadd.f32 0.0, %v1828
    %v1830 = vpop.f32.mrf.mxu0
    %1831 = vdwg.mxu0
    %v1833 = vunpack.c.l.b16 %v1807
    %v1834 = vpack.c.b16 %v1833, %v1833
    %1835 = vrot.lane.b32.xlu0 %v1834, 96
    %v1836 = vpop.permute.xlu0 %1835
    %v1838 = vsel %vm225, %v1807, 0
    %v1841 = vsel %vm225, %v1836, 0
    %1843 = vmatpush.bf16.xpose.msra.mxu0 0
    %1844 = vmatpush.bf16.xpose.msra.mxu0 0
    %1845 = vmatpush.bf16.xpose.msra.mxu0 0
    %1846 = vmatpush.bf16.xpose.msra.mxu0 0
    %1847 = vmatpush.bf16.xpose.msra.mxu0 0
    %1848 = vmatpush.bf16.xpose.msra.mxu0 0
    %1849 = vmatpush.bf16.xpose.msra.mxu0 0
    %1850 = vmatpush.bf16.xpose.msra.mxu0 %v1841
    %1851 = vmatmul.bf16.gmra.mxu0 %v1838
    %v1852 = vpop.f32.mrf.mxu0
    %v1853 = vadd.f32 0.0, %v1852
    %v1854 = vpop.f32.mrf.mxu0
    %1855 = vdwg.mxu0
    %vm1856 = vcmp.eq.f32.partialorder %v1766, 0.0
    %vm1857 = vcmp.eq.f32.partialorder %v1767, 0.0
    %v1858 = vsel %vm1856, -10000.0, %v1829
    %v1859 = vsel %vm1857, -10000.0, %v1853
    %v1860 = vsel %vm225, %v1858, -inf
    %1861 = vmax.xlane.f32.xlu0 %v1860
    %v1862 = vpop.xlane.xlu0 %1861
    %v1863 = vsel %vm225, %v1859, -inf
    %1864 = vmax.xlane.f32.xlu0 %v1863
    %v1865 = vpop.xlane.xlu0 %1864
    %v1866 = vsub.f32 %v1858, %v1862
    %v1867 = vsub.f32 %v1859, %v1865
    %v1868 = vmul.f32 %v1866, 1.442695
    %v1869 = vpow.pop %v1868
    %v1870 = vmul.f32 %v1867, 1.442695
    %v1871 = vpow.pop %v1870
    %v1872 = vsel %vm225, %v1869, 0.0
    %1873 = vadd.xlane.f32.xlu0 %v1872
    %v1874 = vpop.xlane.xlu0 %1873
    %v1875 = vsel %vm225, %v1871, 0.0
    %1876 = vadd.xlane.f32.xlu0 %v1875
    %v1877 = vpop.xlane.xlu0 %1876
    %v1878 = vrcp.pop %v1874
    %v1879 = vrcp.pop %v1877
    %v1880 = vmul.f32 %v1869, %v1878
    %v1881 = vmul.f32 %v1871, %v1879
    %v1882 = vpack.c.bf16 %v1880, %v1880
    %v1883 = vpack.c.bf16 %v1881, %v1881
    %1884 = vrot.lane.b32.xlu0 %v1810, 64
    %v1885 = vpop.permute.xlu0 %1884
    %v1887 = vsel %vm225, %v1882, 0
    %v1890 = vsel %vm302, %v1885, 0
    %1892 = vmatpush.bf16.msra.mxu0 0
    %1893 = vmatpush.bf16.msra.mxu0 0
    %1894 = vmatpush.bf16.msra.mxu0 0
    %1895 = vmatpush.bf16.msra.mxu0 0
    %1896 = vmatpush.bf16.msra.mxu0 0
    %1897 = vmatpush.bf16.msra.mxu0 0
    %1898 = vmatpush.bf16.msra.mxu0 0
    %1899 = vmatpush.bf16.msra.mxu0 %v1890
    %1900 = vmatmul.bf16.gmra.mxu0 %v1887
    %v1901 = vpop.f32.mrf.mxu0
    %v1902 = vadd.f32 0.0, %v1901
    %v1903 = vpop.f32.mrf.mxu0
    %1904 = vdwg.mxu0
    %1905 = vrot.lane.b32.xlu0 %v1834, 64
    %v1906 = vpop.permute.xlu0 %1905
    %v1908 = vsel %vm225, %v1883, 0
    %v1911 = vsel %vm302, %v1906, 0
    %1913 = vmatpush.bf16.msra.mxu0 0
    %1914 = vmatpush.bf16.msra.mxu0 0
    %1915 = vmatpush.bf16.msra.mxu0 0
    %1916 = vmatpush.bf16.msra.mxu0 0
    %1917 = vmatpush.bf16.msra.mxu0 0
    %1918 = vmatpush.bf16.msra.mxu0 0
    %1919 = vmatpush.bf16.msra.mxu0 0
    %1920 = vmatpush.bf16.msra.mxu0 %v1911
    %1921 = vmatmul.bf16.gmra.mxu0 %v1908
    %v1922 = vpop.f32.mrf.mxu0
    %v1923 = vadd.f32 0.0, %v1922
    %v1924 = vpop.f32.mrf.mxu0
    %1925 = vdwg.mxu0
    %1926 = vrot.lane.b32.xlu0 %v1810, 120
    %v1927 = vpop.permute.xlu0 %1926
    %1928 = vrot.lane.b32.xlu0 %v1810, 88
    %v1929 = vpop.permute.xlu0 %1928
    %v1931 = vsel %vm225, %v1927, 0
    %v1934 = vsel %vm225, %v1929, 0
    %1936 = vmatpush.bf16.xpose.msra.mxu0 0
    %1937 = vmatpush.bf16.xpose.msra.mxu0 0
    %1938 = vmatpush.bf16.xpose.msra.mxu0 0
    %1939 = vmatpush.bf16.xpose.msra.mxu0 0
    %1940 = vmatpush.bf16.xpose.msra.mxu0 0
    %1941 = vmatpush.bf16.xpose.msra.mxu0 0
    %1942 = vmatpush.bf16.xpose.msra.mxu0 0
    %1943 = vmatpush.bf16.xpose.msra.mxu0 %v1934
    %1944 = vmatmul.bf16.gmra.mxu0 %v1931
    %v1945 = vpop.f32.mrf.mxu0
    %v1946 = vadd.f32 0.0, %v1945
    %v1947 = vpop.f32.mrf.mxu0
    %1948 = vdwg.mxu0
    %1949 = vrot.lane.b32.xlu0 %v1834, 120
    %v1950 = vpop.permute.xlu0 %1949
    %1951 = vrot.lane.b32.xlu0 %v1834, 88
    %v1952 = vpop.permute.xlu0 %1951
    %v1954 = vsel %vm225, %v1950, 0
    %v1957 = vsel %vm225, %v1952, 0
    %1959 = vmatpush.bf16.xpose.msra.mxu0 0
    %1960 = vmatpush.bf16.xpose.msra.mxu0 0
    %1961 = vmatpush.bf16.xpose.msra.mxu0 0
    %1962 = vmatpush.bf16.xpose.msra.mxu0 0
    %1963 = vmatpush.bf16.xpose.msra.mxu0 0
    %1964 = vmatpush.bf16.xpose.msra.mxu0 0
    %1965 = vmatpush.bf16.xpose.msra.mxu0 0
    %1966 = vmatpush.bf16.xpose.msra.mxu0 %v1957
    %1967 = vmatmul.bf16.gmra.mxu0 %v1954
    %v1968 = vpop.f32.mrf.mxu0
    %v1969 = vadd.f32 0.0, %v1968
    %v1970 = vpop.f32.mrf.mxu0
    %1971 = vdwg.mxu0
    %v1972 = vsel %vm1856, -10000.0, %v1946
    %v1973 = vsel %vm1857, -10000.0, %v1969
    %v1974 = vsel %vm225, %v1972, -inf
    %1975 = vmax.xlane.f32.xlu0 %v1974
    %v1976 = vpop.xlane.xlu0 %1975
    %v1977 = vsel %vm225, %v1973, -inf
    %1978 = vmax.xlane.f32.xlu0 %v1977
    %v1979 = vpop.xlane.xlu0 %1978
    %v1980 = vsub.f32 %v1972, %v1976
    %v1981 = vsub.f32 %v1973, %v1979
    %v1982 = vmul.f32 %v1980, 1.442695
    %v1983 = vpow.pop %v1982
    %v1984 = vmul.f32 %v1981, 1.442695
    %v1985 = vpow.pop %v1984
    %v1986 = vsel %vm225, %v1983, 0.0
    %1987 = vadd.xlane.f32.xlu0 %v1986
    %v1988 = vpop.xlane.xlu0 %1987
    %v1989 = vsel %vm225, %v1985, 0.0
    %1990 = vadd.xlane.f32.xlu0 %v1989
    %v1991 = vpop.xlane.xlu0 %1990
    %v1992 = vrcp.pop %v1988
    %v1993 = vrcp.pop %v1991
    %v1994 = vmul.f32 %v1983, %v1992
    %v1995 = vmul.f32 %v1985, %v1993
    %v1996 = vpack.c.bf16 %v1994, %v1994
    %v1997 = vpack.c.bf16 %v1995, %v1995
    %1998 = vrot.lane.b32.xlu0 %v1810, 56
    %v1999 = vpop.permute.xlu0 %1998
    %v2001 = vsel %vm225, %v1996, 0
    %v2004 = vsel %vm302, %v1999, 0
    %2006 = vmatpush.bf16.msra.mxu0 0
    %2007 = vmatpush.bf16.msra.mxu0 0
    %2008 = vmatpush.bf16.msra.mxu0 0
    %2009 = vmatpush.bf16.msra.mxu0 0
    %2010 = vmatpush.bf16.msra.mxu0 0
    %2011 = vmatpush.bf16.msra.mxu0 0
    %2012 = vmatpush.bf16.msra.mxu0 0
    %2013 = vmatpush.bf16.msra.mxu0 %v2004
    %2014 = vmatmul.bf16.gmra.mxu0 %v2001
    %v2015 = vpop.f32.mrf.mxu0
    %v2016 = vadd.f32 0.0, %v2015
    %v2017 = vpop.f32.mrf.mxu0
    %2018 = vdwg.mxu0
    %2019 = vrot.lane.b32.xlu0 %v1834, 56
    %v2020 = vpop.permute.xlu0 %2019
    %v2022 = vsel %vm225, %v1997, 0
    %v2025 = vsel %vm302, %v2020, 0
    %2027 = vmatpush.bf16.msra.mxu0 0
    %2028 = vmatpush.bf16.msra.mxu0 0
    %2029 = vmatpush.bf16.msra.mxu0 0
    %2030 = vmatpush.bf16.msra.mxu0 0
    %2031 = vmatpush.bf16.msra.mxu0 0
    %2032 = vmatpush.bf16.msra.mxu0 0
    %2033 = vmatpush.bf16.msra.mxu0 0
    %2034 = vmatpush.bf16.msra.mxu0 %v2025
    %2035 = vmatmul.bf16.gmra.mxu0 %v2022
    %v2036 = vpop.f32.mrf.mxu0
    %v2037 = vadd.f32 0.0, %v2036
    %v2038 = vpop.f32.mrf.mxu0
    %2039 = vdwg.mxu0
    %2040 = vrot.lane.b32.xlu0 %v1810, 112
    %v2041 = vpop.permute.xlu0 %2040
    %2042 = vrot.lane.b32.xlu0 %v1810, 80
    %v2043 = vpop.permute.xlu0 %2042
    %v2045 = vsel %vm225, %v2041, 0
    %v2048 = vsel %vm225, %v2043, 0
    %2050 = vmatpush.bf16.xpose.msra.mxu0 0
    %2051 = vmatpush.bf16.xpose.msra.mxu0 0
    %2052 = vmatpush.bf16.xpose.msra.mxu0 0
    %2053 = vmatpush.bf16.xpose.msra.mxu0 0
    %2054 = vmatpush.bf16.xpose.msra.mxu0 0
    %2055 = vmatpush.bf16.xpose.msra.mxu0 0
    %2056 = vmatpush.bf16.xpose.msra.mxu0 0
    %2057 = vmatpush.bf16.xpose.msra.mxu0 %v2048
    %2058 = vmatmul.bf16.gmra.mxu0 %v2045
    %v2059 = vpop.f32.mrf.mxu0
    %v2060 = vadd.f32 0.0, %v2059
    %v2061 = vpop.f32.mrf.mxu0
    %2062 = vdwg.mxu0
    %2063 = vrot.lane.b32.xlu0 %v1834, 112
    %v2064 = vpop.permute.xlu0 %2063
    %2065 = vrot.lane.b32.xlu0 %v1834, 80
    %v2066 = vpop.permute.xlu0 %2065
    %v2068 = vsel %vm225, %v2064, 0
    %v2071 = vsel %vm225, %v2066, 0
    %2073 = vmatpush.bf16.xpose.msra.mxu0 0
    %2074 = vmatpush.bf16.xpose.msra.mxu0 0
    %2075 = vmatpush.bf16.xpose.msra.mxu0 0
    %2076 = vmatpush.bf16.xpose.msra.mxu0 0
    %2077 = vmatpush.bf16.xpose.msra.mxu0 0
    %2078 = vmatpush.bf16.xpose.msra.mxu0 0
    %2079 = vmatpush.bf16.xpose.msra.mxu0 0
    %2080 = vmatpush.bf16.xpose.msra.mxu0 %v2071
    %2081 = vmatmul.bf16.gmra.mxu0 %v2068
    %v2082 = vpop.f32.mrf.mxu0
    %v2083 = vadd.f32 0.0, %v2082
    %v2084 = vpop.f32.mrf.mxu0
    %2085 = vdwg.mxu0
    %v2086 = vsel %vm1856, -10000.0, %v2060
    %v2087 = vsel %vm1857, -10000.0, %v2083
    %v2088 = vsel %vm225, %v2086, -inf
    %2089 = vmax.xlane.f32.xlu0 %v2088
    %v2090 = vpop.xlane.xlu0 %2089
    %v2091 = vsel %vm225, %v2087, -inf
    %2092 = vmax.xlane.f32.xlu0 %v2091
    %v2093 = vpop.xlane.xlu0 %2092
    %v2094 = vsub.f32 %v2086, %v2090
    %v2095 = vsub.f32 %v2087, %v2093
    %v2096 = vmul.f32 %v2094, 1.442695
    %v2097 = vpow.pop %v2096
    %v2098 = vmul.f32 %v2095, 1.442695
    %v2099 = vpow.pop %v2098
    %v2100 = vsel %vm225, %v2097, 0.0
    %2101 = vadd.xlane.f32.xlu0 %v2100
    %v2102 = vpop.xlane.xlu0 %2101
    %v2103 = vsel %vm225, %v2099, 0.0
    %2104 = vadd.xlane.f32.xlu0 %v2103
    %v2105 = vpop.xlane.xlu0 %2104
    %v2106 = vrcp.pop %v2102
    %v2107 = vrcp.pop %v2105
    %v2108 = vmul.f32 %v2097, %v2106
    %v2109 = vmul.f32 %v2099, %v2107
    %v2110 = vpack.c.bf16 %v2108, %v2108
    %v2111 = vpack.c.bf16 %v2109, %v2109
    %2112 = vrot.lane.b32.xlu0 %v1810, 48
    %v2113 = vpop.permute.xlu0 %2112
    %v2115 = vsel %vm225, %v2110, 0
    %v2118 = vsel %vm302, %v2113, 0
    %2120 = vmatpush.bf16.msra.mxu0 0
    %2121 = vmatpush.bf16.msra.mxu0 0
    %2122 = vmatpush.bf16.msra.mxu0 0
    %2123 = vmatpush.bf16.msra.mxu0 0
    %2124 = vmatpush.bf16.msra.mxu0 0
    %2125 = vmatpush.bf16.msra.mxu0 0
    %2126 = vmatpush.bf16.msra.mxu0 0
    %2127 = vmatpush.bf16.msra.mxu0 %v2118
    %2128 = vmatmul.bf16.gmra.mxu0 %v2115
    %v2129 = vpop.f32.mrf.mxu0
    %v2130 = vadd.f32 0.0, %v2129
    %v2131 = vpop.f32.mrf.mxu0
    %2132 = vdwg.mxu0
    %2133 = vrot.lane.b32.xlu0 %v1834, 48
    %v2134 = vpop.permute.xlu0 %2133
    %v2136 = vsel %vm225, %v2111, 0
    %v2139 = vsel %vm302, %v2134, 0
    %2141 = vmatpush.bf16.msra.mxu0 0
    %2142 = vmatpush.bf16.msra.mxu0 0
    %2143 = vmatpush.bf16.msra.mxu0 0
    %2144 = vmatpush.bf16.msra.mxu0 0
    %2145 = vmatpush.bf16.msra.mxu0 0
    %2146 = vmatpush.bf16.msra.mxu0 0
    %2147 = vmatpush.bf16.msra.mxu0 0
    %2148 = vmatpush.bf16.msra.mxu0 %v2139
    %2149 = vmatmul.bf16.gmra.mxu0 %v2136
    %v2150 = vpop.f32.mrf.mxu0
    %v2151 = vadd.f32 0.0, %v2150
    %v2152 = vpop.f32.mrf.mxu0
    %2153 = vdwg.mxu0
    %2154 = vrot.lane.b32.xlu0 %v1810, 104
    %v2155 = vpop.permute.xlu0 %2154
    %2156 = vrot.lane.b32.xlu0 %v1810, 72
    %v2157 = vpop.permute.xlu0 %2156
    %v2159 = vsel %vm225, %v2155, 0
    %v2162 = vsel %vm225, %v2157, 0
    %2164 = vmatpush.bf16.xpose.msra.mxu0 0
    %2165 = vmatpush.bf16.xpose.msra.mxu0 0
    %2166 = vmatpush.bf16.xpose.msra.mxu0 0
    %2167 = vmatpush.bf16.xpose.msra.mxu0 0
    %2168 = vmatpush.bf16.xpose.msra.mxu0 0
    %2169 = vmatpush.bf16.xpose.msra.mxu0 0
    %2170 = vmatpush.bf16.xpose.msra.mxu0 0
    %2171 = vmatpush.bf16.xpose.msra.mxu0 %v2162
    %2172 = vmatmul.bf16.gmra.mxu0 %v2159
    %v2173 = vpop.f32.mrf.mxu0
    %v2174 = vadd.f32 0.0, %v2173
    %v2175 = vpop.f32.mrf.mxu0
    %2176 = vdwg.mxu0
    %2177 = vrot.lane.b32.xlu0 %v1834, 104
    %v2178 = vpop.permute.xlu0 %2177
    %2179 = vrot.lane.b32.xlu0 %v1834, 72
    %v2180 = vpop.permute.xlu0 %2179
    %v2182 = vsel %vm225, %v2178, 0
    %v2185 = vsel %vm225, %v2180, 0
    %2187 = vmatpush.bf16.xpose.msra.mxu0 0
    %2188 = vmatpush.bf16.xpose.msra.mxu0 0
    %2189 = vmatpush.bf16.xpose.msra.mxu0 0
    %2190 = vmatpush.bf16.xpose.msra.mxu0 0
    %2191 = vmatpush.bf16.xpose.msra.mxu0 0
    %2192 = vmatpush.bf16.xpose.msra.mxu0 0
    %2193 = vmatpush.bf16.xpose.msra.mxu0 0
    %2194 = vmatpush.bf16.xpose.msra.mxu0 %v2185
    %2195 = vmatmul.bf16.gmra.mxu0 %v2182
    %v2196 = vpop.f32.mrf.mxu0
    %v2197 = vadd.f32 0.0, %v2196
    %v2198 = vpop.f32.mrf.mxu0
    %2199 = vdwg.mxu0
    %v2200 = vsel %vm1856, -10000.0, %v2174
    %v2201 = vsel %vm1857, -10000.0, %v2197
    %v2202 = vsel %vm225, %v2200, -inf
    %2203 = vmax.xlane.f32.xlu0 %v2202
    %v2204 = vpop.xlane.xlu0 %2203
    %v2205 = vsel %vm225, %v2201, -inf
    %2206 = vmax.xlane.f32.xlu0 %v2205
    %v2207 = vpop.xlane.xlu0 %2206
    %v2208 = vsub.f32 %v2200, %v2204
    %v2209 = vsub.f32 %v2201, %v2207
    %v2210 = vmul.f32 %v2208, 1.442695
    %v2211 = vpow.pop %v2210
    %v2212 = vmul.f32 %v2209, 1.442695
    %v2213 = vpow.pop %v2212
    %v2214 = vsel %vm225, %v2211, 0.0
    %2215 = vadd.xlane.f32.xlu0 %v2214
    %v2216 = vpop.xlane.xlu0 %2215
    %v2217 = vsel %vm225, %v2213, 0.0
    %2218 = vadd.xlane.f32.xlu0 %v2217
    %v2219 = vpop.xlane.xlu0 %2218
    %v2220 = vrcp.pop %v2216
    %v2221 = vrcp.pop %v2219
    %v2222 = vmul.f32 %v2211, %v2220
    %v2223 = vmul.f32 %v2213, %v2221
    %v2224 = vpack.c.bf16 %v2222, %v2222
    %v2225 = vpack.c.bf16 %v2223, %v2223
    %2226 = vrot.lane.b32.xlu0 %v1810, 40
    %v2227 = vpop.permute.xlu0 %2226
    %v2229 = vsel %vm225, %v2224, 0
    %v2232 = vsel %vm302, %v2227, 0
    %2234 = vmatpush.bf16.msra.mxu0 0
    %2235 = vmatpush.bf16.msra.mxu0 0
    %2236 = vmatpush.bf16.msra.mxu0 0
    %2237 = vmatpush.bf16.msra.mxu0 0
    %2238 = vmatpush.bf16.msra.mxu0 0
    %2239 = vmatpush.bf16.msra.mxu0 0
    %2240 = vmatpush.bf16.msra.mxu0 0
    %2241 = vmatpush.bf16.msra.mxu0 %v2232
    %2242 = vmatmul.bf16.gmra.mxu0 %v2229
    %v2243 = vpop.f32.mrf.mxu0
    %v2244 = vadd.f32 0.0, %v2243
    %v2245 = vpop.f32.mrf.mxu0
    %2246 = vdwg.mxu0
    %2247 = vrot.lane.b32.xlu0 %v1834, 40
    %v2248 = vpop.permute.xlu0 %2247
    %v2250 = vsel %vm225, %v2225, 0
    %v2253 = vsel %vm302, %v2248, 0
    %2255 = vmatpush.bf16.msra.mxu0 0
    %2256 = vmatpush.bf16.msra.mxu0 0
    %2257 = vmatpush.bf16.msra.mxu0 0
    %2258 = vmatpush.bf16.msra.mxu0 0
    %2259 = vmatpush.bf16.msra.mxu0 0
    %2260 = vmatpush.bf16.msra.mxu0 0
    %2261 = vmatpush.bf16.msra.mxu0 0
    %2262 = vmatpush.bf16.msra.mxu0 %v2253
    %2263 = vmatmul.bf16.gmra.mxu0 %v2250
    %v2264 = vpop.f32.mrf.mxu0
    %v2265 = vadd.f32 0.0, %v2264
    %v2266 = vpop.f32.mrf.mxu0
    %2267 = vdwg.mxu0
    %2270 = vrot.lane.b32.xlu0 %v2016, 8
    %v2271 = vpop.permute.xlu0 %2270
    %2272 = vrot.lane.b32.xlu0 %v2037, 8
    %v2273 = vpop.permute.xlu0 %2272
    %2278 = vrot.lane.b32.xlu0 %v2130, 16
    %v2279 = vpop.permute.xlu0 %2278
    %2280 = vrot.lane.b32.xlu0 %v2151, 16
    %v2281 = vpop.permute.xlu0 %2280
    %2286 = vrot.lane.b32.xlu0 %v2244, 24
    %v2287 = vpop.permute.xlu0 %2286
    %2288 = vrot.lane.b32.xlu0 %v2265, 24
    %v2289 = vpop.permute.xlu0 %2288
    %v2292 = vsel %vm225, %v1902, %v2271
    %v2293 = vsel %vm225, %v1923, %v2273
    %v2294 = vsel %vm708, %v2292, %v2279
    %v2295 = vsel %vm708, %v2293, %v2281
    %v2296 = vsel %vm711, %v2294, %v2287
    %v2297 = vsel %vm711, %v2295, %v2289
    %v2298 = vld [vmem:[%s39] sm:$0xf]
    %v2299 = vld [vmem:[%s39 + $0x4] sm:$0xf]
    %v2300 = vld [vmem:[%s39 + $0x8] sm:$0xf]
    %v2301 = vld [vmem:[%s39 + $0xc] sm:$0xf]
    %v2302 = vpack.c.bf16 %v2297, %v2296
    %v2303 = vld [vmem:[%s41] sm:$0x1]
    %v2305 = vperm.slane %v2303, 0
    %v2311 = vunpack.c.l.b16 %v2298
    %v2312 = vunpack.c.l.b16 %v2299
    %v2313 = vunpack.c.l.b16 %v2300
    %v2314 = vunpack.c.l.b16 %v2301
    %v2315 = vpack.c.b16 %v2312, %v2311
    %v2316 = vpack.c.b16 %v2314, %v2313
    %v2320 = vsel %vm200, %v2302, 0
    %2322 = vmatpush.bf16.msra.mxu0 0
    %2323 = vmatpush.bf16.msra.mxu0 0
    %2324 = vmatpush.bf16.msra.mxu0 0
    %2325 = vmatpush.bf16.msra.mxu0 0
    %2326 = vmatpush.bf16.msra.mxu0 0
    %2327 = vmatpush.bf16.msra.mxu0 0
    %2328 = vmatpush.bf16.msra.mxu0 %v2316
    %2329 = vmatpush.bf16.msra.mxu0 %v2315
    %2330 = vmatmul.bf16.gmra.mxu0 %v2320
    %v2331 = vpop.f32.mrf.mxu0
    %v2332 = vadd.f32 %v2305, %v2331
    %v2333 = vpop.f32.mrf.mxu0
    %v2334 = vadd.f32 %v2305, %v2333
    %2335 = vdwg.mxu0
    %v2336 = vadd.f32 %v2332, %v1758
    %v2337 = vadd.f32 %v2334, %v1759
    %v2338 = vld [vmem:[%s43] sm:$0x1]
    %v2339 = vld [vmem:[%s45] sm:$0x1]
    %v2340 = vsel %vm200, %v2336, 0.0
    %2341 = vadd.xlane.f32.xlu0 %v2340
    %v2342 = vpop.xlane.xlu0 %2341
    %v2343 = vsel %vm200, %v2337, 0.0
    %2344 = vadd.xlane.f32.xlu0 %v2343
    %v2345 = vpop.xlane.xlu0 %2344
    %v2346 = vmul.f32 %v2342, %v768
    %v2347 = vmul.f32 %v2345, %v768
    %v2348 = vsub.f32 %v2336, %v2346
    %v2349 = vsub.f32 %v2337, %v2347
    %v2350 = vmul.f32 %v2348, %v2348
    %v2351 = vmul.f32 %v2349, %v2349
    %v2352 = vsel %vm200, %v2350, 0.0
    %2353 = vadd.xlane.f32.xlu0 %v2352
    %v2354 = vpop.xlane.xlu0 %2353
    %v2355 = vsel %vm200, %v2351, 0.0
    %2356 = vadd.xlane.f32.xlu0 %v2355
    %v2357 = vpop.xlane.xlu0 %2356
    %v2358 = vmul.f32 %v2354, %v768
    %v2359 = vmul.f32 %v2357, %v768
    %v2360 = vadd.f32 %v2358, 1e-05
    %v2361 = vadd.f32 %v2359, 1e-05
    %v2362 = vrsqrt.pop %v2360
    %v2363 = vmul.f32 %v2362, %v2360
    %v2364 = vmul.f32 %v2363, %v2362
    %v2365 = vmul.f32 0.5, %v2364
    %v2366 = vsub.f32 1.5, %v2365
    %v2367 = vmul.f32 %v2362, %v2366
    %vm2368 = vweird.f32 %v2360
    %vm2369 = vweird.f32 %v2362
    %vm2370 = vmor %vm2368, %vm2369
    %v2371 = vsel %vm2370, %v2362, %v2367
    %v2372 = vrsqrt.pop %v2361
    %v2373 = vmul.f32 %v2372, %v2361
    %v2374 = vmul.f32 %v2373, %v2372
    %v2375 = vmul.f32 0.5, %v2374
    %v2376 = vsub.f32 1.5, %v2375
    %v2377 = vmul.f32 %v2372, %v2376
    %vm2378 = vweird.f32 %v2361
    %vm2379 = vweird.f32 %v2372
    %vm2380 = vmor %vm2378, %vm2379
    %v2381 = vsel %vm2380, %v2372, %v2377
    %v2382 = vmul.f32 %v2348, %v2371
    %v2383 = vmul.f32 %v2349, %v2381
    %v2385 = vperm.slane %v2338, 0
    %v2387 = vmul.f32 %v2382, %v2385
    %v2388 = vmul.f32 %v2383, %v2385
    %v2390 = vperm.slane %v2339, 0
    %v2392 = vadd.f32 %v2387, %v2390
    %v2393 = vadd.f32 %v2388, %v2390
    %v2394 = vld [vmem:[%s47] sm:$0xf]
    %v2395 = vld [vmem:[%s47 + $0x4] sm:$0xf]
    %v2396 = vld [vmem:[%s47 + $0x8] sm:$0xf]
    %v2397 = vld [vmem:[%s47 + $0xc] sm:$0xf]
    %v2398 = vpack.c.bf16 %v2393, %v2392
    %v2399 = vld [vmem:[%s49] sm:$0x1]
    %v2401 = vperm.slane %v2399, 0
    %v2407 = vunpack.c.l.b16 %v2394
    %v2408 = vunpack.c.l.b16 %v2395
    %v2409 = vunpack.c.l.b16 %v2396
    %v2410 = vunpack.c.l.b16 %v2397
    %v2411 = vpack.c.b16 %v2408, %v2407
    %v2412 = vpack.c.b16 %v2410, %v2409
    %v2416 = vsel %vm200, %v2398, 0
    %2418 = vmatpush.bf16.msra.mxu0 0
    %2419 = vmatpush.bf16.msra.mxu0 0
    %2420 = vmatpush.bf16.msra.mxu0 0
    %2421 = vmatpush.bf16.msra.mxu0 0
    %2422 = vmatpush.bf16.msra.mxu0 0
    %2423 = vmatpush.bf16.msra.mxu0 0
    %2424 = vmatpush.bf16.msra.mxu0 %v2412
    %2425 = vmatpush.bf16.msra.mxu0 %v2411
    %2426 = vmatmul.bf16.gmra.mxu0 %v2416
    %v2427 = vpop.f32.mrf.mxu0
    %v2428 = vadd.f32 %v2401, %v2427
    %v2429 = vpop.f32.mrf.mxu0
    %v2430 = vadd.f32 %v2401, %v2429
    %2431 = vdwg.mxu0
    %v2432 = vld [vmem:[%s51] sm:$0xf]
    %v2433 = vld [vmem:[%s51 + $0x4] sm:$0xf]
    %v2434 = vld [vmem:[%s51 + $0x8] sm:$0xf]
    %v2435 = vld [vmem:[%s51 + $0xc] sm:$0xf]
    %v2436 = vpack.c.bf16 %v1757, %v1756
    %v2437 = vld [vmem:[%s53] sm:$0x1]
    %v2439 = vperm.slane %v2437, 0
    %v2445 = vunpack.c.l.b16 %v2432
    %v2446 = vunpack.c.l.b16 %v2433
    %v2447 = vunpack.c.l.b16 %v2434
    %v2448 = vunpack.c.l.b16 %v2435
    %v2449 = vpack.c.b16 %v2446, %v2445
    %v2450 = vpack.c.b16 %v2448, %v2447
    %v2454 = vsel %vm200, %v2436, 0
    %2456 = vmatpush.bf16.msra.mxu0 0
    %2457 = vmatpush.bf16.msra.mxu0 0
    %2458 = vmatpush.bf16.msra.mxu0 0
    %2459 = vmatpush.bf16.msra.mxu0 0
    %2460 = vmatpush.bf16.msra.mxu0 0
    %2461 = vmatpush.bf16.msra.mxu0 0
    %2462 = vmatpush.bf16.msra.mxu0 %v2450
    %2463 = vmatpush.bf16.msra.mxu0 %v2449
    %2464 = vmatmul.bf16.gmra.mxu0 %v2454
    %v2465 = vpop.f32.mrf.mxu0
    %v2466 = vadd.f32 %v2439, %v2465
    %v2467 = vpop.f32.mrf.mxu0
    %v2468 = vadd.f32 %v2439, %v2467
    %2469 = vdwg.mxu0
    %v2470 = vpack.c.bf16 %v2428, %v2428
    %v2471 = vpack.c.bf16 %v2430, %v2430
    %v2472 = vpack.c.bf16 %v2466, %v2466
    %v2473 = vpack.c.bf16 %v2468, %v2468
    %v2475 = vsel %vm225, %v2470, 0
    %v2478 = vsel %vm225, %v2472, 0
    %2480 = vmatpush.bf16.xpose.msra.mxu0 0
    %2481 = vmatpush.bf16.xpose.msra.mxu0 0
    %2482 = vmatpush.bf16.xpose.msra.mxu0 0
    %2483 = vmatpush.bf16.xpose.msra.mxu0 0
    %2484 = vmatpush.bf16.xpose.msra.mxu0 0
    %2485 = vmatpush.bf16.xpose.msra.mxu0 0
    %2486 = vmatpush.bf16.xpose.msra.mxu0 0
    %2487 = vmatpush.bf16.xpose.msra.mxu0 %v2478
    %2488 = vmatmul.bf16.gmra.mxu0 %v2475
    %v2489 = vpop.f32.mrf.mxu0
    %v2490 = vadd.f32 0.0, %v2489
    %v2491 = vpop.f32.mrf.mxu0
    %2492 = vdwg.mxu0
    %v2494 = vsel %vm225, %v2471, 0
    %v2497 = vsel %vm225, %v2473, 0
    %2499 = vmatpush.bf16.xpose.msra.mxu0 0
    %2500 = vmatpush.bf16.xpose.msra.mxu0 0
    %2501 = vmatpush.bf16.xpose.msra.mxu0 0
    %2502 = vmatpush.bf16.xpose.msra.mxu0 0
    %2503 = vmatpush.bf16.xpose.msra.mxu0 0
    %2504 = vmatpush.bf16.xpose.msra.mxu0 0
    %2505 = vmatpush.bf16.xpose.msra.mxu0 0
    %2506 = vmatpush.bf16.xpose.msra.mxu0 %v2497
    %2507 = vmatmul.bf16.gmra.mxu0 %v2494
    %v2508 = vpop.f32.mrf.mxu0
    %v2509 = vadd.f32 0.0, %v2508
    %v2510 = vpop.f32.mrf.mxu0
    %2511 = vdwg.mxu0
    %v2512 = vsel %vm269, -10000.0, %v2490
    %v2513 = vsel %vm270, -10000.0, %v2509
    %v2514 = vsel %vm225, %v2512, -inf
    %2515 = vmax.xlane.f32.xlu0 %v2514
    %v2516 = vpop.xlane.xlu0 %2515
    %v2517 = vsel %vm225, %v2513, -inf
    %2518 = vmax.xlane.f32.xlu0 %v2517
    %v2519 = vpop.xlane.xlu0 %2518
    %v2520 = vsub.f32 %v2512, %v2516
    %v2521 = vsub.f32 %v2513, %v2519
    %v2522 = vmul.f32 %v2520, 1.442695
    %v2523 = vpow.pop %v2522
    %v2524 = vmul.f32 %v2521, 1.442695
    %v2525 = vpow.pop %v2524
    %v2526 = vsel %vm225, %v2523, 0.0
    %2527 = vadd.xlane.f32.xlu0 %v2526
    %v2528 = vpop.xlane.xlu0 %2527
    %v2529 = vsel %vm225, %v2525, 0.0
    %2530 = vadd.xlane.f32.xlu0 %v2529
    %v2531 = vpop.xlane.xlu0 %2530
    %v2532 = vrcp.pop %v2528
    %v2533 = vrcp.pop %v2531
    %v2534 = vmul.f32 %v2523, %v2532
    %v2535 = vmul.f32 %v2525, %v2533
    %v2536 = vpack.c.bf16 %v2534, %v2534
    %v2537 = vpack.c.bf16 %v2535, %v2535
    %v2539 = vunpack.c.l.b16 %v2472
    %v2540 = vpack.c.b16 %v2539, %v2539
    %2541 = vrot.lane.b32.xlu0 %v2540, 96
    %v2542 = vpop.permute.xlu0 %2541
    %v2544 = vsel %vm225, %v2536, 0
    %v2547 = vsel %vm302, %v2542, 0
    %2549 = vmatpush.bf16.msra.mxu0 0
    %2550 = vmatpush.bf16.msra.mxu0 0
    %2551 = vmatpush.bf16.msra.mxu0 0
    %2552 = vmatpush.bf16.msra.mxu0 0
    %2553 = vmatpush.bf16.msra.mxu0 0
    %2554 = vmatpush.bf16.msra.mxu0 0
    %2555 = vmatpush.bf16.msra.mxu0 0
    %2556 = vmatpush.bf16.msra.mxu0 %v2547
    %2557 = vmatmul.bf16.gmra.mxu0 %v2544
    %v2558 = vpop.f32.mrf.mxu0
    %v2559 = vadd.f32 0.0, %v2558
    %v2560 = vpop.f32.mrf.mxu0
    %2561 = vdwg.mxu0
    %v2563 = vunpack.c.l.b16 %v2473
    %v2564 = vpack.c.b16 %v2563, %v2563
    %2565 = vrot.lane.b32.xlu0 %v2564, 96
    %v2566 = vpop.permute.xlu0 %2565
    %v2568 = vsel %vm225, %v2537, 0
    %v2571 = vsel %vm302, %v2566, 0
    %2573 = vmatpush.bf16.msra.mxu0 0
    %2574 = vmatpush.bf16.msra.mxu0 0
    %2575 = vmatpush.bf16.msra.mxu0 0
    %2576 = vmatpush.bf16.msra.mxu0 0
    %2577 = vmatpush.bf16.msra.mxu0 0
    %2578 = vmatpush.bf16.msra.mxu0 0
    %2579 = vmatpush.bf16.msra.mxu0 0
    %2580 = vmatpush.bf16.msra.mxu0 %v2571
    %2581 = vmatmul.bf16.gmra.mxu0 %v2568
    %v2582 = vpop.f32.mrf.mxu0
    %v2583 = vadd.f32 0.0, %v2582
    %v2584 = vpop.f32.mrf.mxu0
    %2585 = vdwg.mxu0
    %v2587 = vunpack.c.l.b16 %v2470
    %v2588 = vpack.c.b16 %v2587, %v2587
    %2589 = vrot.lane.b32.xlu0 %v2588, 120
    %v2590 = vpop.permute.xlu0 %2589
    %2591 = vrot.lane.b32.xlu0 %v2540, 120
    %v2592 = vpop.permute.xlu0 %2591
    %v2594 = vsel %vm225, %v2590, 0
    %v2597 = vsel %vm225, %v2592, 0
    %2599 = vmatpush.bf16.xpose.msra.mxu0 0
    %2600 = vmatpush.bf16.xpose.msra.mxu0 0
    %2601 = vmatpush.bf16.xpose.msra.mxu0 0
    %2602 = vmatpush.bf16.xpose.msra.mxu0 0
    %2603 = vmatpush.bf16.xpose.msra.mxu0 0
    %2604 = vmatpush.bf16.xpose.msra.mxu0 0
    %2605 = vmatpush.bf16.xpose.msra.mxu0 0
    %2606 = vmatpush.bf16.xpose.msra.mxu0 %v2597
    %2607 = vmatmul.bf16.gmra.mxu0 %v2594
    %v2608 = vpop.f32.mrf.mxu0
    %v2609 = vadd.f32 0.0, %v2608
    %v2610 = vpop.f32.mrf.mxu0
    %2611 = vdwg.mxu0
    %v2613 = vunpack.c.l.b16 %v2471
    %v2614 = vpack.c.b16 %v2613, %v2613
    %2615 = vrot.lane.b32.xlu0 %v2614, 120
    %v2616 = vpop.permute.xlu0 %2615
    %2617 = vrot.lane.b32.xlu0 %v2564, 120
    %v2618 = vpop.permute.xlu0 %2617
    %v2620 = vsel %vm225, %v2616, 0
    %v2623 = vsel %vm225, %v2618, 0
    %2625 = vmatpush.bf16.xpose.msra.mxu0 0
    %2626 = vmatpush.bf16.xpose.msra.mxu0 0
    %2627 = vmatpush.bf16.xpose.msra.mxu0 0
    %2628 = vmatpush.bf16.xpose.msra.mxu0 0
    %2629 = vmatpush.bf16.xpose.msra.mxu0 0
    %2630 = vmatpush.bf16.xpose.msra.mxu0 0
    %2631 = vmatpush.bf16.xpose.msra.mxu0 0
    %2632 = vmatpush.bf16.xpose.msra.mxu0 %v2623
    %2633 = vmatmul.bf16.gmra.mxu0 %v2620
    %v2634 = vpop.f32.mrf.mxu0
    %v2635 = vadd.f32 0.0, %v2634
    %v2636 = vpop.f32.mrf.mxu0
    %2637 = vdwg.mxu0
    %v2638 = vsel %vm269, -10000.0, %v2609
    %v2639 = vsel %vm270, -10000.0, %v2635
    %v2640 = vsel %vm225, %v2638, -inf
    %2641 = vmax.xlane.f32.xlu0 %v2640
    %v2642 = vpop.xlane.xlu0 %2641
    %v2643 = vsel %vm225, %v2639, -inf
    %2644 = vmax.xlane.f32.xlu0 %v2643
    %v2645 = vpop.xlane.xlu0 %2644
    %v2646 = vsub.f32 %v2638, %v2642
    %v2647 = vsub.f32 %v2639, %v2645
    %v2648 = vmul.f32 %v2646, 1.442695
    %v2649 = vpow.pop %v2648
    %v2650 = vmul.f32 %v2647, 1.442695
    %v2651 = vpow.pop %v2650
    %v2652 = vsel %vm225, %v2649, 0.0
    %2653 = vadd.xlane.f32.xlu0 %v2652
    %v2654 = vpop.xlane.xlu0 %2653
    %v2655 = vsel %vm225, %v2651, 0.0
    %2656 = vadd.xlane.f32.xlu0 %v2655
    %v2657 = vpop.xlane.xlu0 %2656
    %v2658 = vrcp.pop %v2654
    %v2659 = vrcp.pop %v2657
    %v2660 = vmul.f32 %v2649, %v2658
    %v2661 = vmul.f32 %v2651, %v2659
    %v2662 = vpack.c.bf16 %v2660, %v2660
    %v2663 = vpack.c.bf16 %v2661, %v2661
    %2664 = vrot.lane.b32.xlu0 %v2540, 88
    %v2665 = vpop.permute.xlu0 %2664
    %v2667 = vsel %vm225, %v2662, 0
    %v2670 = vsel %vm302, %v2665, 0
    %2672 = vmatpush.bf16.msra.mxu0 0
    %2673 = vmatpush.bf16.msra.mxu0 0
    %2674 = vmatpush.bf16.msra.mxu0 0
    %2675 = vmatpush.bf16.msra.mxu0 0
    %2676 = vmatpush.bf16.msra.mxu0 0
    %2677 = vmatpush.bf16.msra.mxu0 0
    %2678 = vmatpush.bf16.msra.mxu0 0
    %2679 = vmatpush.bf16.msra.mxu0 %v2670
    %2680 = vmatmul.bf16.gmra.mxu0 %v2667
    %v2681 = vpop.f32.mrf.mxu0
    %v2682 = vadd.f32 0.0, %v2681
    %v2683 = vpop.f32.mrf.mxu0
    %2684 = vdwg.mxu0
    %2685 = vrot.lane.b32.xlu0 %v2564, 88
    %v2686 = vpop.permute.xlu0 %2685
    %v2688 = vsel %vm225, %v2663, 0
    %v2691 = vsel %vm302, %v2686, 0
    %2693 = vmatpush.bf16.msra.mxu0 0
    %2694 = vmatpush.bf16.msra.mxu0 0
    %2695 = vmatpush.bf16.msra.mxu0 0
    %2696 = vmatpush.bf16.msra.mxu0 0
    %2697 = vmatpush.bf16.msra.mxu0 0
    %2698 = vmatpush.bf16.msra.mxu0 0
    %2699 = vmatpush.bf16.msra.mxu0 0
    %2700 = vmatpush.bf16.msra.mxu0 %v2691
    %2701 = vmatmul.bf16.gmra.mxu0 %v2688
    %v2702 = vpop.f32.mrf.mxu0
    %v2703 = vadd.f32 0.0, %v2702
    %v2704 = vpop.f32.mrf.mxu0
    %2705 = vdwg.mxu0
    %2706 = vrot.lane.b32.xlu0 %v2588, 112
    %v2707 = vpop.permute.xlu0 %2706
    %2708 = vrot.lane.b32.xlu0 %v2540, 112
    %v2709 = vpop.permute.xlu0 %2708
    %v2711 = vsel %vm225, %v2707, 0
    %v2714 = vsel %vm225, %v2709, 0
    %2716 = vmatpush.bf16.xpose.msra.mxu0 0
    %2717 = vmatpush.bf16.xpose.msra.mxu0 0
    %2718 = vmatpush.bf16.xpose.msra.mxu0 0
    %2719 = vmatpush.bf16.xpose.msra.mxu0 0
    %2720 = vmatpush.bf16.xpose.msra.mxu0 0
    %2721 = vmatpush.bf16.xpose.msra.mxu0 0
    %2722 = vmatpush.bf16.xpose.msra.mxu0 0
    %2723 = vmatpush.bf16.xpose.msra.mxu0 %v2714
    %2724 = vmatmul.bf16.gmra.mxu0 %v2711
    %v2725 = vpop.f32.mrf.mxu0
    %v2726 = vadd.f32 0.0, %v2725
    %v2727 = vpop.f32.mrf.mxu0
    %2728 = vdwg.mxu0
    %2729 = vrot.lane.b32.xlu0 %v2614, 112
    %v2730 = vpop.permute.xlu0 %2729
    %2731 = vrot.lane.b32.xlu0 %v2564, 112
    %v2732 = vpop.permute.xlu0 %2731
    %v2734 = vsel %vm225, %v2730, 0
    %v2737 = vsel %vm225, %v2732, 0
    %2739 = vmatpush.bf16.xpose.msra.mxu0 0
    %2740 = vmatpush.bf16.xpose.msra.mxu0 0
    %2741 = vmatpush.bf16.xpose.msra.mxu0 0
    %2742 = vmatpush.bf16.xpose.msra.mxu0 0
    %2743 = vmatpush.bf16.xpose.msra.mxu0 0
    %2744 = vmatpush.bf16.xpose.msra.mxu0 0
    %2745 = vmatpush.bf16.xpose.msra.mxu0 0
    %2746 = vmatpush.bf16.xpose.msra.mxu0 %v2737
    %2747 = vmatmul.bf16.gmra.mxu0 %v2734
    %v2748 = vpop.f32.mrf.mxu0
    %v2749 = vadd.f32 0.0, %v2748
    %v2750 = vpop.f32.mrf.mxu0
    %2751 = vdwg.mxu0
    %v2752 = vsel %vm269, -10000.0, %v2726
    %v2753 = vsel %vm270, -10000.0, %v2749
    %v2754 = vsel %vm225, %v2752, -inf
    %2755 = vmax.xlane.f32.xlu0 %v2754
    %v2756 = vpop.xlane.xlu0 %2755
    %v2757 = vsel %vm225, %v2753, -inf
    %2758 = vmax.xlane.f32.xlu0 %v2757
    %v2759 = vpop.xlane.xlu0 %2758
    %v2760 = vsub.f32 %v2752, %v2756
    %v2761 = vsub.f32 %v2753, %v2759
    %v2762 = vmul.f32 %v2760, 1.442695
    %v2763 = vpow.pop %v2762
    %v2764 = vmul.f32 %v2761, 1.442695
    %v2765 = vpow.pop %v2764
    %v2766 = vsel %vm225, %v2763, 0.0
    %2767 = vadd.xlane.f32.xlu0 %v2766
    %v2768 = vpop.xlane.xlu0 %2767
    %v2769 = vsel %vm225, %v2765, 0.0
    %2770 = vadd.xlane.f32.xlu0 %v2769
    %v2771 = vpop.xlane.xlu0 %2770
    %v2772 = vrcp.pop %v2768
    %v2773 = vrcp.pop %v2771
    %v2774 = vmul.f32 %v2763, %v2772
    %v2775 = vmul.f32 %v2765, %v2773
    %v2776 = vpack.c.bf16 %v2774, %v2774
    %v2777 = vpack.c.bf16 %v2775, %v2775
    %2778 = vrot.lane.b32.xlu0 %v2540, 80
    %v2779 = vpop.permute.xlu0 %2778
    %v2781 = vsel %vm225, %v2776, 0
    %v2784 = vsel %vm302, %v2779, 0
    %2786 = vmatpush.bf16.msra.mxu0 0
    %2787 = vmatpush.bf16.msra.mxu0 0
    %2788 = vmatpush.bf16.msra.mxu0 0
    %2789 = vmatpush.bf16.msra.mxu0 0
    %2790 = vmatpush.bf16.msra.mxu0 0
    %2791 = vmatpush.bf16.msra.mxu0 0
    %2792 = vmatpush.bf16.msra.mxu0 0
    %2793 = vmatpush.bf16.msra.mxu0 %v2784
    %2794 = vmatmul.bf16.gmra.mxu0 %v2781
    %v2795 = vpop.f32.mrf.mxu0
    %v2796 = vadd.f32 0.0, %v2795
    %v2797 = vpop.f32.mrf.mxu0
    %2798 = vdwg.mxu0
    %2799 = vrot.lane.b32.xlu0 %v2564, 80
    %v2800 = vpop.permute.xlu0 %2799
    %v2802 = vsel %vm225, %v2777, 0
    %v2805 = vsel %vm302, %v2800, 0
    %2807 = vmatpush.bf16.msra.mxu0 0
    %2808 = vmatpush.bf16.msra.mxu0 0
    %2809 = vmatpush.bf16.msra.mxu0 0
    %2810 = vmatpush.bf16.msra.mxu0 0
    %2811 = vmatpush.bf16.msra.mxu0 0
    %2812 = vmatpush.bf16.msra.mxu0 0
    %2813 = vmatpush.bf16.msra.mxu0 0
    %2814 = vmatpush.bf16.msra.mxu0 %v2805
    %2815 = vmatmul.bf16.gmra.mxu0 %v2802
    %v2816 = vpop.f32.mrf.mxu0
    %v2817 = vadd.f32 0.0, %v2816
    %v2818 = vpop.f32.mrf.mxu0
    %2819 = vdwg.mxu0
    %2820 = vrot.lane.b32.xlu0 %v2588, 104
    %v2821 = vpop.permute.xlu0 %2820
    %2822 = vrot.lane.b32.xlu0 %v2540, 104
    %v2823 = vpop.permute.xlu0 %2822
    %v2825 = vsel %vm225, %v2821, 0
    %v2828 = vsel %vm225, %v2823, 0
    %2830 = vmatpush.bf16.xpose.msra.mxu0 0
    %2831 = vmatpush.bf16.xpose.msra.mxu0 0
    %2832 = vmatpush.bf16.xpose.msra.mxu0 0
    %2833 = vmatpush.bf16.xpose.msra.mxu0 0
    %2834 = vmatpush.bf16.xpose.msra.mxu0 0
    %2835 = vmatpush.bf16.xpose.msra.mxu0 0
    %2836 = vmatpush.bf16.xpose.msra.mxu0 0
    %2837 = vmatpush.bf16.xpose.msra.mxu0 %v2828
    %2838 = vmatmul.bf16.gmra.mxu0 %v2825
    %v2839 = vpop.f32.mrf.mxu0
    %v2840 = vadd.f32 0.0, %v2839
    %v2841 = vpop.f32.mrf.mxu0
    %2842 = vdwg.mxu0
    %2843 = vrot.lane.b32.xlu0 %v2614, 104
    %v2844 = vpop.permute.xlu0 %2843
    %2845 = vrot.lane.b32.xlu0 %v2564, 104
    %v2846 = vpop.permute.xlu0 %2845
    %v2848 = vsel %vm225, %v2844, 0
    %v2851 = vsel %vm225, %v2846, 0
    %2853 = vmatpush.bf16.xpose.msra.mxu0 0
    %2854 = vmatpush.bf16.xpose.msra.mxu0 0
    %2855 = vmatpush.bf16.xpose.msra.mxu0 0
    %2856 = vmatpush.bf16.xpose.msra.mxu0 0
    %2857 = vmatpush.bf16.xpose.msra.mxu0 0
    %2858 = vmatpush.bf16.xpose.msra.mxu0 0
    %2859 = vmatpush.bf16.xpose.msra.mxu0 0
    %2860 = vmatpush.bf16.xpose.msra.mxu0 %v2851
    %2861 = vmatmul.bf16.gmra.mxu0 %v2848
    %v2862 = vpop.f32.mrf.mxu0
    %v2863 = vadd.f32 0.0, %v2862
    %v2864 = vpop.f32.mrf.mxu0
    %2865 = vdwg.mxu0
    %v2866 = vsel %vm269, -10000.0, %v2840
    %v2867 = vsel %vm270, -10000.0, %v2863
    %v2868 = vsel %vm225, %v2866, -inf
    %2869 = vmax.xlane.f32.xlu0 %v2868
    %v2870 = vpop.xlane.xlu0 %2869
    %v2871 = vsel %vm225, %v2867, -inf
    %2872 = vmax.xlane.f32.xlu0 %v2871
    %v2873 = vpop.xlane.xlu0 %2872
    %v2874 = vsub.f32 %v2866, %v2870
    %v2875 = vsub.f32 %v2867, %v2873
    %v2876 = vmul.f32 %v2874, 1.442695
    %v2877 = vpow.pop %v2876
    %v2878 = vmul.f32 %v2875, 1.442695
    %v2879 = vpow.pop %v2878
    %v2880 = vsel %vm225, %v2877, 0.0
    %2881 = vadd.xlane.f32.xlu0 %v2880
    %v2882 = vpop.xlane.xlu0 %2881
    %v2883 = vsel %vm225, %v2879, 0.0
    %2884 = vadd.xlane.f32.xlu0 %v2883
    %v2885 = vpop.xlane.xlu0 %2884
    %v2886 = vrcp.pop %v2882
    %v2887 = vrcp.pop %v2885
    %v2888 = vmul.f32 %v2877, %v2886
    %v2889 = vmul.f32 %v2879, %v2887
    %v2890 = vpack.c.bf16 %v2888, %v2888
    %v2891 = vpack.c.bf16 %v2889, %v2889
    %2892 = vrot.lane.b32.xlu0 %v2540, 72
    %v2893 = vpop.permute.xlu0 %2892
    %v2895 = vsel %vm225, %v2890, 0
    %v2898 = vsel %vm302, %v2893, 0
    %2900 = vmatpush.bf16.msra.mxu0 0
    %2901 = vmatpush.bf16.msra.mxu0 0
    %2902 = vmatpush.bf16.msra.mxu0 0
    %2903 = vmatpush.bf16.msra.mxu0 0
    %2904 = vmatpush.bf16.msra.mxu0 0
    %2905 = vmatpush.bf16.msra.mxu0 0
    %2906 = vmatpush.bf16.msra.mxu0 0
    %2907 = vmatpush.bf16.msra.mxu0 %v2898
    %2908 = vmatmul.bf16.gmra.mxu0 %v2895
    %v2909 = vpop.f32.mrf.mxu0
    %v2910 = vadd.f32 0.0, %v2909
    %v2911 = vpop.f32.mrf.mxu0
    %2912 = vdwg.mxu0
    %2913 = vrot.lane.b32.xlu0 %v2564, 72
    %v2914 = vpop.permute.xlu0 %2913
    %v2916 = vsel %vm225, %v2891, 0
    %v2919 = vsel %vm302, %v2914, 0
    %2921 = vmatpush.bf16.msra.mxu0 0
    %2922 = vmatpush.bf16.msra.mxu0 0
    %2923 = vmatpush.bf16.msra.mxu0 0
    %2924 = vmatpush.bf16.msra.mxu0 0
    %2925 = vmatpush.bf16.msra.mxu0 0
    %2926 = vmatpush.bf16.msra.mxu0 0
    %2927 = vmatpush.bf16.msra.mxu0 0
    %2928 = vmatpush.bf16.msra.mxu0 %v2919
    %2929 = vmatmul.bf16.gmra.mxu0 %v2916
    %v2930 = vpop.f32.mrf.mxu0
    %v2931 = vadd.f32 0.0, %v2930
    %v2932 = vpop.f32.mrf.mxu0
    %2933 = vdwg.mxu0
    %2936 = vrot.lane.b32.xlu0 %v2682, 8
    %v2937 = vpop.permute.xlu0 %2936
    %2938 = vrot.lane.b32.xlu0 %v2703, 8
    %v2939 = vpop.permute.xlu0 %2938
    %2944 = vrot.lane.b32.xlu0 %v2796, 16
    %v2945 = vpop.permute.xlu0 %2944
    %2946 = vrot.lane.b32.xlu0 %v2817, 16
    %v2947 = vpop.permute.xlu0 %2946
    %2952 = vrot.lane.b32.xlu0 %v2910, 24
    %v2953 = vpop.permute.xlu0 %2952
    %2954 = vrot.lane.b32.xlu0 %v2931, 24
    %v2955 = vpop.permute.xlu0 %2954
    %v2958 = vsel %vm225, %v2559, %v2937
    %v2959 = vsel %vm225, %v2583, %v2939
    %v2960 = vsel %vm708, %v2958, %v2945
    %v2961 = vsel %vm708, %v2959, %v2947
    %v2962 = vsel %vm711, %v2960, %v2953
    %v2963 = vsel %vm711, %v2961, %v2955
    %v2964 = vld [vmem:[%s55] sm:$0xf]
    %v2965 = vld [vmem:[%s55 + $0x4] sm:$0xf]
    %v2966 = vld [vmem:[%s55 + $0x8] sm:$0xf]
    %v2967 = vld [vmem:[%s55 + $0xc] sm:$0xf]
    %v2968 = vpack.c.bf16 %v2963, %v2962
    %v2969 = vld [vmem:[%s57] sm:$0x1]
    %v2971 = vperm.slane %v2969, 0
    %v2977 = vunpack.c.l.b16 %v2964
    %v2978 = vunpack.c.l.b16 %v2965
    %v2979 = vunpack.c.l.b16 %v2966
    %v2980 = vunpack.c.l.b16 %v2967
    %v2981 = vpack.c.b16 %v2978, %v2977
    %v2982 = vpack.c.b16 %v2980, %v2979
    %v2986 = vsel %vm200, %v2968, 0
    %2988 = vmatpush.bf16.msra.mxu0 0
    %2989 = vmatpush.bf16.msra.mxu0 0
    %2990 = vmatpush.bf16.msra.mxu0 0
    %2991 = vmatpush.bf16.msra.mxu0 0
    %2992 = vmatpush.bf16.msra.mxu0 0
    %2993 = vmatpush.bf16.msra.mxu0 0
    %2994 = vmatpush.bf16.msra.mxu0 %v2982
    %2995 = vmatpush.bf16.msra.mxu0 %v2981
    %2996 = vmatmul.bf16.gmra.mxu0 %v2986
    %v2997 = vpop.f32.mrf.mxu0
    %v2998 = vadd.f32 %v2971, %v2997
    %v2999 = vpop.f32.mrf.mxu0
    %v3000 = vadd.f32 %v2971, %v2999
    %3001 = vdwg.mxu0
    %v3002 = vadd.f32 %v2998, %v2392
    %v3003 = vadd.f32 %v3000, %v2393
    %v3004 = vld [vmem:[%s59] sm:$0x1]
    %v3005 = vld [vmem:[%s61] sm:$0x1]
    %v3006 = vsel %vm200, %v3002, 0.0
    %3007 = vadd.xlane.f32.xlu0 %v3006
    %v3008 = vpop.xlane.xlu0 %3007
    %v3009 = vsel %vm200, %v3003, 0.0
    %3010 = vadd.xlane.f32.xlu0 %v3009
    %v3011 = vpop.xlane.xlu0 %3010
    %v3012 = vmul.f32 %v3008, %v768
    %v3013 = vmul.f32 %v3011, %v768
    %v3014 = vsub.f32 %v3002, %v3012
    %v3015 = vsub.f32 %v3003, %v3013
    %v3016 = vmul.f32 %v3014, %v3014
    %v3017 = vmul.f32 %v3015, %v3015
    %v3018 = vsel %vm200, %v3016, 0.0
    %3019 = vadd.xlane.f32.xlu0 %v3018
    %v3020 = vpop.xlane.xlu0 %3019
    %v3021 = vsel %vm200, %v3017, 0.0
    %3022 = vadd.xlane.f32.xlu0 %v3021
    %v3023 = vpop.xlane.xlu0 %3022
    %v3024 = vmul.f32 %v3020, %v768
    %v3025 = vmul.f32 %v3023, %v768
    %v3026 = vadd.f32 %v3024, 1e-05
    %v3027 = vadd.f32 %v3025, 1e-05
    %v3028 = vrsqrt.pop %v3026
    %v3029 = vmul.f32 %v3028, %v3026
    %v3030 = vmul.f32 %v3029, %v3028
    %v3031 = vmul.f32 0.5, %v3030
    %v3032 = vsub.f32 1.5, %v3031
    %v3033 = vmul.f32 %v3028, %v3032
    %vm3034 = vweird.f32 %v3026
    %vm3035 = vweird.f32 %v3028
    %vm3036 = vmor %vm3034, %vm3035
    %v3037 = vsel %vm3036, %v3028, %v3033
    %v3038 = vrsqrt.pop %v3027
    %v3039 = vmul.f32 %v3038, %v3027
    %v3040 = vmul.f32 %v3039, %v3038
    %v3041 = vmul.f32 0.5, %v3040
    %v3042 = vsub.f32 1.5, %v3041
    %v3043 = vmul.f32 %v3038, %v3042
    %vm3044 = vweird.f32 %v3027
    %vm3045 = vweird.f32 %v3038
    %vm3046 = vmor %vm3044, %vm3045
    %v3047 = vsel %vm3046, %v3038, %v3043
    %v3048 = vmul.f32 %v3014, %v3037
    %v3049 = vmul.f32 %v3015, %v3047
    %v3051 = vperm.slane %v3004, 0
    %v3053 = vmul.f32 %v3048, %v3051
    %v3054 = vmul.f32 %v3049, %v3051
    %v3056 = vperm.slane %v3005, 0
    %v3058 = vadd.f32 %v3053, %v3056
    %v3059 = vadd.f32 %v3054, %v3056
    %v3060 = vld [vmem:[%s63] sm:$0xf]
    %v3061 = vld [vmem:[%s63 + $0x4] sm:$0xf]
    %v3062 = vld [vmem:[%s63 + $0x8] sm:$0xf]
    %v3063 = vld [vmem:[%s63 + $0xc] sm:$0xf]
    %v3064 = vpack.c.bf16 %v3059, %v3058
    %v3065 = vld [vmem:[%s65] sm:$0x1]
    %v3067 = vperm.slane %v3065, 0
    %v3073 = vunpack.c.l.b16 %v3060
    %v3074 = vunpack.c.l.b16 %v3061
    %v3075 = vunpack.c.l.b16 %v3062
    %v3076 = vunpack.c.l.b16 %v3063
    %v3077 = vpack.c.b16 %v3074, %v3073
    %v3078 = vpack.c.b16 %v3076, %v3075
    %v3082 = vsel %vm200, %v3064, 0
    %3084 = vmatpush.bf16.msra.mxu0 0
    %3085 = vmatpush.bf16.msra.mxu0 0
    %3086 = vmatpush.bf16.msra.mxu0 0
    %3087 = vmatpush.bf16.msra.mxu0 0
    %3088 = vmatpush.bf16.msra.mxu0 0
    %3089 = vmatpush.bf16.msra.mxu0 0
    %3090 = vmatpush.bf16.msra.mxu0 %v3078
    %3091 = vmatpush.bf16.msra.mxu0 %v3077
    %3092 = vmatmul.bf16.gmra.mxu0 %v3082
    %v3093 = vpop.f32.mrf.mxu0
    %v3094 = vadd.f32 %v3067, %v3093
    %v3095 = vpop.f32.mrf.mxu0
    %v3096 = vadd.f32 %v3067, %v3095
    %3097 = vdwg.mxu0
    %v3098 = vmax.f32 %v3094, 0.0
    %v3099 = vmax.f32 %v3096, 0.0
    %v3100 = vld [vmem:[%s67] sm:$0xf]
    %v3101 = vld [vmem:[%s67 + $0x4] sm:$0xf]
    %v3102 = vld [vmem:[%s67 + $0x8] sm:$0xf]
    %v3103 = vld [vmem:[%s67 + $0xc] sm:$0xf]
    %v3104 = vld [vmem:[%s67 + $0x10] sm:$0xf]
    %v3105 = vld [vmem:[%s67 + $0x14] sm:$0xf]
    %v3106 = vld [vmem:[%s67 + $0x18] sm:$0xf]
    %v3107 = vld [vmem:[%s67 + $0x1c] sm:$0xf]
    %v3108 = vpack.c.bf16 %v3099, %v3098
    %v3109 = vld [vmem:[%s69] sm:$0x1]
    %v3111 = vperm.slane %v3109, 0
    %v3121 = vunpack.c.l.b16 %v3100
    %v3122 = vunpack.c.l.b16 %v3101
    %v3123 = vunpack.c.l.b16 %v3102
    %v3124 = vunpack.c.l.b16 %v3103
    %v3125 = vunpack.c.l.b16 %v3104
    %v3126 = vunpack.c.l.b16 %v3105
    %v3127 = vunpack.c.l.b16 %v3106
    %v3128 = vunpack.c.l.b16 %v3107
    %v3129 = vpack.c.b16 %v3122, %v3121
    %v3130 = vpack.c.b16 %v3124, %v3123
    %v3131 = vpack.c.b16 %v3126, %v3125
    %v3132 = vpack.c.b16 %v3128, %v3127
    %v3138 = vsel %vm894, %v3108, 0
    %3140 = vmatpush.bf16.msra.mxu0 0
    %3141 = vmatpush.bf16.msra.mxu0 0
    %3142 = vmatpush.bf16.msra.mxu0 0
    %3143 = vmatpush.bf16.msra.mxu0 0
    %3144 = vmatpush.bf16.msra.mxu0 %v3132
    %3145 = vmatpush.bf16.msra.mxu0 %v3131
    %3146 = vmatpush.bf16.msra.mxu0 %v3130
    %3147 = vmatpush.bf16.msra.mxu0 %v3129
    %3148 = vmatmul.bf16.gmra.mxu0 %v3138
    %v3149 = vpop.f32.mrf.mxu0
    %v3150 = vadd.f32 %v3111, %v3149
    %v3151 = vpop.f32.mrf.mxu0
    %v3152 = vadd.f32 %v3111, %v3151
    %3153 = vdwg.mxu0
    %v3154 = vadd.f32 %v3058, %v3150
    %v3155 = vadd.f32 %v3059, %v3152
    %v3156 = vld [vmem:[%s71] sm:$0x1]
    %v3157 = vld [vmem:[%s73] sm:$0x1]
    %v3158 = vsel %vm200, %v3154, 0.0
    %3159 = vadd.xlane.f32.xlu0 %v3158
    %v3160 = vpop.xlane.xlu0 %3159
    %v3161 = vsel %vm200, %v3155, 0.0
    %3162 = vadd.xlane.f32.xlu0 %v3161
    %v3163 = vpop.xlane.xlu0 %3162
    %v3164 = vmul.f32 %v3160, %v768
    %v3165 = vmul.f32 %v3163, %v768
    %v3166 = vsub.f32 %v3154, %v3164
    %v3167 = vsub.f32 %v3155, %v3165
    %v3168 = vmul.f32 %v3166, %v3166
    %v3169 = vmul.f32 %v3167, %v3167
    %v3170 = vsel %vm200, %v3168, 0.0
    %3171 = vadd.xlane.f32.xlu0 %v3170
    %v3172 = vpop.xlane.xlu0 %3171
    %v3173 = vsel %vm200, %v3169, 0.0
    %3174 = vadd.xlane.f32.xlu0 %v3173
    %v3175 = vpop.xlane.xlu0 %3174
    %v3176 = vmul.f32 %v3172, %v768
    %v3177 = vmul.f32 %v3175, %v768
    %v3178 = vadd.f32 %v3176, 1e-05
    %v3179 = vadd.f32 %v3177, 1e-05
    %v3180 = vrsqrt.pop %v3178
    %v3181 = vmul.f32 %v3180, %v3178
    %v3182 = vmul.f32 %v3181, %v3180
    %v3183 = vmul.f32 0.5, %v3182
    %v3184 = vsub.f32 1.5, %v3183
    %v3185 = vmul.f32 %v3180, %v3184
    %vm3186 = vweird.f32 %v3178
    %vm3187 = vweird.f32 %v3180
    %vm3188 = vmor %vm3186, %vm3187
    %v3189 = vsel %vm3188, %v3180, %v3185
    %v3190 = vrsqrt.pop %v3179
    %v3191 = vmul.f32 %v3190, %v3179
    %v3192 = vmul.f32 %v3191, %v3190
    %v3193 = vmul.f32 0.5, %v3192
    %v3194 = vsub.f32 1.5, %v3193
    %v3195 = vmul.f32 %v3190, %v3194
    %vm3196 = vweird.f32 %v3179
    %vm3197 = vweird.f32 %v3190
    %vm3198 = vmor %vm3196, %vm3197
    %v3199 = vsel %vm3198, %v3190, %v3195
    %v3200 = vmul.f32 %v3166, %v3189
    %v3201 = vmul.f32 %v3167, %v3199
    %v3203 = vperm.slane %v3156, 0
    %v3205 = vmul.f32 %v3200, %v3203
    %v3206 = vmul.f32 %v3201, %v3203
    %v3208 = vperm.slane %v3157, 0
    %v3210 = vadd.f32 %v3205, %v3208
    %v3211 = vadd.f32 %v3206, %v3208
    %v3212 = vld [vmem:[%s75] sm:$0xff]
    %v3213 = vld [vmem:[%s75 + $0x8] sm:$0xff]
    %v3214 = vld [vmem:[%s75 + $0x10] sm:$0xff]
    %v3215 = vld [vmem:[%s75 + $0x18] sm:$0xff]
    %v3216 = vpack.c.bf16 %v3211, %v3210
    %v3217 = vld [vmem:[%s77] sm:$0x3]
    %v3219 = vperm.slane %v3217, 0
    %v3220 = vperm.slane %v3217, 1
    %v3227 = vunpack.c.l.b16 %v3212
    %v3228 = vunpack.c.h.b16 %v3212
    %v3229 = vunpack.c.l.b16 %v3213
    %v3230 = vunpack.c.h.b16 %v3213
    %v3231 = vunpack.c.l.b16 %v3214
    %v3232 = vunpack.c.h.b16 %v3214
    %v3233 = vunpack.c.l.b16 %v3215
    %v3234 = vunpack.c.h.b16 %v3215
    %v3235 = vpack.c.b16 %v3229, %v3227
    %v3236 = vpack.c.b16 %v3230, %v3228
    %v3237 = vpack.c.b16 %v3233, %v3231
    %v3238 = vpack.c.b16 %v3234, %v3232
    %v3244 = vsel %vm200, %v3216, 0
    %3246 = vmatpush.bf16.msra.mxu0 0
    %3247 = vmatpush.bf16.msra.mxu0 0
    %3248 = vmatpush.bf16.msra.mxu0 0
    %3249 = vmatpush.bf16.msra.mxu0 0
    %3250 = vmatpush.bf16.msra.mxu0 0
    %3251 = vmatpush.bf16.msra.mxu0 0
    %3252 = vmatpush.bf16.msra.mxu0 %v3237
    %3253 = vmatpush.bf16.msra.mxu0 %v3235
    %3254 = vmatmul.bf16.gmra.mxu0 %v3244
    %v3255 = vpop.f32.mrf.mxu0
    %v3256 = vadd.f32 %v3219, %v3255
    %v3257 = vpop.f32.mrf.mxu0
    %v3258 = vadd.f32 %v3219, %v3257
    %3259 = vdwg.mxu0
    %3260 = vmatpush.bf16.msra.mxu0 0
    %3261 = vmatpush.bf16.msra.mxu0 0
    %3262 = vmatpush.bf16.msra.mxu0 0
    %3263 = vmatpush.bf16.msra.mxu0 0
    %3264 = vmatpush.bf16.msra.mxu0 0
    %3265 = vmatpush.bf16.msra.mxu0 0
    %3266 = vmatpush.bf16.msra.mxu0 %v3238
    %3267 = vmatpush.bf16.msra.mxu0 %v3236
    %3268 = vmatmul.bf16.gmra.mxu0 %v3244
    %v3269 = vpop.f32.mrf.mxu0
    %v3270 = vadd.f32 %v3220, %v3269
    %v3271 = vpop.f32.mrf.mxu0
    %v3272 = vadd.f32 %v3220, %v3271
    %3273 = vdwg.mxu0
    %3274 = vst [vmem:[#allocation2] sm:$0xff] %v3256
    %3275 = vst [vmem:[#allocation2 + $0x8] sm:$0xff] %v3270
    %3276 = vst [vmem:[#allocation2 + $0x10] sm:$0xff] %v3258
    %3277 = vst [vmem:[#allocation2 + $0x18] sm:$0xff] %v3272
    %v3278 = vlaneseq
    %v3279 = vand.u32 %v3278, 127
    %v3280 = vadd.s32 %v3279, 128
    %v3281 = vmax.f32 %v3256, %v3270
    %3282 = vmax.xlane.f32.xlu0 %v3281
    %v3283 = vpop.xlane.xlu0 %3282
    %v3284 = vmax.f32 %v3258, %v3272
    %3285 = vmax.xlane.f32.xlu0 %v3284
    %v3286 = vpop.xlane.xlu0 %3285
    %vm3287 = vcmp.eq.f32.partialorder %v3256, %v3283
    %vm3288 = vcmp.eq.f32.partialorder %v3270, %v3283
    %vm3289 = vcmp.eq.f32.partialorder %v3258, %v3286
    %vm3290 = vcmp.eq.f32.partialorder %v3272, %v3286
    %v3291 = vsel %vm3287, %v3279, 256
    %v3292 = vsel %vm3288, %v3280, 256
    %v3293 = vsel %vm3289, %v3279, 256
    %v3294 = vsel %vm3290, %v3280, 256
    %vm3295 = vcmp.lt.s32.totalorder %v3291, %v3292
    %v3296 = vsel %vm3295, %v3291, %v3292
    %v3297 = vand.u32 %v3296, 65535
    %v3298 = vshra.s32 %v3296, 16
    %v3299 = vcvt.s32.f32 %v3297
    %v3300 = vcvt.s32.f32 %v3298
    %3301 = vmin.xlane.f32.xlu0 %v3300
    %v3302 = vpop.xlane.xlu0 %3301
    %vm3303 = vcmp.eq.f32.partialorder %v3300, %v3302
    %v3304 = vsel %vm3303, %v3299, inf
    %3305 = vmin.xlane.f32.xlu0 %v3304
    %v3306 = vpop.xlane.xlu0 %3305
    %v3307 = vcvt.f32.s32 %v3306
    %v3308 = vcvt.f32.s32 %v3302
    %v3309 = vshll.u32 %v3308, 16
    %v3310 = vadd.s32 %v3309, %v3307
    %vm3311 = vcmp.lt.s32.totalorder %v3293, %v3294
    %v3312 = vsel %vm3311, %v3293, %v3294
    %v3313 = vand.u32 %v3312, 65535
    %v3314 = vshra.s32 %v3312, 16
    %v3315 = vcvt.s32.f32 %v3313
    %v3316 = vcvt.s32.f32 %v3314
    %3317 = vmin.xlane.f32.xlu0 %v3316
    %v3318 = vpop.xlane.xlu0 %3317
    %vm3319 = vcmp.eq.f32.partialorder %v3316, %v3318
    %v3320 = vsel %vm3319, %v3315, inf
    %3321 = vmin.xlane.f32.xlu0 %v3320
    %v3322 = vpop.xlane.xlu0 %3321
    %v3323 = vcvt.f32.s32 %v3322
    %v3324 = vcvt.f32.s32 %v3318
    %v3325 = vshll.u32 %v3324, 16
    %v3326 = vadd.s32 %v3325, %v3323
    %v3327 = vperm.slane %v3310, %v3279
    %v3328 = vperm.slane %v3326, %v3279
    %vm3329 = vcmask 1041409
    %v3330 = vsel %vm3329, %v3328, %v3327
    %vm3331 = vcmask 58368
    %3332 = vst.msk [vmem:[#allocation4] sm:$0x3] %vm3331, %v3330
    // Predicated region
    $region158: #{transformer_forward.1} parent=1 // pred_check
      _
    $region159: #{transformer_forward.1} parent=1 // pred_check_branch
      %3334 = sbr.rel (0) target = $region161
    $region160: #{transformer_forward.1} parent=1 // pred_region
      %3336 = vsyncadd [#allocation3], 0
      %s3337 = sshll.u32 [#allocation2], 4
      %s3338 = int_to_ptr.vmem [resolvable:$true] %s3337
      %s3339 = sshll.u32 %s79, 4
      %s3340 = int_to_ptr.hbm [resolvable:$true] %s3339
      %3345 = dma.vmem_to_hbm [thread:$0]  %s3338, 512, %s3340, [#allocation3], 256, 256, 16
    $region161: #{transformer_forward.1} parent=1 // pred_fallthru
      _
    // Predicated region
    $region162: #{transformer_forward.1} parent=1 // pred_check
      _
    $region163: #{transformer_forward.1} parent=1 // pred_check_branch
      %3347 = sbr.rel (0) target = $region165
    $region164: #{transformer_forward.1} parent=1 // pred_region
      %3349 = vsyncadd [#allocation5], 0
      %s3351 = sshll.u32 [#allocation4], 4
      %s3352 = int_to_ptr.vmem [resolvable:$true] %s3351
      %s3353 = sshll.u32 %s81, 4
      %s3354 = int_to_ptr.hbm [resolvable:$true] %s3353
      %3356 = dma.vmem_to_hbm [thread:$0]  %s3352, 32, %s3354, [#allocation5]
    $region165: #{transformer_forward.1} parent=1 // pred_fallthru
      _
    // Predicated region
    $region166: #{transformer_forward.1} parent=1 // pred_check
      _
    $region167: #{transformer_forward.1} parent=1 // pred_check_branch
      %3358 = sbr.rel (0) target = $region169
    $region168: #{transformer_forward.1} parent=1 // pred_region
      %3360 = dma.done [#allocation3], 512
    $region169: #{transformer_forward.1} parent=1 // pred_fallthru
      _
    // Predicated region
    $region170: #{transformer_forward.1} parent=1 // pred_check
      _
    $region171: #{transformer_forward.1} parent=1 // pred_check_branch
      %3362 = sbr.rel (0) target = $region173
    $region172: #{transformer_forward.1} parent=1 // pred_region
      %3364 = dma.done [#allocation5], 32
    $region173: #{transformer_forward.1} parent=1 // pred_fallthru
      _
    %3365 = vsyncpa [#allocation3], 1
    %3366 = vsyncpa [#allocation5], 1

</llo_original>
